<compile_context>
chip_gen: v6e
topology: v6e:2x2x1
jax: 0.10.0
libtpu: 0.0.40
codegen_flags: <defaults>
</compile_context>

<pallas_src>
import jax
import jax.numpy as jnp
from jax.experimental import pallas as pl
from jax.experimental.pallas import tpu as pltpu

MAX_LENGTH = 10
_NEG = -1e30  # softmax / log-softmax mask value for padded lanes


def _round_up(x, m):
    return ((x + m - 1) // m) * m


def _attn_decoder_kernel(
    gix_ref,        # (T, 3HP)  hoisted input-side GRU pre-activations (incl. b_ih)
    enc_ref,        # (SP, HP)  encoder outputs, zero padded
    projT_ref,      # (HP, SP)  hoisted attention key projection, pre-transposed
    attn_bias_ref,  # (1, SP)   0 for valid encoder positions, -1e30 for padding
    w_ih_c_ref,     # (HP, 3HP) GRU input weights, context half (gate-aligned)
    w_hh_ref,       # (HP, 3HP) GRU hidden weights (gate-aligned)
    b_hh_ref,       # (1, 3HP)
    w_out_ref,      # (2HP, VP) fused output Linear: rows [0,HP) rnn half, [HP,2HP) ctx half
    b_out_ref,      # (1, VP)   output bias; padded vocab lanes hold -1e30
    ctx0_ref,       # (1, HP)   initial context
    h0_ref,         # (1, HP)   initial hidden
    # outputs (full (T, .) blocks, written once per step, DMA'd back once)
    logp_ref,       # (T, VP)
    ctx_out_ref,    # (T, HP)
    hid_out_ref,    # (T, HP)
    attnw_ref,      # (T, SP)
    # scratch
    hc_scr,         # (1, 2HP)  staging buffer for the fused output-projection LHS
):
    HP = h0_ref.shape[1]
    T = gix_ref.shape[0]

    h = h0_ref[...]
    ctx = ctx0_ref[...]

    # Statically unrolled decode loop (T is a trace-time constant); h/ctx stay in vregs.
    for t in range(T):
        # ---- GRU cell; input-side gates (emb half + b_ih) already hoisted ----
        gi = (gix_ref[pl.ds(t, 1), :]
              + jnp.dot(ctx, w_ih_c_ref[...], preferred_element_type=jnp.float32))
        gh = (jnp.dot(h, w_hh_ref[...], preferred_element_type=jnp.float32)
              + b_hh_ref[...])

        # gate blocks are 128-lane aligned (no cross-lane shuffles)
        r = jax.nn.sigmoid(gi[:, 0:HP] + gh[:, 0:HP])
        z = jax.nn.sigmoid(gi[:, HP:2 * HP] + gh[:, HP:2 * HP])
        n = jnp.tanh(gi[:, 2 * HP:3 * HP] + r * gh[:, 2 * HP:3 * HP])
        h_new = (1.0 - z) * n + z * h

        # ---- attention ('general' score); key projection hoisted per sequence ----
        energies = (jnp.dot(h_new, projT_ref[...], preferred_element_type=jnp.float32)
                    + attn_bias_ref[...])                              # (1, SP)
        m = jnp.max(energies, axis=1, keepdims=True)
        e = jnp.exp(energies - m)
        attn_w = e * pl.reciprocal(jnp.sum(e, axis=1, keepdims=True), approx=False)
        context = jnp.dot(attn_w, enc_ref[...], preferred_element_type=jnp.float32)

        # ---- fused output projection (single K=2HP matmul) + log_softmax ----
        hc_scr[:, 0:HP] = h_new          # 128-lane-aligned stores, no shuffle
        hc_scr[:, HP:2 * HP] = context
        logits = (jnp.dot(hc_scr[...], w_out_ref[...],
                          preferred_element_type=jnp.float32)
                  + b_out_ref[...])                                    # (1, VP)
        lm = jnp.max(logits, axis=1, keepdims=True)
        lse = lm + jnp.log(jnp.sum(jnp.exp(logits - lm), axis=1, keepdims=True))

        logp_ref[pl.ds(t, 1), :] = logits - lse
        ctx_out_ref[pl.ds(t, 1), :] = context
        hid_out_ref[pl.ds(t, 1), :] = h_new
        attnw_ref[pl.ds(t, 1), :] = attn_w

        h = h_new
        ctx = context


def attn_decoder_decode(word_inputs, last_context, last_hidden, encoder_outputs, params):
    """Runs T teacher-forced decode steps in ONE pallas_call (single invocation).

    word_inputs:     int32 (T,)
    last_context:    f32 (1, H)
    last_hidden:     f32 (1, 1, H)        (n_layers, batch, H)
    encoder_outputs: f32 (S, 1, H)
    returns: (log_probs (T, V), context (T, H), hidden (T, H), attn_weights (T, S))
    For T == 1 this is exactly AttnDecoderRNN.forward.
    """
    H = params["w_hh_t"].shape[0]
    V = params["w_out_t"].shape[1]
    S = encoder_outputs.shape[0]
    T = word_inputs.shape[0]
    HP = _round_up(H, 128)
    VP = _round_up(V, 128)
    SP = _round_up(S, 128)
    G = 3 * HP

    def pad2(x, rows, cols):
        out = jnp.zeros((rows, cols), jnp.float32)
        return out.at[:x.shape[0], :x.shape[1]].set(x.astype(jnp.float32))

    def pad_gate_cols(w):  # (rows, 3H) -> (rows, 3HP), each gate starts on a 128 lane
        out = jnp.zeros((w.shape[0], G), jnp.float32)
        for g in range(3):
            out = out.at[:, g * HP:g * HP + H].set(
                w[:, g * H:(g + 1) * H].astype(jnp.float32))
        return out

    # --- hoisted teacher-forced input-side GRU pre-activation: one batched matmul ---
    emb_rows = params["embedding"][word_inputs].astype(jnp.float32)      # (T, H) gather
    gix_raw = (emb_rows @ params["w_ih_t"][:H].astype(jnp.float32)
               + params["b_ih"].astype(jnp.float32))                      # (T, 3H)
    gix = pad_gate_cols(gix_raw)                                          # (T, 3HP)

    # --- recurrent-path weights (zero padded, gate-aligned) ---
    w_ih_c = pad2(pad_gate_cols(params["w_ih_t"][H:]), HP, G)
    w_hh = pad2(pad_gate_cols(params["w_hh_t"]), HP, G)
    b_hh = pad_gate_cols(params["b_hh"])

    # --- fused output projection: rows [0,HP) = rnn_output half, [HP,2HP) = ctx half ---
    w_out = jnp.zeros((2 * HP, VP), jnp.float32)
    w_out = w_out.at[:H, :V].set(params["w_out_t"][:H].astype(jnp.float32))
    w_out = w_out.at[HP:HP + H, :V].set(params["w_out_t"][H:].astype(jnp.float32))
    b_out = jnp.full((1, VP), _NEG, jnp.float32).at[:, :V].set(params["b_out"])

    # --- per-sequence (NOT per-step) encoder-side preprocessing ---
    enc2d = encoder_outputs.reshape(S, H).astype(jnp.float32)
    enc_pad = pad2(enc2d, SP, HP)
    proj = enc2d @ params["w_attn_t"] + params["b_attn"]      # hoisted key projection
    projT = pad2(proj.T, HP, SP)                              # pre-transposed
    attn_bias = jnp.full((1, SP), _NEG, jnp.float32).at[:, :S].set(0.0)

    ctx0 = pad2(last_context, 1, HP)
    h0 = pad2(last_hidden.reshape(1, H), 1, HP)

    vmem = pl.BlockSpec(memory_space=pltpu.MemorySpace.VMEM)
    out_shape = (
        jax.ShapeDtypeStruct((T, VP), jnp.float32),
        jax.ShapeDtypeStruct((T, HP), jnp.float32),
        jax.ShapeDtypeStruct((T, HP), jnp.float32),
        jax.ShapeDtypeStruct((T, SP), jnp.float32),
    )

    logp, ctx, hid, attnw = pl.pallas_call(
        _attn_decoder_kernel,
        out_shape=out_shape,
        in_specs=[vmem] * 11,
        out_specs=(vmem, vmem, vmem, vmem),
        scratch_shapes=[pltpu.VMEM((1, 2 * HP), jnp.float32)],  # output-proj LHS staging
    )(gix, enc_pad, projT, attn_bias, w_ih_c, w_hh, b_hh, w_out, b_out, ctx0, h0)

    return (logp[:, :V], ctx[:, :H], hid[:, :H], attnw[:, :S])


def attn_decoder_forward(word_input, last_context, last_hidden, encoder_outputs, params):
    """Single-step forward with the exact AttnDecoderRNN.forward output shapes."""
    H = last_context.shape[1]
    S = encoder_outputs.shape[0]
    logp, ctx, hid, attnw = attn_decoder_decode(
        word_input.reshape((1,)), last_context, last_hidden, encoder_outputs, params)
    return logp, ctx, hid.reshape(1, 1, H), attnw.reshape(1, 1, S)


def _reference_decode(word_inputs, last_context, last_hidden, encoder_outputs, params):
    """Pure-JAX reference: the PyTorch forward applied T times (teacher forced)."""
    H = params["w_hh_t"].shape[0]
    S = encoder_outputs.shape[0]
    enc = encoder_outputs.reshape(S, H)
    ctx = last_context
    h = last_hidden.reshape(1, H)
    proj = enc @ params["w_attn_t"] + params["b_attn"]
    logps, ctxs, hids, attns = [], [], [], []
    for t in range(int(word_inputs.shape[0])):
        x_emb = params["embedding"][word_inputs[t]].reshape(1, H)
        x = jnp.concatenate([x_emb, ctx], axis=1)
        gi = x @ params["w_ih_t"] + params["b_ih"]
        gh = h @ params["w_hh_t"] + params["b_hh"]
        r = jax.nn.sigmoid(gi[:, :H] + gh[:, :H])
        z = jax.nn.sigmoid(gi[:, H:2 * H] + gh[:, H:2 * H])
        n = jnp.tanh(gi[:, 2 * H:] + r * gh[:, 2 * H:])
        h = (1.0 - z) * n + z * h
        energies = h @ proj.T
        attn_w = jax.nn.softmax(energies, axis=1)
        ctx = attn_w @ enc
        logits = jnp.concatenate([h, ctx], axis=1) @ params["w_out_t"] + params["b_out"]
        logps.append(jax.nn.log_softmax(logits, axis=1))
        ctxs.append(ctx)
        hids.append(h)
        attns.append(attn_w)
    return (jnp.concatenate(logps, 0), jnp.concatenate(ctxs, 0),
            jnp.concatenate(hids, 0), jnp.concatenate(attns, 0))


def init_params(key, hidden_size, output_size):
    H, V = hidden_size, output_size
    ks = jax.random.split(key, 10)
    s = 0.1
    return {
        # nn.Embedding(output_size, hidden_size)
        "embedding": jax.random.normal(ks[0], (V, H), jnp.float32) * s,
        # nn.GRU(2H, H, 1): weight_ih_l0 (3H, 2H) / weight_hh_l0 (3H, H) -> transposed
        "w_ih_t": jax.random.normal(ks[1], (3 * H, 2 * H), jnp.float32).T * s,
        "w_hh_t": jax.random.normal(ks[2], (3 * H, H), jnp.float32).T * s,
        "b_ih": (jax.random.normal(ks[3], (3 * H,), jnp.float32) * s).reshape(1, 3 * H),
        "b_hh": (jax.random.normal(ks[4], (3 * H,), jnp.float32) * s).reshape(1, 3 * H),
        # Attn('general'): nn.Linear(H, H) -> transposed
        "w_attn_t": jax.random.normal(ks[5], (H, H), jnp.float32).T * s,
        "b_attn": (jax.random.normal(ks[6], (H,), jnp.float32) * s).reshape(1, H),
        # self.out = nn.Linear(2H, V) -> transposed
        "w_out_t": jax.random.normal(ks[7], (V, 2 * H), jnp.float32).T * s,
        "b_out": (jax.random.normal(ks[8], (V,), jnp.float32) * s).reshape(1, V),
    }


if __name__ == "__main__":
    HIDDEN = 32
    VOCAB = 50
    SEQ = MAX_LENGTH   # 10 encoder steps
    STEPS = 6          # decode 6 tokens with ONE fused pallas_call

    key = jax.random.PRNGKey(0)
    kp, k1, k2, k3, k4 = jax.random.split(key, 5)
    params = init_params(kp, HIDDEN, VOCAB)

    word_inputs = jax.random.randint(k4, (STEPS,), 0, VOCAB, dtype=jnp.int32)
    last_context = jax.random.normal(k1, (1, HIDDEN), jnp.float32)
    last_hidden = jax.random.normal(k2, (1, 1, HIDDEN), jnp.float32)
    encoder_outputs = jax.random.normal(k3, (SEQ, 1, HIDDEN), jnp.float32)

    decode = jax.jit(attn_decoder_decode)
    out = jax.block_until_ready(
        decode(word_inputs, last_context, last_hidden, encoder_outputs, params))

    ref = _reference_decode(word_inputs, last_context, last_hidden,
                            encoder_outputs, params)
    for got, want in zip(out, ref):
        assert got.shape == want.shape, (got.shape, want.shape)
        assert jnp.allclose(got, want, atol=1e-4, rtol=1e-4), \
            float(jnp.max(jnp.abs(got - want)))

    # Single-step, module-API forward (AttnDecoderRNN.forward shapes).
    step_out = jax.block_until_ready(
        attn_decoder_forward(word_inputs[:1], last_context, last_hidden,
                             encoder_outputs, params))
    assert step_out[0].shape == (1, VOCAB)
    assert step_out[1].shape == (1, HIDDEN)
    assert step_out[2].shape == (1, 1, HIDDEN)
    assert step_out[3].shape == (1, 1, SEQ)
    assert jnp.allclose(step_out[0], ref[0][:1], atol=1e-4, rtol=1e-4)

    print("KERNEL_OK")
</pallas_src>

<mosaic_0001>
module attributes {stable_mosaic.version = 11 : i64} {
  func.func @_attn_decoder_kernel(%arg0: memref<6x384xf32, #tpu.memory_space<vmem>>, %arg1: memref<128x128xf32, #tpu.memory_space<vmem>>, %arg2: memref<128x128xf32, #tpu.memory_space<vmem>>, %arg3: memref<1x128xf32, #tpu.memory_space<vmem>>, %arg4: memref<128x384xf32, #tpu.memory_space<vmem>>, %arg5: memref<128x384xf32, #tpu.memory_space<vmem>>, %arg6: memref<1x384xf32, #tpu.memory_space<vmem>>, %arg7: memref<256x128xf32, #tpu.memory_space<vmem>>, %arg8: memref<1x128xf32, #tpu.memory_space<vmem>>, %arg9: memref<1x128xf32, #tpu.memory_space<vmem>>, %arg10: memref<1x128xf32, #tpu.memory_space<vmem>>, %arg11: memref<6x128xf32, #tpu.memory_space<vmem>>, %arg12: memref<6x128xf32, #tpu.memory_space<vmem>>, %arg13: memref<6x128xf32, #tpu.memory_space<vmem>>, %arg14: memref<6x128xf32, #tpu.memory_space<vmem>>, %arg15: memref<1x256xf32, #tpu.memory_space<vmem>>) attributes {dimension_semantics = [], scalar_prefetch = 0 : i64, scratch_operands = 1 : i64, tpu.core_type = #tpu.core_type<tc>} {
    %c0 = arith.constant 0 : index
    %c0_0 = arith.constant 0 : index
    %0 = vector.load %arg10[%c0, %c0_0] : memref<1x128xf32, #tpu.memory_space<vmem>>, vector<1x128xf32>
    %c0_1 = arith.constant 0 : index
    %c0_2 = arith.constant 0 : index
    %1 = vector.load %arg9[%c0_1, %c0_2] : memref<1x128xf32, #tpu.memory_space<vmem>>, vector<1x128xf32>
    %c0_3 = arith.constant 0 : index
    %c0_4 = arith.constant 0 : index
    %2 = vector.load %arg0[%c0_3, %c0_4] : memref<6x384xf32, #tpu.memory_space<vmem>>, vector<1x384xf32>
    %c0_5 = arith.constant 0 : index
    %c0_6 = arith.constant 0 : index
    %3 = vector.load %arg4[%c0_5, %c0_6] : memref<128x384xf32, #tpu.memory_space<vmem>>, vector<128x384xf32>
    %cst = arith.constant dense<0.000000e+00> : vector<1x384xf32>
    %4 = tpu.matmul %1, %3, %cst {dimension_numbers = #tpu.dot_dimension_numbers<[1], [0], [0], [1], [0, 0, 1, 1], [], []>} : vector<1x128xf32>, vector<128x384xf32>, vector<1x384xf32> -> vector<1x384xf32>
    %5 = arith.addf %2, %4 : vector<1x384xf32>
    %c0_7 = arith.constant 0 : index
    %c0_8 = arith.constant 0 : index
    %6 = vector.load %arg5[%c0_7, %c0_8] : memref<128x384xf32, #tpu.memory_space<vmem>>, vector<128x384xf32>
    %cst_9 = arith.constant dense<0.000000e+00> : vector<1x384xf32>
    %7 = tpu.matmul %0, %6, %cst_9 {dimension_numbers = #tpu.dot_dimension_numbers<[1], [0], [0], [1], [0, 0, 1, 1], [], []>} : vector<1x128xf32>, vector<128x384xf32>, vector<1x384xf32> -> vector<1x384xf32>
    %c0_10 = arith.constant 0 : index
    %c0_11 = arith.constant 0 : index
    %8 = vector.load %arg6[%c0_10, %c0_11] : memref<1x384xf32, #tpu.memory_space<vmem>>, vector<1x384xf32>
    %9 = arith.addf %7, %8 : vector<1x384xf32>
    %10 = vector.extract_strided_slice %5 {offsets = [0, 0], sizes = [1, 128], strides = [1, 1]} : vector<1x384xf32> to vector<1x128xf32>
    %11 = vector.extract_strided_slice %9 {offsets = [0, 0], sizes = [1, 128], strides = [1, 1]} : vector<1x384xf32> to vector<1x128xf32>
    %12 = arith.addf %10, %11 : vector<1x128xf32>
    %13 = arith.negf %12 : vector<1x128xf32>
    %14 = math.exp %13 : vector<1x128xf32>
    %cst_12 = arith.constant 1.000000e+00 : f32
    %15 = vector.broadcast %cst_12 : f32 to vector<1x128xf32>
    %16 = arith.addf %15, %14 : vector<1x128xf32>
    %17 = arith.divf %15, %16 : vector<1x128xf32>
    %18 = vector.extract_strided_slice %5 {offsets = [0, 128], sizes = [1, 128], strides = [1, 1]} : vector<1x384xf32> to vector<1x128xf32>
    %19 = vector.extract_strided_slice %9 {offsets = [0, 128], sizes = [1, 128], strides = [1, 1]} : vector<1x384xf32> to vector<1x128xf32>
    %20 = arith.addf %18, %19 : vector<1x128xf32>
    %21 = arith.negf %20 : vector<1x128xf32>
    %22 = math.exp %21 : vector<1x128xf32>
    %cst_13 = arith.constant 1.000000e+00 : f32
    %23 = vector.broadcast %cst_13 : f32 to vector<1x128xf32>
    %24 = arith.addf %23, %22 : vector<1x128xf32>
    %25 = arith.divf %23, %24 : vector<1x128xf32>
    %26 = vector.extract_strided_slice %5 {offsets = [0, 256], sizes = [1, 128], strides = [1, 1]} : vector<1x384xf32> to vector<1x128xf32>
    %27 = vector.extract_strided_slice %9 {offsets = [0, 256], sizes = [1, 128], strides = [1, 1]} : vector<1x384xf32> to vector<1x128xf32>
    %28 = arith.mulf %17, %27 : vector<1x128xf32>
    %29 = arith.addf %26, %28 : vector<1x128xf32>
    %30 = math.tanh %29 : vector<1x128xf32>
    %cst_14 = arith.constant 1.000000e+00 : f32
    %31 = vector.broadcast %cst_14 : f32 to vector<1x128xf32>
    %32 = arith.subf %31, %25 : vector<1x128xf32>
    %33 = arith.mulf %32, %30 : vector<1x128xf32>
    %34 = arith.mulf %25, %0 : vector<1x128xf32>
    %35 = arith.addf %33, %34 : vector<1x128xf32>
    %c0_15 = arith.constant 0 : index
    %c0_16 = arith.constant 0 : index
    %36 = vector.load %arg2[%c0_15, %c0_16] : memref<128x128xf32, #tpu.memory_space<vmem>>, vector<128x128xf32>
    %cst_17 = arith.constant dense<0.000000e+00> : vector<1x128xf32>
    %37 = tpu.matmul %35, %36, %cst_17 {dimension_numbers = #tpu.dot_dimension_numbers<[1], [0], [0], [1], [0, 0, 1, 1], [], []>} : vector<1x128xf32>, vector<128x128xf32>, vector<1x128xf32> -> vector<1x128xf32>
    %c0_18 = arith.constant 0 : index
    %c0_19 = arith.constant 0 : index
    %38 = vector.load %arg3[%c0_18, %c0_19] : memref<1x128xf32, #tpu.memory_space<vmem>>, vector<1x128xf32>
    %39 = arith.addf %37, %38 : vector<1x128xf32>
    %cst_20 = arith.constant dense<0xFF800000> : vector<1xf32>
    %40 = vector.multi_reduction <maximumf>, %39, %cst_20 [1] : vector<1x128xf32> to vector<1xf32>
    %41 = vector.shape_cast %40 : vector<1xf32> to vector<1x1xf32>
    %42 = vector.broadcast %41 : vector<1x1xf32> to vector<1x128xf32>
    %43 = arith.subf %39, %42 : vector<1x128xf32>
    %44 = math.exp %43 : vector<1x128xf32>
    %cst_21 = arith.constant dense<0.000000e+00> : vector<1xf32>
    %45 = vector.multi_reduction <add>, %44, %cst_21 [1] : vector<1x128xf32> to vector<1xf32>
    %46 = vector.shape_cast %45 : vector<1xf32> to vector<1x1xf32>
    %47 = tpu.reciprocal %46 : vector<1x1xf32> -> vector<1x1xf32>
    %48 = vector.broadcast %47 : vector<1x1xf32> to vector<1x128xf32>
    %49 = arith.mulf %44, %48 : vector<1x128xf32>
    %c0_22 = arith.constant 0 : index
    %c0_23 = arith.constant 0 : index
    %50 = vector.load %arg1[%c0_22, %c0_23] : memref<128x128xf32, #tpu.memory_space<vmem>>, vector<128x128xf32>
    %cst_24 = arith.constant dense<0.000000e+00> : vector<1x128xf32>
    %51 = tpu.matmul %49, %50, %cst_24 {dimension_numbers = #tpu.dot_dimension_numbers<[1], [0], [0], [1], [0, 0, 1, 1], [], []>} : vector<1x128xf32>, vector<128x128xf32>, vector<1x128xf32> -> vector<1x128xf32>
    %c0_25 = arith.constant 0 : index
    %c0_26 = arith.constant 0 : index
    %52 = vector.load %arg15[%c0_25, %c0_26] : memref<1x256xf32, #tpu.memory_space<vmem>>, vector<1x128xf32>
    tpu.vector_store %arg15[%c0_25, %c0_26], %35 {strides = array<i32>} : memref<1x256xf32, #tpu.memory_space<vmem>>, vector<1x128xf32>,
    %c0_27 = arith.constant 0 : index
    %c128 = arith.constant 128 : index
    %53 = vector.load %arg15[%c0_27, %c128] : memref<1x256xf32, #tpu.memory_space<vmem>>, vector<1x128xf32>
    tpu.vector_store %arg15[%c0_27, %c128], %51 {strides = array<i32>} : memref<1x256xf32, #tpu.memory_space<vmem>>, vector<1x128xf32>,
    %c0_28 = arith.constant 0 : index
    %c0_29 = arith.constant 0 : index
    %54 = vector.load %arg15[%c0_28, %c0_29] : memref<1x256xf32, #tpu.memory_space<vmem>>, vector<1x256xf32>
    %c0_30 = arith.constant 0 : index
    %c0_31 = arith.constant 0 : index
    %55 = vector.load %arg7[%c0_30, %c0_31] : memref<256x128xf32, #tpu.memory_space<vmem>>, vector<256x128xf32>
    %cst_32 = arith.constant dense<0.000000e+00> : vector<1x128xf32>
    %56 = tpu.matmul %54, %55, %cst_32 {dimension_numbers = #tpu.dot_dimension_numbers<[1], [0], [0], [1], [0, 0, 1, 1], [], []>} : vector<1x256xf32>, vector<256x128xf32>, vector<1x128xf32> -> vector<1x128xf32>
    %c0_33 = arith.constant 0 : index
    %c0_34 = arith.constant 0 : index
    %57 = vector.load %arg8[%c0_33, %c0_34] : memref<1x128xf32, #tpu.memory_space<vmem>>, vector<1x128xf32>
    %58 = arith.addf %56, %57 : vector<1x128xf32>
    %cst_35 = arith.constant dense<0xFF800000> : vector<1xf32>
    %59 = vector.multi_reduction <maximumf>, %58, %cst_35 [1] : vector<1x128xf32> to vector<1xf32>
    %60 = vector.shape_cast %59 : vector<1xf32> to vector<1x1xf32>
    %61 = vector.broadcast %60 : vector<1x1xf32> to vector<1x128xf32>
    %62 = arith.subf %58, %61 : vector<1x128xf32>
    %63 = math.exp %62 : vector<1x128xf32>
    %cst_36 = arith.constant dense<0.000000e+00> : vector<1xf32>
    %64 = vector.multi_reduction <add>, %63, %cst_36 [1] : vector<1x128xf32> to vector<1xf32>
    %65 = vector.shape_cast %64 : vector<1xf32> to vector<1x1xf32>
    %66 = math.log %65 : vector<1x1xf32>
    %67 = arith.addf %60, %66 : vector<1x1xf32>
    %68 = vector.broadcast %67 : vector<1x1xf32> to vector<1x128xf32>
    %69 = arith.subf %58, %68 : vector<1x128xf32>
    %c0_37 = arith.constant 0 : index
    %c0_38 = arith.constant 0 : index
    %70 = vector.load %arg11[%c0_37, %c0_38] : memref<6x128xf32, #tpu.memory_space<vmem>>, vector<1x128xf32>
    tpu.vector_store %arg11[%c0_37, %c0_38], %69 {strides = array<i32>} : memref<6x128xf32, #tpu.memory_space<vmem>>, vector<1x128xf32>,
    %c0_39 = arith.constant 0 : index
    %c0_40 = arith.constant 0 : index
    %71 = vector.load %arg12[%c0_39, %c0_40] : memref<6x128xf32, #tpu.memory_space<vmem>>, vector<1x128xf32>
    tpu.vector_store %arg12[%c0_39, %c0_40], %51 {strides = array<i32>} : memref<6x128xf32, #tpu.memory_space<vmem>>, vector<1x128xf32>,
    %c0_41 = arith.constant 0 : index
    %c0_42 = arith.constant 0 : index
    %72 = vector.load %arg13[%c0_41, %c0_42] : memref<6x128xf32, #tpu.memory_space<vmem>>, vector<1x128xf32>
    tpu.vector_store %arg13[%c0_41, %c0_42], %35 {strides = array<i32>} : memref<6x128xf32, #tpu.memory_space<vmem>>, vector<1x128xf32>,
    %c0_43 = arith.constant 0 : index
    %c0_44 = arith.constant 0 : index
    %73 = vector.load %arg14[%c0_43, %c0_44] : memref<6x128xf32, #tpu.memory_space<vmem>>, vector<1x128xf32>
    tpu.vector_store %arg14[%c0_43, %c0_44], %49 {strides = array<i32>} : memref<6x128xf32, #tpu.memory_space<vmem>>, vector<1x128xf32>,
    %c1 = arith.constant 1 : index
    %c0_45 = arith.constant 0 : index
    %74 = vector.load %arg0[%c1, %c0_45] : memref<6x384xf32, #tpu.memory_space<vmem>>, vector<1x384xf32>
    %c0_46 = arith.constant 0 : index
    %c0_47 = arith.constant 0 : index
    %75 = vector.load %arg4[%c0_46, %c0_47] : memref<128x384xf32, #tpu.memory_space<vmem>>, vector<128x384xf32>
    %cst_48 = arith.constant dense<0.000000e+00> : vector<1x384xf32>
    %76 = tpu.matmul %51, %75, %cst_48 {dimension_numbers = #tpu.dot_dimension_numbers<[1], [0], [0], [1], [0, 0, 1, 1], [], []>} : vector<1x128xf32>, vector<128x384xf32>, vector<1x384xf32> -> vector<1x384xf32>
    %77 = arith.addf %74, %76 : vector<1x384xf32>
    %c0_49 = arith.constant 0 : index
    %c0_50 = arith.constant 0 : index
    %78 = vector.load %arg5[%c0_49, %c0_50] : memref<128x384xf32, #tpu.memory_space<vmem>>, vector<128x384xf32>
    %cst_51 = arith.constant dense<0.000000e+00> : vector<1x384xf32>
    %79 = tpu.matmul %35, %78, %cst_51 {dimension_numbers = #tpu.dot_dimension_numbers<[1], [0], [0], [1], [0, 0, 1, 1], [], []>} : vector<1x128xf32>, vector<128x384xf32>, vector<1x384xf32> -> vector<1x384xf32>
    %c0_52 = arith.constant 0 : index
    %c0_53 = arith.constant 0 : index
    %80 = vector.load %arg6[%c0_52, %c0_53] : memref<1x384xf32, #tpu.memory_space<vmem>>, vector<1x384xf32>
    %81 = arith.addf %79, %80 : vector<1x384xf32>
    %82 = vector.extract_strided_slice %77 {offsets = [0, 0], sizes = [1, 128], strides = [1, 1]} : vector<1x384xf32> to vector<1x128xf32>
    %83 = vector.extract_strided_slice %81 {offsets = [0, 0], sizes = [1, 128], strides = [1, 1]} : vector<1x384xf32> to vector<1x128xf32>
    %84 = arith.addf %82, %83 : vector<1x128xf32>
    %85 = arith.negf %84 : vector<1x128xf32>
    %86 = math.exp %85 : vector<1x128xf32>
    %cst_54 = arith.constant 1.000000e+00 : f32
    %87 = vector.broadcast %cst_54 : f32 to vector<1x128xf32>
    %88 = arith.addf %87, %86 : vector<1x128xf32>
    %89 = arith.divf %87, %88 : vector<1x128xf32>
    %90 = vector.extract_strided_slice %77 {offsets = [0, 128], sizes = [1, 128], strides = [1, 1]} : vector<1x384xf32> to vector<1x128xf32>
    %91 = vector.extract_strided_slice %81 {offsets = [0, 128], sizes = [1, 128], strides = [1, 1]} : vector<1x384xf32> to vector<1x128xf32>
    %92 = arith.addf %90, %91 : vector<1x128xf32>
    %93 = arith.negf %92 : vector<1x128xf32>
    %94 = math.exp %93 : vector<1x128xf32>
    %cst_55 = arith.constant 1.000000e+00 : f32
    %95 = vector.broadcast %cst_55 : f32 to vector<1x128xf32>
    %96 = arith.addf %95, %94 : vector<1x128xf32>
    %97 = arith.divf %95, %96 : vector<1x128xf32>
    %98 = vector.extract_strided_slice %77 {offsets = [0, 256], sizes = [1, 128], strides = [1, 1]} : vector<1x384xf32> to vector<1x128xf32>
    %99 = vector.extract_strided_slice %81 {offsets = [0, 256], sizes = [1, 128], strides = [1, 1]} : vector<1x384xf32> to vector<1x128xf32>
    %100 = arith.mulf %89, %99 : vector<1x128xf32>
    %101 = arith.addf %98, %100 : vector<1x128xf32>
    %102 = math.tanh %101 : vector<1x128xf32>
    %cst_56 = arith.constant 1.000000e+00 : f32
    %103 = vector.broadcast %cst_56 : f32 to vector<1x128xf32>
    %104 = arith.subf %103, %97 : vector<1x128xf32>
    %105 = arith.mulf %104, %102 : vector<1x128xf32>
    %106 = arith.mulf %97, %35 : vector<1x128xf32>
    %107 = arith.addf %105, %106 : vector<1x128xf32>
    %c0_57 = arith.constant 0 : index
    %c0_58 = arith.constant 0 : index
    %108 = vector.load %arg2[%c0_57, %c0_58] : memref<128x128xf32, #tpu.memory_space<vmem>>, vector<128x128xf32>
    %cst_59 = arith.constant dense<0.000000e+00> : vector<1x128xf32>
    %109 = tpu.matmul %107, %108, %cst_59 {dimension_numbers = #tpu.dot_dimension_numbers<[1], [0], [0], [1], [0, 0, 1, 1], [], []>} : vector<1x128xf32>, vector<128x128xf32>, vector<1x128xf32> -> vector<1x128xf32>
    %c0_60 = arith.constant 0 : index
    %c0_61 = arith.constant 0 : index
    %110 = vector.load %arg3[%c0_60, %c0_61] : memref<1x128xf32, #tpu.memory_space<vmem>>, vector<1x128xf32>
    %111 = arith.addf %109, %110 : vector<1x128xf32>
    %cst_62 = arith.constant dense<0xFF800000> : vector<1xf32>
    %112 = vector.multi_reduction <maximumf>, %111, %cst_62 [1] : vector<1x128xf32> to vector<1xf32>
    %113 = vector.shape_cast %112 : vector<1xf32> to vector<1x1xf32>
    %114 = vector.broadcast %113 : vector<1x1xf32> to vector<1x128xf32>
    %115 = arith.subf %111, %114 : vector<1x128xf32>
    %116 = math.exp %115 : vector<1x128xf32>
    %cst_63 = arith.constant dense<0.000000e+00> : vector<1xf32>
    %117 = vector.multi_reduction <add>, %116, %cst_63 [1] : vector<1x128xf32> to vector<1xf32>
    %118 = vector.shape_cast %117 : vector<1xf32> to vector<1x1xf32>
    %119 = tpu.reciprocal %118 : vector<1x1xf32> -> vector<1x1xf32>
    %120 = vector.broadcast %119 : vector<1x1xf32> to vector<1x128xf32>
    %121 = arith.mulf %116, %120 : vector<1x128xf32>
    %c0_64 = arith.constant 0 : index
    %c0_65 = arith.constant 0 : index
    %122 = vector.load %arg1[%c0_64, %c0_65] : memref<128x128xf32, #tpu.memory_space<vmem>>, vector<128x128xf32>
    %cst_66 = arith.constant dense<0.000000e+00> : vector<1x128xf32>
    %123 = tpu.matmul %121, %122, %cst_66 {dimension_numbers = #tpu.dot_dimension_numbers<[1], [0], [0], [1], [0, 0, 1, 1], [], []>} : vector<1x128xf32>, vector<128x128xf32>, vector<1x128xf32> -> vector<1x128xf32>
    %c0_67 = arith.constant 0 : index
    %c0_68 = arith.constant 0 : index
    %124 = vector.load %arg15[%c0_67, %c0_68] : memref<1x256xf32, #tpu.memory_space<vmem>>, vector<1x128xf32>
    tpu.vector_store %arg15[%c0_67, %c0_68], %107 {strides = array<i32>} : memref<1x256xf32, #tpu.memory_space<vmem>>, vector<1x128xf32>,
    %c0_69 = arith.constant 0 : index
    %c128_70 = arith.constant 128 : index
    %125 = vector.load %arg15[%c0_69, %c128_70] : memref<1x256xf32, #tpu.memory_space<vmem>>, vector<1x128xf32>
    tpu.vector_store %arg15[%c0_69, %c128_70], %123 {strides = array<i32>} : memref<1x256xf32, #tpu.memory_space<vmem>>, vector<1x128xf32>,
    %c0_71 = arith.constant 0 : index
    %c0_72 = arith.constant 0 : index
    %126 = vector.load %arg15[%c0_71, %c0_72] : memref<1x256xf32, #tpu.memory_space<vmem>>, vector<1x256xf32>
    %c0_73 = arith.constant 0 : index
    %c0_74 = arith.constant 0 : index
    %127 = vector.load %arg7[%c0_73, %c0_74] : memref<256x128xf32, #tpu.memory_space<vmem>>, vector<256x128xf32>
    %cst_75 = arith.constant dense<0.000000e+00> : vector<1x128xf32>
    %128 = tpu.matmul %126, %127, %cst_75 {dimension_numbers = #tpu.dot_dimension_numbers<[1], [0], [0], [1], [0, 0, 1, 1], [], []>} : vector<1x256xf32>, vector<256x128xf32>, vector<1x128xf32> -> vector<1x128xf32>
    %c0_76 = arith.constant 0 : index
    %c0_77 = arith.constant 0 : index
    %129 = vector.load %arg8[%c0_76, %c0_77] : memref<1x128xf32, #tpu.memory_space<vmem>>, vector<1x128xf32>
    %130 = arith.addf %128, %129 : vector<1x128xf32>
    %cst_78 = arith.constant dense<0xFF800000> : vector<1xf32>
    %131 = vector.multi_reduction <maximumf>, %130, %cst_78 [1] : vector<1x128xf32> to vector<1xf32>
    %132 = vector.shape_cast %131 : vector<1xf32> to vector<1x1xf32>
    %133 = vector.broadcast %132 : vector<1x1xf32> to vector<1x128xf32>
    %134 = arith.subf %130, %133 : vector<1x128xf32>
    %135 = math.exp %134 : vector<1x128xf32>
    %cst_79 = arith.constant dense<0.000000e+00> : vector<1xf32>
    %136 = vector.multi_reduction <add>, %135, %cst_79 [1] : vector<1x128xf32> to vector<1xf32>
    %137 = vector.shape_cast %136 : vector<1xf32> to vector<1x1xf32>
    %138 = math.log %137 : vector<1x1xf32>
    %139 = arith.addf %132, %138 : vector<1x1xf32>
    %140 = vector.broadcast %139 : vector<1x1xf32> to vector<1x128xf32>
    %141 = arith.subf %130, %140 : vector<1x128xf32>
    %c1_80 = arith.constant 1 : index
    %c0_81 = arith.constant 0 : index
    %142 = vector.load %arg11[%c1_80, %c0_81] : memref<6x128xf32, #tpu.memory_space<vmem>>, vector<1x128xf32>
    tpu.vector_store %arg11[%c1_80, %c0_81], %141 {strides = array<i32>} : memref<6x128xf32, #tpu.memory_space<vmem>>, vector<1x128xf32>,
    %c1_82 = arith.constant 1 : index
    %c0_83 = arith.constant 0 : index
    %143 = vector.load %arg12[%c1_82, %c0_83] : memref<6x128xf32, #tpu.memory_space<vmem>>, vector<1x128xf32>
    tpu.vector_store %arg12[%c1_82, %c0_83], %123 {strides = array<i32>} : memref<6x128xf32, #tpu.memory_space<vmem>>, vector<1x128xf32>,
    %c1_84 = arith.constant 1 : index
    %c0_85 = arith.constant 0 : index
    %144 = vector.load %arg13[%c1_84, %c0_85] : memref<6x128xf32, #tpu.memory_space<vmem>>, vector<1x128xf32>
    tpu.vector_store %arg13[%c1_84, %c0_85], %107 {strides = array<i32>} : memref<6x128xf32, #tpu.memory_space<vmem>>, vector<1x128xf32>,
    %c1_86 = arith.constant 1 : index
    %c0_87 = arith.constant 0 : index
    %145 = vector.load %arg14[%c1_86, %c0_87] : memref<6x128xf32, #tpu.memory_space<vmem>>, vector<1x128xf32>
    tpu.vector_store %arg14[%c1_86, %c0_87], %121 {strides = array<i32>} : memref<6x128xf32, #tpu.memory_space<vmem>>, vector<1x128xf32>,
    %c2 = arith.constant 2 : index
    %c0_88 = arith.constant 0 : index
    %146 = vector.load %arg0[%c2, %c0_88] : memref<6x384xf32, #tpu.memory_space<vmem>>, vector<1x384xf32>
    %c0_89 = arith.constant 0 : index
    %c0_90 = arith.constant 0 : index
    %147 = vector.load %arg4[%c0_89, %c0_90] : memref<128x384xf32, #tpu.memory_space<vmem>>, vector<128x384xf32>
    %cst_91 = arith.constant dense<0.000000e+00> : vector<1x384xf32>
    %148 = tpu.matmul %123, %147, %cst_91 {dimension_numbers = #tpu.dot_dimension_numbers<[1], [0], [0], [1], [0, 0, 1, 1], [], []>} : vector<1x128xf32>, vector<128x384xf32>, vector<1x384xf32> -> vector<1x384xf32>
    %149 = arith.addf %146, %148 : vector<1x384xf32>
    %c0_92 = arith.constant 0 : index
    %c0_93 = arith.constant 0 : index
    %150 = vector.load %arg5[%c0_92, %c0_93] : memref<128x384xf32, #tpu.memory_space<vmem>>, vector<128x384xf32>
    %cst_94 = arith.constant dense<0.000000e+00> : vector<1x384xf32>
    %151 = tpu.matmul %107, %150, %cst_94 {dimension_numbers = #tpu.dot_dimension_numbers<[1], [0], [0], [1], [0, 0, 1, 1], [], []>} : vector<1x128xf32>, vector<128x384xf32>, vector<1x384xf32> -> vector<1x384xf32>
    %c0_95 = arith.constant 0 : index
    %c0_96 = arith.constant 0 : index
    %152 = vector.load %arg6[%c0_95, %c0_96] : memref<1x384xf32, #tpu.memory_space<vmem>>, vector<1x384xf32>
    %153 = arith.addf %151, %152 : vector<1x384xf32>
    %154 = vector.extract_strided_slice %149 {offsets = [0, 0], sizes = [1, 128], strides = [1, 1]} : vector<1x384xf32> to vector<1x128xf32>
    %155 = vector.extract_strided_slice %153 {offsets = [0, 0], sizes = [1, 128], strides = [1, 1]} : vector<1x384xf32> to vector<1x128xf32>
    %156 = arith.addf %154, %155 : vector<1x128xf32>
    %157 = arith.negf %156 : vector<1x128xf32>
    %158 = math.exp %157 : vector<1x128xf32>
    %cst_97 = arith.constant 1.000000e+00 : f32
    %159 = vector.broadcast %cst_97 : f32 to vector<1x128xf32>
    %160 = arith.addf %159, %158 : vector<1x128xf32>
    %161 = arith.divf %159, %160 : vector<1x128xf32>
    %162 = vector.extract_strided_slice %149 {offsets = [0, 128], sizes = [1, 128], strides = [1, 1]} : vector<1x384xf32> to vector<1x128xf32>
    %163 = vector.extract_strided_slice %153 {offsets = [0, 128], sizes = [1, 128], strides = [1, 1]} : vector<1x384xf32> to vector<1x128xf32>
    %164 = arith.addf %162, %163 : vector<1x128xf32>
    %165 = arith.negf %164 : vector<1x128xf32>
    %166 = math.exp %165 : vector<1x128xf32>
    %cst_98 = arith.constant 1.000000e+00 : f32
    %167 = vector.broadcast %cst_98 : f32 to vector<1x128xf32>
    %168 = arith.addf %167, %166 : vector<1x128xf32>
    %169 = arith.divf %167, %168 : vector<1x128xf32>
    %170 = vector.extract_strided_slice %149 {offsets = [0, 256], sizes = [1, 128], strides = [1, 1]} : vector<1x384xf32> to vector<1x128xf32>
    %171 = vector.extract_strided_slice %153 {offsets = [0, 256], sizes = [1, 128], strides = [1, 1]} : vector<1x384xf32> to vector<1x128xf32>
    %172 = arith.mulf %161, %171 : vector<1x128xf32>
    %173 = arith.addf %170, %172 : vector<1x128xf32>
    %174 = math.tanh %173 : vector<1x128xf32>
    %cst_99 = arith.constant 1.000000e+00 : f32
    %175 = vector.broadcast %cst_99 : f32 to vector<1x128xf32>
    %176 = arith.subf %175, %169 : vector<1x128xf32>
    %177 = arith.mulf %176, %174 : vector<1x128xf32>
    %178 = arith.mulf %169, %107 : vector<1x128xf32>
    %179 = arith.addf %177, %178 : vector<1x128xf32>
    %c0_100 = arith.constant 0 : index
    %c0_101 = arith.constant 0 : index
    %180 = vector.load %arg2[%c0_100, %c0_101] : memref<128x128xf32, #tpu.memory_space<vmem>>, vector<128x128xf32>
    %cst_102 = arith.constant dense<0.000000e+00> : vector<1x128xf32>
    %181 = tpu.matmul %179, %180, %cst_102 {dimension_numbers = #tpu.dot_dimension_numbers<[1], [0], [0], [1], [0, 0, 1, 1], [], []>} : vector<1x128xf32>, vector<128x128xf32>, vector<1x128xf32> -> vector<1x128xf32>
    %c0_103 = arith.constant 0 : index
    %c0_104 = arith.constant 0 : index
    %182 = vector.load %arg3[%c0_103, %c0_104] : memref<1x128xf32, #tpu.memory_space<vmem>>, vector<1x128xf32>
    %183 = arith.addf %181, %182 : vector<1x128xf32>
    %cst_105 = arith.constant dense<0xFF800000> : vector<1xf32>
    %184 = vector.multi_reduction <maximumf>, %183, %cst_105 [1] : vector<1x128xf32> to vector<1xf32>
    %185 = vector.shape_cast %184 : vector<1xf32> to vector<1x1xf32>
    %186 = vector.broadcast %185 : vector<1x1xf32> to vector<1x128xf32>
    %187 = arith.subf %183, %186 : vector<1x128xf32>
    %188 = math.exp %187 : vector<1x128xf32>
    %cst_106 = arith.constant dense<0.000000e+00> : vector<1xf32>
    %189 = vector.multi_reduction <add>, %188, %cst_106 [1] : vector<1x128xf32> to vector<1xf32>
    %190 = vector.shape_cast %189 : vector<1xf32> to vector<1x1xf32>
    %191 = tpu.reciprocal %190 : vector<1x1xf32> -> vector<1x1xf32>
    %192 = vector.broadcast %191 : vector<1x1xf32> to vector<1x128xf32>
    %193 = arith.mulf %188, %192 : vector<1x128xf32>
    %c0_107 = arith.constant 0 : index
    %c0_108 = arith.constant 0 : index
    %194 = vector.load %arg1[%c0_107, %c0_108] : memref<128x128xf32, #tpu.memory_space<vmem>>, vector<128x128xf32>
    %cst_109 = arith.constant dense<0.000000e+00> : vector<1x128xf32>
    %195 = tpu.matmul %193, %194, %cst_109 {dimension_numbers = #tpu.dot_dimension_numbers<[1], [0], [0], [1], [0, 0, 1, 1], [], []>} : vector<1x128xf32>, vector<128x128xf32>, vector<1x128xf32> -> vector<1x128xf32>
    %c0_110 = arith.constant 0 : index
    %c0_111 = arith.constant 0 : index
    %196 = vector.load %arg15[%c0_110, %c0_111] : memref<1x256xf32, #tpu.memory_space<vmem>>, vector<1x128xf32>
    tpu.vector_store %arg15[%c0_110, %c0_111], %179 {strides = array<i32>} : memref<1x256xf32, #tpu.memory_space<vmem>>, vector<1x128xf32>,
    %c0_112 = arith.constant 0 : index
    %c128_113 = arith.constant 128 : index
    %197 = vector.load %arg15[%c0_112, %c128_113] : memref<1x256xf32, #tpu.memory_space<vmem>>, vector<1x128xf32>
    tpu.vector_store %arg15[%c0_112, %c128_113], %195 {strides = array<i32>} : memref<1x256xf32, #tpu.memory_space<vmem>>, vector<1x128xf32>,
    %c0_114 = arith.constant 0 : index
    %c0_115 = arith.constant 0 : index
    %198 = vector.load %arg15[%c0_114, %c0_115] : memref<1x256xf32, #tpu.memory_space<vmem>>, vector<1x256xf32>
    %c0_116 = arith.constant 0 : index
    %c0_117 = arith.constant 0 : index
    %199 = vector.load %arg7[%c0_116, %c0_117] : memref<256x128xf32, #tpu.memory_space<vmem>>, vector<256x128xf32>
    %cst_118 = arith.constant dense<0.000000e+00> : vector<1x128xf32>
    %200 = tpu.matmul %198, %199, %cst_118 {dimension_numbers = #tpu.dot_dimension_numbers<[1], [0], [0], [1], [0, 0, 1, 1], [], []>} : vector<1x256xf32>, vector<256x128xf32>, vector<1x128xf32> -> vector<1x128xf32>
    %c0_119 = arith.constant 0 : index
    %c0_120 = arith.constant 0 : index
    %201 = vector.load %arg8[%c0_119, %c0_120] : memref<1x128xf32, #tpu.memory_space<vmem>>, vector<1x128xf32>
    %202 = arith.addf %200, %201 : vector<1x128xf32>
    %cst_121 = arith.constant dense<0xFF800000> : vector<1xf32>
    %203 = vector.multi_reduction <maximumf>, %202, %cst_121 [1] : vector<1x128xf32> to vector<1xf32>
    %204 = vector.shape_cast %203 : vector<1xf32> to vector<1x1xf32>
    %205 = vector.broadcast %204 : vector<1x1xf32> to vector<1x128xf32>
    %206 = arith.subf %202, %205 : vector<1x128xf32>
    %207 = math.exp %206 : vector<1x128xf32>
    %cst_122 = arith.constant dense<0.000000e+00> : vector<1xf32>
    %208 = vector.multi_reduction <add>, %207, %cst_122 [1] : vector<1x128xf32> to vector<1xf32>
    %209 = vector.shape_cast %208 : vector<1xf32> to vector<1x1xf32>
    %210 = math.log %209 : vector<1x1xf32>
    %211 = arith.addf %204, %210 : vector<1x1xf32>
    %212 = vector.broadcast %211 : vector<1x1xf32> to vector<1x128xf32>
    %213 = arith.subf %202, %212 : vector<1x128xf32>
    %c2_123 = arith.constant 2 : index
    %c0_124 = arith.constant 0 : index
    %214 = vector.load %arg11[%c2_123, %c0_124] : memref<6x128xf32, #tpu.memory_space<vmem>>, vector<1x128xf32>
    tpu.vector_store %arg11[%c2_123, %c0_124], %213 {strides = array<i32>} : memref<6x128xf32, #tpu.memory_space<vmem>>, vector<1x128xf32>,
    %c2_125 = arith.constant 2 : index
    %c0_126 = arith.constant 0 : index
    %215 = vector.load %arg12[%c2_125, %c0_126] : memref<6x128xf32, #tpu.memory_space<vmem>>, vector<1x128xf32>
    tpu.vector_store %arg12[%c2_125, %c0_126], %195 {strides = array<i32>} : memref<6x128xf32, #tpu.memory_space<vmem>>, vector<1x128xf32>,
    %c2_127 = arith.constant 2 : index
    %c0_128 = arith.constant 0 : index
    %216 = vector.load %arg13[%c2_127, %c0_128] : memref<6x128xf32, #tpu.memory_space<vmem>>, vector<1x128xf32>
    tpu.vector_store %arg13[%c2_127, %c0_128], %179 {strides = array<i32>} : memref<6x128xf32, #tpu.memory_space<vmem>>, vector<1x128xf32>,
    %c2_129 = arith.constant 2 : index
    %c0_130 = arith.constant 0 : index
    %217 = vector.load %arg14[%c2_129, %c0_130] : memref<6x128xf32, #tpu.memory_space<vmem>>, vector<1x128xf32>
    tpu.vector_store %arg14[%c2_129, %c0_130], %193 {strides = array<i32>} : memref<6x128xf32, #tpu.memory_space<vmem>>, vector<1x128xf32>,
    %c3 = arith.constant 3 : index
    %c0_131 = arith.constant 0 : index
    %218 = vector.load %arg0[%c3, %c0_131] : memref<6x384xf32, #tpu.memory_space<vmem>>, vector<1x384xf32>
    %c0_132 = arith.constant 0 : index
    %c0_133 = arith.constant 0 : index
    %219 = vector.load %arg4[%c0_132, %c0_133] : memref<128x384xf32, #tpu.memory_space<vmem>>, vector<128x384xf32>
    %cst_134 = arith.constant dense<0.000000e+00> : vector<1x384xf32>
    %220 = tpu.matmul %195, %219, %cst_134 {dimension_numbers = #tpu.dot_dimension_numbers<[1], [0], [0], [1], [0, 0, 1, 1], [], []>} : vector<1x128xf32>, vector<128x384xf32>, vector<1x384xf32> -> vector<1x384xf32>
    %221 = arith.addf %218, %220 : vector<1x384xf32>
    %c0_135 = arith.constant 0 : index
    %c0_136 = arith.constant 0 : index
    %222 = vector.load %arg5[%c0_135, %c0_136] : memref<128x384xf32, #tpu.memory_space<vmem>>, vector<128x384xf32>
    %cst_137 = arith.constant dense<0.000000e+00> : vector<1x384xf32>
    %223 = tpu.matmul %179, %222, %cst_137 {dimension_numbers = #tpu.dot_dimension_numbers<[1], [0], [0], [1], [0, 0, 1, 1], [], []>} : vector<1x128xf32>, vector<128x384xf32>, vector<1x384xf32> -> vector<1x384xf32>
    %c0_138 = arith.constant 0 : index
    %c0_139 = arith.constant 0 : index
    %224 = vector.load %arg6[%c0_138, %c0_139] : memref<1x384xf32, #tpu.memory_space<vmem>>, vector<1x384xf32>
    %225 = arith.addf %223, %224 : vector<1x384xf32>
    %226 = vector.extract_strided_slice %221 {offsets = [0, 0], sizes = [1, 128], strides = [1, 1]} : vector<1x384xf32> to vector<1x128xf32>
    %227 = vector.extract_strided_slice %225 {offsets = [0, 0], sizes = [1, 128], strides = [1, 1]} : vector<1x384xf32> to vector<1x128xf32>
    %228 = arith.addf %226, %227 : vector<1x128xf32>
    %229 = arith.negf %228 : vector<1x128xf32>
    %230 = math.exp %229 : vector<1x128xf32>
    %cst_140 = arith.constant 1.000000e+00 : f32
    %231 = vector.broadcast %cst_140 : f32 to vector<1x128xf32>
    %232 = arith.addf %231, %230 : vector<1x128xf32>
    %233 = arith.divf %231, %232 : vector<1x128xf32>
    %234 = vector.extract_strided_slice %221 {offsets = [0, 128], sizes = [1, 128], strides = [1, 1]} : vector<1x384xf32> to vector<1x128xf32>
    %235 = vector.extract_strided_slice %225 {offsets = [0, 128], sizes = [1, 128], strides = [1, 1]} : vector<1x384xf32> to vector<1x128xf32>
    %236 = arith.addf %234, %235 : vector<1x128xf32>
    %237 = arith.negf %236 : vector<1x128xf32>
    %238 = math.exp %237 : vector<1x128xf32>
    %cst_141 = arith.constant 1.000000e+00 : f32
    %239 = vector.broadcast %cst_141 : f32 to vector<1x128xf32>
    %240 = arith.addf %239, %238 : vector<1x128xf32>
    %241 = arith.divf %239, %240 : vector<1x128xf32>
    %242 = vector.extract_strided_slice %221 {offsets = [0, 256], sizes = [1, 128], strides = [1, 1]} : vector<1x384xf32> to vector<1x128xf32>
    %243 = vector.extract_strided_slice %225 {offsets = [0, 256], sizes = [1, 128], strides = [1, 1]} : vector<1x384xf32> to vector<1x128xf32>
    %244 = arith.mulf %233, %243 : vector<1x128xf32>
    %245 = arith.addf %242, %244 : vector<1x128xf32>
    %246 = math.tanh %245 : vector<1x128xf32>
    %cst_142 = arith.constant 1.000000e+00 : f32
    %247 = vector.broadcast %cst_142 : f32 to vector<1x128xf32>
    %248 = arith.subf %247, %241 : vector<1x128xf32>
    %249 = arith.mulf %248, %246 : vector<1x128xf32>
    %250 = arith.mulf %241, %179 : vector<1x128xf32>
    %251 = arith.addf %249, %250 : vector<1x128xf32>
    %c0_143 = arith.constant 0 : index
    %c0_144 = arith.constant 0 : index
    %252 = vector.load %arg2[%c0_143, %c0_144] : memref<128x128xf32, #tpu.memory_space<vmem>>, vector<128x128xf32>
    %cst_145 = arith.constant dense<0.000000e+00> : vector<1x128xf32>
    %253 = tpu.matmul %251, %252, %cst_145 {dimension_numbers = #tpu.dot_dimension_numbers<[1], [0], [0], [1], [0, 0, 1, 1], [], []>} : vector<1x128xf32>, vector<128x128xf32>, vector<1x128xf32> -> vector<1x128xf32>
    %c0_146 = arith.constant 0 : index
    %c0_147 = arith.constant 0 : index
    %254 = vector.load %arg3[%c0_146, %c0_147] : memref<1x128xf32, #tpu.memory_space<vmem>>, vector<1x128xf32>
    %255 = arith.addf %253, %254 : vector<1x128xf32>
    %cst_148 = arith.constant dense<0xFF800000> : vector<1xf32>
    %256 = vector.multi_reduction <maximumf>, %255, %cst_148 [1] : vector<1x128xf32> to vector<1xf32>
    %257 = vector.shape_cast %256 : vector<1xf32> to vector<1x1xf32>
    %258 = vector.broadcast %257 : vector<1x1xf32> to vector<1x128xf32>
    %259 = arith.subf %255, %258 : vector<1x128xf32>
    %260 = math.exp %259 : vector<1x128xf32>
    %cst_149 = arith.constant dense<0.000000e+00> : vector<1xf32>
    %261 = vector.multi_reduction <add>, %260, %cst_149 [1] : vector<1x128xf32> to vector<1xf32>
    %262 = vector.shape_cast %261 : vector<1xf32> to vector<1x1xf32>
    %263 = tpu.reciprocal %262 : vector<1x1xf32> -> vector<1x1xf32>
    %264 = vector.broadcast %263 : vector<1x1xf32> to vector<1x128xf32>
    %265 = arith.mulf %260, %264 : vector<1x128xf32>
    %c0_150 = arith.constant 0 : index
    %c0_151 = arith.constant 0 : index
    %266 = vector.load %arg1[%c0_150, %c0_151] : memref<128x128xf32, #tpu.memory_space<vmem>>, vector<128x128xf32>
    %cst_152 = arith.constant dense<0.000000e+00> : vector<1x128xf32>
    %267 = tpu.matmul %265, %266, %cst_152 {dimension_numbers = #tpu.dot_dimension_numbers<[1], [0], [0], [1], [0, 0, 1, 1], [], []>} : vector<1x128xf32>, vector<128x128xf32>, vector<1x128xf32> -> vector<1x128xf32>
    %c0_153 = arith.constant 0 : index
    %c0_154 = arith.constant 0 : index
    %268 = vector.load %arg15[%c0_153, %c0_154] : memref<1x256xf32, #tpu.memory_space<vmem>>, vector<1x128xf32>
    tpu.vector_store %arg15[%c0_153, %c0_154], %251 {strides = array<i32>} : memref<1x256xf32, #tpu.memory_space<vmem>>, vector<1x128xf32>,
    %c0_155 = arith.constant 0 : index
    %c128_156 = arith.constant 128 : index
    %269 = vector.load %arg15[%c0_155, %c128_156] : memref<1x256xf32, #tpu.memory_space<vmem>>, vector<1x128xf32>
    tpu.vector_store %arg15[%c0_155, %c128_156], %267 {strides = array<i32>} : memref<1x256xf32, #tpu.memory_space<vmem>>, vector<1x128xf32>,
    %c0_157 = arith.constant 0 : index
    %c0_158 = arith.constant 0 : index
    %270 = vector.load %arg15[%c0_157, %c0_158] : memref<1x256xf32, #tpu.memory_space<vmem>>, vector<1x256xf32>
    %c0_159 = arith.constant 0 : index
    %c0_160 = arith.constant 0 : index
    %271 = vector.load %arg7[%c0_159, %c0_160] : memref<256x128xf32, #tpu.memory_space<vmem>>, vector<256x128xf32>
    %cst_161 = arith.constant dense<0.000000e+00> : vector<1x128xf32>
    %272 = tpu.matmul %270, %271, %cst_161 {dimension_numbers = #tpu.dot_dimension_numbers<[1], [0], [0], [1], [0, 0, 1, 1], [], []>} : vector<1x256xf32>, vector<256x128xf32>, vector<1x128xf32> -> vector<1x128xf32>
    %c0_162 = arith.constant 0 : index
    %c0_163 = arith.constant 0 : index
    %273 = vector.load %arg8[%c0_162, %c0_163] : memref<1x128xf32, #tpu.memory_space<vmem>>, vector<1x128xf32>
    %274 = arith.addf %272, %273 : vector<1x128xf32>
    %cst_164 = arith.constant dense<0xFF800000> : vector<1xf32>
    %275 = vector.multi_reduction <maximumf>, %274, %cst_164 [1] : vector<1x128xf32> to vector<1xf32>
    %276 = vector.shape_cast %275 : vector<1xf32> to vector<1x1xf32>
    %277 = vector.broadcast %276 : vector<1x1xf32> to vector<1x128xf32>
    %278 = arith.subf %274, %277 : vector<1x128xf32>
    %279 = math.exp %278 : vector<1x128xf32>
    %cst_165 = arith.constant dense<0.000000e+00> : vector<1xf32>
    %280 = vector.multi_reduction <add>, %279, %cst_165 [1] : vector<1x128xf32> to vector<1xf32>
    %281 = vector.shape_cast %280 : vector<1xf32> to vector<1x1xf32>
    %282 = math.log %281 : vector<1x1xf32>
    %283 = arith.addf %276, %282 : vector<1x1xf32>
    %284 = vector.broadcast %283 : vector<1x1xf32> to vector<1x128xf32>
    %285 = arith.subf %274, %284 : vector<1x128xf32>
    %c3_166 = arith.constant 3 : index
    %c0_167 = arith.constant 0 : index
    %286 = vector.load %arg11[%c3_166, %c0_167] : memref<6x128xf32, #tpu.memory_space<vmem>>, vector<1x128xf32>
    tpu.vector_store %arg11[%c3_166, %c0_167], %285 {strides = array<i32>} : memref<6x128xf32, #tpu.memory_space<vmem>>, vector<1x128xf32>,
    %c3_168 = arith.constant 3 : index
    %c0_169 = arith.constant 0 : index
    %287 = vector.load %arg12[%c3_168, %c0_169] : memref<6x128xf32, #tpu.memory_space<vmem>>, vector<1x128xf32>
    tpu.vector_store %arg12[%c3_168, %c0_169], %267 {strides = array<i32>} : memref<6x128xf32, #tpu.memory_space<vmem>>, vector<1x128xf32>,
    %c3_170 = arith.constant 3 : index
    %c0_171 = arith.constant 0 : index
    %288 = vector.load %arg13[%c3_170, %c0_171] : memref<6x128xf32, #tpu.memory_space<vmem>>, vector<1x128xf32>
    tpu.vector_store %arg13[%c3_170, %c0_171], %251 {strides = array<i32>} : memref<6x128xf32, #tpu.memory_space<vmem>>, vector<1x128xf32>,
    %c3_172 = arith.constant 3 : index
    %c0_173 = arith.constant 0 : index
    %289 = vector.load %arg14[%c3_172, %c0_173] : memref<6x128xf32, #tpu.memory_space<vmem>>, vector<1x128xf32>
    tpu.vector_store %arg14[%c3_172, %c0_173], %265 {strides = array<i32>} : memref<6x128xf32, #tpu.memory_space<vmem>>, vector<1x128xf32>,
    %c4 = arith.constant 4 : index
    %c0_174 = arith.constant 0 : index
    %290 = vector.load %arg0[%c4, %c0_174] : memref<6x384xf32, #tpu.memory_space<vmem>>, vector<1x384xf32>
    %c0_175 = arith.constant 0 : index
    %c0_176 = arith.constant 0 : index
    %291 = vector.load %arg4[%c0_175, %c0_176] : memref<128x384xf32, #tpu.memory_space<vmem>>, vector<128x384xf32>
    %cst_177 = arith.constant dense<0.000000e+00> : vector<1x384xf32>
    %292 = tpu.matmul %267, %291, %cst_177 {dimension_numbers = #tpu.dot_dimension_numbers<[1], [0], [0], [1], [0, 0, 1, 1], [], []>} : vector<1x128xf32>, vector<128x384xf32>, vector<1x384xf32> -> vector<1x384xf32>
    %293 = arith.addf %290, %292 : vector<1x384xf32>
    %c0_178 = arith.constant 0 : index
    %c0_179 = arith.constant 0 : index
    %294 = vector.load %arg5[%c0_178, %c0_179] : memref<128x384xf32, #tpu.memory_space<vmem>>, vector<128x384xf32>
    %cst_180 = arith.constant dense<0.000000e+00> : vector<1x384xf32>
    %295 = tpu.matmul %251, %294, %cst_180 {dimension_numbers = #tpu.dot_dimension_numbers<[1], [0], [0], [1], [0, 0, 1, 1], [], []>} : vector<1x128xf32>, vector<128x384xf32>, vector<1x384xf32> -> vector<1x384xf32>
    %c0_181 = arith.constant 0 : index
    %c0_182 = arith.constant 0 : index
    %296 = vector.load %arg6[%c0_181, %c0_182] : memref<1x384xf32, #tpu.memory_space<vmem>>, vector<1x384xf32>
    %297 = arith.addf %295, %296 : vector<1x384xf32>
    %298 = vector.extract_strided_slice %293 {offsets = [0, 0], sizes = [1, 128], strides = [1, 1]} : vector<1x384xf32> to vector<1x128xf32>
    %299 = vector.extract_strided_slice %297 {offsets = [0, 0], sizes = [1, 128], strides = [1, 1]} : vector<1x384xf32> to vector<1x128xf32>
    %300 = arith.addf %298, %299 : vector<1x128xf32>
    %301 = arith.negf %300 : vector<1x128xf32>
    %302 = math.exp %301 : vector<1x128xf32>
    %cst_183 = arith.constant 1.000000e+00 : f32
    %303 = vector.broadcast %cst_183 : f32 to vector<1x128xf32>
    %304 = arith.addf %303, %302 : vector<1x128xf32>
    %305 = arith.divf %303, %304 : vector<1x128xf32>
    %306 = vector.extract_strided_slice %293 {offsets = [0, 128], sizes = [1, 128], strides = [1, 1]} : vector<1x384xf32> to vector<1x128xf32>
    %307 = vector.extract_strided_slice %297 {offsets = [0, 128], sizes = [1, 128], strides = [1, 1]} : vector<1x384xf32> to vector<1x128xf32>
    %308 = arith.addf %306, %307 : vector<1x128xf32>
    %309 = arith.negf %308 : vector<1x128xf32>
    %310 = math.exp %309 : vector<1x128xf32>
    %cst_184 = arith.constant 1.000000e+00 : f32
    %311 = vector.broadcast %cst_184 : f32 to vector<1x128xf32>
    %312 = arith.addf %311, %310 : vector<1x128xf32>
    %313 = arith.divf %311, %312 : vector<1x128xf32>
    %314 = vector.extract_strided_slice %293 {offsets = [0, 256], sizes = [1, 128], strides = [1, 1]} : vector<1x384xf32> to vector<1x128xf32>
    %315 = vector.extract_strided_slice %297 {offsets = [0, 256], sizes = [1, 128], strides = [1, 1]} : vector<1x384xf32> to vector<1x128xf32>
    %316 = arith.mulf %305, %315 : vector<1x128xf32>
    %317 = arith.addf %314, %316 : vector<1x128xf32>
    %318 = math.tanh %317 : vector<1x128xf32>
    %cst_185 = arith.constant 1.000000e+00 : f32
    %319 = vector.broadcast %cst_185 : f32 to vector<1x128xf32>
    %320 = arith.subf %319, %313 : vector<1x128xf32>
    %321 = arith.mulf %320, %318 : vector<1x128xf32>
    %322 = arith.mulf %313, %251 : vector<1x128xf32>
    %323 = arith.addf %321, %322 : vector<1x128xf32>
    %c0_186 = arith.constant 0 : index
    %c0_187 = arith.constant 0 : index
    %324 = vector.load %arg2[%c0_186, %c0_187] : memref<128x128xf32, #tpu.memory_space<vmem>>, vector<128x128xf32>
    %cst_188 = arith.constant dense<0.000000e+00> : vector<1x128xf32>
    %325 = tpu.matmul %323, %324, %cst_188 {dimension_numbers = #tpu.dot_dimension_numbers<[1], [0], [0], [1], [0, 0, 1, 1], [], []>} : vector<1x128xf32>, vector<128x128xf32>, vector<1x128xf32> -> vector<1x128xf32>
    %c0_189 = arith.constant 0 : index
    %c0_190 = arith.constant 0 : index
    %326 = vector.load %arg3[%c0_189, %c0_190] : memref<1x128xf32, #tpu.memory_space<vmem>>, vector<1x128xf32>
    %327 = arith.addf %325, %326 : vector<1x128xf32>
    %cst_191 = arith.constant dense<0xFF800000> : vector<1xf32>
    %328 = vector.multi_reduction <maximumf>, %327, %cst_191 [1] : vector<1x128xf32> to vector<1xf32>
    %329 = vector.shape_cast %328 : vector<1xf32> to vector<1x1xf32>
    %330 = vector.broadcast %329 : vector<1x1xf32> to vector<1x128xf32>
    %331 = arith.subf %327, %330 : vector<1x128xf32>
    %332 = math.exp %331 : vector<1x128xf32>
    %cst_192 = arith.constant dense<0.000000e+00> : vector<1xf32>
    %333 = vector.multi_reduction <add>, %332, %cst_192 [1] : vector<1x128xf32> to vector<1xf32>
    %334 = vector.shape_cast %333 : vector<1xf32> to vector<1x1xf32>
    %335 = tpu.reciprocal %334 : vector<1x1xf32> -> vector<1x1xf32>
    %336 = vector.broadcast %335 : vector<1x1xf32> to vector<1x128xf32>
    %337 = arith.mulf %332, %336 : vector<1x128xf32>
    %c0_193 = arith.constant 0 : index
    %c0_194 = arith.constant 0 : index
    %338 = vector.load %arg1[%c0_193, %c0_194] : memref<128x128xf32, #tpu.memory_space<vmem>>, vector<128x128xf32>
    %cst_195 = arith.constant dense<0.000000e+00> : vector<1x128xf32>
    %339 = tpu.matmul %337, %338, %cst_195 {dimension_numbers = #tpu.dot_dimension_numbers<[1], [0], [0], [1], [0, 0, 1, 1], [], []>} : vector<1x128xf32>, vector<128x128xf32>, vector<1x128xf32> -> vector<1x128xf32>
    %c0_196 = arith.constant 0 : index
    %c0_197 = arith.constant 0 : index
    %340 = vector.load %arg15[%c0_196, %c0_197] : memref<1x256xf32, #tpu.memory_space<vmem>>, vector<1x128xf32>
    tpu.vector_store %arg15[%c0_196, %c0_197], %323 {strides = array<i32>} : memref<1x256xf32, #tpu.memory_space<vmem>>, vector<1x128xf32>,
    %c0_198 = arith.constant 0 : index
    %c128_199 = arith.constant 128 : index
    %341 = vector.load %arg15[%c0_198, %c128_199] : memref<1x256xf32, #tpu.memory_space<vmem>>, vector<1x128xf32>
    tpu.vector_store %arg15[%c0_198, %c128_199], %339 {strides = array<i32>} : memref<1x256xf32, #tpu.memory_space<vmem>>, vector<1x128xf32>,
    %c0_200 = arith.constant 0 : index
    %c0_201 = arith.constant 0 : index
    %342 = vector.load %arg15[%c0_200, %c0_201] : memref<1x256xf32, #tpu.memory_space<vmem>>, vector<1x256xf32>
    %c0_202 = arith.constant 0 : index
    %c0_203 = arith.constant 0 : index
    %343 = vector.load %arg7[%c0_202, %c0_203] : memref<256x128xf32, #tpu.memory_space<vmem>>, vector<256x128xf32>
    %cst_204 = arith.constant dense<0.000000e+00> : vector<1x128xf32>
    %344 = tpu.matmul %342, %343, %cst_204 {dimension_numbers = #tpu.dot_dimension_numbers<[1], [0], [0], [1], [0, 0, 1, 1], [], []>} : vector<1x256xf32>, vector<256x128xf32>, vector<1x128xf32> -> vector<1x128xf32>
    %c0_205 = arith.constant 0 : index
    %c0_206 = arith.constant 0 : index
    %345 = vector.load %arg8[%c0_205, %c0_206] : memref<1x128xf32, #tpu.memory_space<vmem>>, vector<1x128xf32>
    %346 = arith.addf %344, %345 : vector<1x128xf32>
    %cst_207 = arith.constant dense<0xFF800000> : vector<1xf32>
    %347 = vector.multi_reduction <maximumf>, %346, %cst_207 [1] : vector<1x128xf32> to vector<1xf32>
    %348 = vector.shape_cast %347 : vector<1xf32> to vector<1x1xf32>
    %349 = vector.broadcast %348 : vector<1x1xf32> to vector<1x128xf32>
    %350 = arith.subf %346, %349 : vector<1x128xf32>
    %351 = math.exp %350 : vector<1x128xf32>
    %cst_208 = arith.constant dense<0.000000e+00> : vector<1xf32>
    %352 = vector.multi_reduction <add>, %351, %cst_208 [1] : vector<1x128xf32> to vector<1xf32>
    %353 = vector.shape_cast %352 : vector<1xf32> to vector<1x1xf32>
    %354 = math.log %353 : vector<1x1xf32>
    %355 = arith.addf %348, %354 : vector<1x1xf32>
    %356 = vector.broadcast %355 : vector<1x1xf32> to vector<1x128xf32>
    %357 = arith.subf %346, %356 : vector<1x128xf32>
    %c4_209 = arith.constant 4 : index
    %c0_210 = arith.constant 0 : index
    %358 = vector.load %arg11[%c4_209, %c0_210] : memref<6x128xf32, #tpu.memory_space<vmem>>, vector<1x128xf32>
    tpu.vector_store %arg11[%c4_209, %c0_210], %357 {strides = array<i32>} : memref<6x128xf32, #tpu.memory_space<vmem>>, vector<1x128xf32>,
    %c4_211 = arith.constant 4 : index
    %c0_212 = arith.constant 0 : index
    %359 = vector.load %arg12[%c4_211, %c0_212] : memref<6x128xf32, #tpu.memory_space<vmem>>, vector<1x128xf32>
    tpu.vector_store %arg12[%c4_211, %c0_212], %339 {strides = array<i32>} : memref<6x128xf32, #tpu.memory_space<vmem>>, vector<1x128xf32>,
    %c4_213 = arith.constant 4 : index
    %c0_214 = arith.constant 0 : index
    %360 = vector.load %arg13[%c4_213, %c0_214] : memref<6x128xf32, #tpu.memory_space<vmem>>, vector<1x128xf32>
    tpu.vector_store %arg13[%c4_213, %c0_214], %323 {strides = array<i32>} : memref<6x128xf32, #tpu.memory_space<vmem>>, vector<1x128xf32>,
    %c4_215 = arith.constant 4 : index
    %c0_216 = arith.constant 0 : index
    %361 = vector.load %arg14[%c4_215, %c0_216] : memref<6x128xf32, #tpu.memory_space<vmem>>, vector<1x128xf32>
    tpu.vector_store %arg14[%c4_215, %c0_216], %337 {strides = array<i32>} : memref<6x128xf32, #tpu.memory_space<vmem>>, vector<1x128xf32>,
    %c5 = arith.constant 5 : index
    %c0_217 = arith.constant 0 : index
    %362 = vector.load %arg0[%c5, %c0_217] : memref<6x384xf32, #tpu.memory_space<vmem>>, vector<1x384xf32>
    %c0_218 = arith.constant 0 : index
    %c0_219 = arith.constant 0 : index
    %363 = vector.load %arg4[%c0_218, %c0_219] : memref<128x384xf32, #tpu.memory_space<vmem>>, vector<128x384xf32>
    %cst_220 = arith.constant dense<0.000000e+00> : vector<1x384xf32>
    %364 = tpu.matmul %339, %363, %cst_220 {dimension_numbers = #tpu.dot_dimension_numbers<[1], [0], [0], [1], [0, 0, 1, 1], [], []>} : vector<1x128xf32>, vector<128x384xf32>, vector<1x384xf32> -> vector<1x384xf32>
    %365 = arith.addf %362, %364 : vector<1x384xf32>
    %c0_221 = arith.constant 0 : index
    %c0_222 = arith.constant 0 : index
    %366 = vector.load %arg5[%c0_221, %c0_222] : memref<128x384xf32, #tpu.memory_space<vmem>>, vector<128x384xf32>
    %cst_223 = arith.constant dense<0.000000e+00> : vector<1x384xf32>
    %367 = tpu.matmul %323, %366, %cst_223 {dimension_numbers = #tpu.dot_dimension_numbers<[1], [0], [0], [1], [0, 0, 1, 1], [], []>} : vector<1x128xf32>, vector<128x384xf32>, vector<1x384xf32> -> vector<1x384xf32>
    %c0_224 = arith.constant 0 : index
    %c0_225 = arith.constant 0 : index
    %368 = vector.load %arg6[%c0_224, %c0_225] : memref<1x384xf32, #tpu.memory_space<vmem>>, vector<1x384xf32>
    %369 = arith.addf %367, %368 : vector<1x384xf32>
    %370 = vector.extract_strided_slice %365 {offsets = [0, 0], sizes = [1, 128], strides = [1, 1]} : vector<1x384xf32> to vector<1x128xf32>
    %371 = vector.extract_strided_slice %369 {offsets = [0, 0], sizes = [1, 128], strides = [1, 1]} : vector<1x384xf32> to vector<1x128xf32>
    %372 = arith.addf %370, %371 : vector<1x128xf32>
    %373 = arith.negf %372 : vector<1x128xf32>
    %374 = math.exp %373 : vector<1x128xf32>
    %cst_226 = arith.constant 1.000000e+00 : f32
    %375 = vector.broadcast %cst_226 : f32 to vector<1x128xf32>
    %376 = arith.addf %375, %374 : vector<1x128xf32>
    %377 = arith.divf %375, %376 : vector<1x128xf32>
    %378 = vector.extract_strided_slice %365 {offsets = [0, 128], sizes = [1, 128], strides = [1, 1]} : vector<1x384xf32> to vector<1x128xf32>
    %379 = vector.extract_strided_slice %369 {offsets = [0, 128], sizes = [1, 128], strides = [1, 1]} : vector<1x384xf32> to vector<1x128xf32>
    %380 = arith.addf %378, %379 : vector<1x128xf32>
    %381 = arith.negf %380 : vector<1x128xf32>
    %382 = math.exp %381 : vector<1x128xf32>
    %cst_227 = arith.constant 1.000000e+00 : f32
    %383 = vector.broadcast %cst_227 : f32 to vector<1x128xf32>
    %384 = arith.addf %383, %382 : vector<1x128xf32>
    %385 = arith.divf %383, %384 : vector<1x128xf32>
    %386 = vector.extract_strided_slice %365 {offsets = [0, 256], sizes = [1, 128], strides = [1, 1]} : vector<1x384xf32> to vector<1x128xf32>
    %387 = vector.extract_strided_slice %369 {offsets = [0, 256], sizes = [1, 128], strides = [1, 1]} : vector<1x384xf32> to vector<1x128xf32>
    %388 = arith.mulf %377, %387 : vector<1x128xf32>
    %389 = arith.addf %386, %388 : vector<1x128xf32>
    %390 = math.tanh %389 : vector<1x128xf32>
    %cst_228 = arith.constant 1.000000e+00 : f32
    %391 = vector.broadcast %cst_228 : f32 to vector<1x128xf32>
    %392 = arith.subf %391, %385 : vector<1x128xf32>
    %393 = arith.mulf %392, %390 : vector<1x128xf32>
    %394 = arith.mulf %385, %323 : vector<1x128xf32>
    %395 = arith.addf %393, %394 : vector<1x128xf32>
    %c0_229 = arith.constant 0 : index
    %c0_230 = arith.constant 0 : index
    %396 = vector.load %arg2[%c0_229, %c0_230] : memref<128x128xf32, #tpu.memory_space<vmem>>, vector<128x128xf32>
    %cst_231 = arith.constant dense<0.000000e+00> : vector<1x128xf32>
    %397 = tpu.matmul %395, %396, %cst_231 {dimension_numbers = #tpu.dot_dimension_numbers<[1], [0], [0], [1], [0, 0, 1, 1], [], []>} : vector<1x128xf32>, vector<128x128xf32>, vector<1x128xf32> -> vector<1x128xf32>
    %c0_232 = arith.constant 0 : index
    %c0_233 = arith.constant 0 : index
    %398 = vector.load %arg3[%c0_232, %c0_233] : memref<1x128xf32, #tpu.memory_space<vmem>>, vector<1x128xf32>
    %399 = arith.addf %397, %398 : vector<1x128xf32>
    %cst_234 = arith.constant dense<0xFF800000> : vector<1xf32>
    %400 = vector.multi_reduction <maximumf>, %399, %cst_234 [1] : vector<1x128xf32> to vector<1xf32>
    %401 = vector.shape_cast %400 : vector<1xf32> to vector<1x1xf32>
    %402 = vector.broadcast %401 : vector<1x1xf32> to vector<1x128xf32>
    %403 = arith.subf %399, %402 : vector<1x128xf32>
    %404 = math.exp %403 : vector<1x128xf32>
    %cst_235 = arith.constant dense<0.000000e+00> : vector<1xf32>
    %405 = vector.multi_reduction <add>, %404, %cst_235 [1] : vector<1x128xf32> to vector<1xf32>
    %406 = vector.shape_cast %405 : vector<1xf32> to vector<1x1xf32>
    %407 = tpu.reciprocal %406 : vector<1x1xf32> -> vector<1x1xf32>
    %408 = vector.broadcast %407 : vector<1x1xf32> to vector<1x128xf32>
    %409 = arith.mulf %404, %408 : vector<1x128xf32>
    %c0_236 = arith.constant 0 : index
    %c0_237 = arith.constant 0 : index
    %410 = vector.load %arg1[%c0_236, %c0_237] : memref<128x128xf32, #tpu.memory_space<vmem>>, vector<128x128xf32>
    %cst_238 = arith.constant dense<0.000000e+00> : vector<1x128xf32>
    %411 = tpu.matmul %409, %410, %cst_238 {dimension_numbers = #tpu.dot_dimension_numbers<[1], [0], [0], [1], [0, 0, 1, 1], [], []>} : vector<1x128xf32>, vector<128x128xf32>, vector<1x128xf32> -> vector<1x128xf32>
    %c0_239 = arith.constant 0 : index
    %c0_240 = arith.constant 0 : index
    %412 = vector.load %arg15[%c0_239, %c0_240] : memref<1x256xf32, #tpu.memory_space<vmem>>, vector<1x128xf32>
    tpu.vector_store %arg15[%c0_239, %c0_240], %395 {strides = array<i32>} : memref<1x256xf32, #tpu.memory_space<vmem>>, vector<1x128xf32>,
    %c0_241 = arith.constant 0 : index
    %c128_242 = arith.constant 128 : index
    %413 = vector.load %arg15[%c0_241, %c128_242] : memref<1x256xf32, #tpu.memory_space<vmem>>, vector<1x128xf32>
    tpu.vector_store %arg15[%c0_241, %c128_242], %411 {strides = array<i32>} : memref<1x256xf32, #tpu.memory_space<vmem>>, vector<1x128xf32>,
    %c0_243 = arith.constant 0 : index
    %c0_244 = arith.constant 0 : index
    %414 = vector.load %arg15[%c0_243, %c0_244] : memref<1x256xf32, #tpu.memory_space<vmem>>, vector<1x256xf32>
    %c0_245 = arith.constant 0 : index
    %c0_246 = arith.constant 0 : index
    %415 = vector.load %arg7[%c0_245, %c0_246] : memref<256x128xf32, #tpu.memory_space<vmem>>, vector<256x128xf32>
    %cst_247 = arith.constant dense<0.000000e+00> : vector<1x128xf32>
    %416 = tpu.matmul %414, %415, %cst_247 {dimension_numbers = #tpu.dot_dimension_numbers<[1], [0], [0], [1], [0, 0, 1, 1], [], []>} : vector<1x256xf32>, vector<256x128xf32>, vector<1x128xf32> -> vector<1x128xf32>
    %c0_248 = arith.constant 0 : index
    %c0_249 = arith.constant 0 : index
    %417 = vector.load %arg8[%c0_248, %c0_249] : memref<1x128xf32, #tpu.memory_space<vmem>>, vector<1x128xf32>
    %418 = arith.addf %416, %417 : vector<1x128xf32>
    %cst_250 = arith.constant dense<0xFF800000> : vector<1xf32>
    %419 = vector.multi_reduction <maximumf>, %418, %cst_250 [1] : vector<1x128xf32> to vector<1xf32>
    %420 = vector.shape_cast %419 : vector<1xf32> to vector<1x1xf32>
    %421 = vector.broadcast %420 : vector<1x1xf32> to vector<1x128xf32>
    %422 = arith.subf %418, %421 : vector<1x128xf32>
    %423 = math.exp %422 : vector<1x128xf32>
    %cst_251 = arith.constant dense<0.000000e+00> : vector<1xf32>
    %424 = vector.multi_reduction <add>, %423, %cst_251 [1] : vector<1x128xf32> to vector<1xf32>
    %425 = vector.shape_cast %424 : vector<1xf32> to vector<1x1xf32>
    %426 = math.log %425 : vector<1x1xf32>
    %427 = arith.addf %420, %426 : vector<1x1xf32>
    %428 = vector.broadcast %427 : vector<1x1xf32> to vector<1x128xf32>
    %429 = arith.subf %418, %428 : vector<1x128xf32>
    %c5_252 = arith.constant 5 : index
    %c0_253 = arith.constant 0 : index
    %430 = vector.load %arg11[%c5_252, %c0_253] : memref<6x128xf32, #tpu.memory_space<vmem>>, vector<1x128xf32>
    tpu.vector_store %arg11[%c5_252, %c0_253], %429 {strides = array<i32>} : memref<6x128xf32, #tpu.memory_space<vmem>>, vector<1x128xf32>,
    %c5_254 = arith.constant 5 : index
    %c0_255 = arith.constant 0 : index
    %431 = vector.load %arg12[%c5_254, %c0_255] : memref<6x128xf32, #tpu.memory_space<vmem>>, vector<1x128xf32>
    tpu.vector_store %arg12[%c5_254, %c0_255], %411 {strides = array<i32>} : memref<6x128xf32, #tpu.memory_space<vmem>>, vector<1x128xf32>,
    %c5_256 = arith.constant 5 : index
    %c0_257 = arith.constant 0 : index
    %432 = vector.load %arg13[%c5_256, %c0_257] : memref<6x128xf32, #tpu.memory_space<vmem>>, vector<1x128xf32>
    tpu.vector_store %arg13[%c5_256, %c0_257], %395 {strides = array<i32>} : memref<6x128xf32, #tpu.memory_space<vmem>>, vector<1x128xf32>,
    %c5_258 = arith.constant 5 : index
    %c0_259 = arith.constant 0 : index
    %433 = vector.load %arg14[%c5_258, %c0_259] : memref<6x128xf32, #tpu.memory_space<vmem>>, vector<1x128xf32>
    tpu.vector_store %arg14[%c5_258, %c0_259], %409 {strides = array<i32>} : memref<6x128xf32, #tpu.memory_space<vmem>>, vector<1x128xf32>,
    return
  }
}

</mosaic_0001>

<llo_original>
// kernel: attn_decoder_decode.1
$region0: #{attn_decoder_decode.1}
  #allocation0 [shape = 'u32[]', space=smem, size = 0x4, offset = 0x4, fixed_abs, tag = 'smem constant byte address 0x4 - core index']
  #allocation1 [shape = 'u32[144,128]{1,0:T(1,128)}', space=vmem, size = 0x12000, scoped, tag = 'internal scratch']
  #allocation2 [shape = 'f32[1,256]{1,0:T(1,128)}', space=vmem, size = 0x400, scoped, tag = 'scratch operand']
  %s0 = inlined_call_operand.vmem [shape: f32[6,384], index: 0, kind: input, shape index: {}]
  %s1 = inlined_call_operand.vmem [shape: f32[128,128], index: 1, kind: input, shape index: {}]
  %s2 = inlined_call_operand.vmem [shape: f32[128,128], index: 2, kind: input, shape index: {}]
  %s3 = inlined_call_operand.vmem [shape: f32[1,128], index: 3, kind: input, shape index: {}]
  %s4 = inlined_call_operand.vmem [shape: f32[128,384], index: 4, kind: input, shape index: {}]
  %s5 = inlined_call_operand.vmem [shape: f32[128,384], index: 5, kind: input, shape index: {}]
  %s6 = inlined_call_operand.vmem [shape: f32[1,384], index: 6, kind: input, shape index: {}]
  %s7 = inlined_call_operand.vmem [shape: f32[256,128], index: 7, kind: input, shape index: {}]
  %s8 = inlined_call_operand.vmem [shape: f32[1,128], index: 8, kind: input, shape index: {}]
  %s9 = inlined_call_operand.vmem [shape: f32[1,128], index: 9, kind: input, shape index: {}]
  %s10 = inlined_call_operand.vmem [shape: f32[1,128], index: 10, kind: input, shape index: {}]
  %s11 = inlined_call_operand.hbm [shape: f32[6,128], index: 11, kind: output, shape index: {0}]
  %s12 = inlined_call_operand.hbm [shape: f32[6,128], index: 12, kind: output, shape index: {1}]
  %s13 = inlined_call_operand.hbm [shape: f32[6,128], index: 13, kind: output, shape index: {2}]
  %s14 = inlined_call_operand.hbm [shape: f32[6,128], index: 14, kind: output, shape index: {3}]
  %15 = xla_tuple %s11, %s12, %s13, %s14
  %s16 = sld [smem:[#allocation0]]
  $region78: #{attn_decoder_decode.1} parent=0
    _
  %s18 = ssub.s32 1, %s16
  %s19 = scalar_select 0, %s18, %s16
  $region1: #{attn_decoder_decode.1} parent=0
    #allocation3 [shape = 'u8[4096]{0}', space=vmem, size = 0x1000, scoped, tag = 'output window, operand 0, single buffered']
    #allocation4 [shape = 's32[1]{0}', space=sflag, size = 0x4, scoped, tag = 'scoped memory for attn_decoder_decode.1']
    #allocation5 [shape = 'u8[4096]{0}', space=vmem, size = 0x1000, scoped, tag = 'output window, operand 1, single buffered']
    #allocation6 [shape = 's32[1]{0}', space=sflag, size = 0x4, scoped, tag = 'scoped memory for attn_decoder_decode.1']
    #allocation7 [shape = 'u8[4096]{0}', space=vmem, size = 0x1000, scoped, tag = 'output window, operand 2, single buffered']
    #allocation8 [shape = 'u8[4096]{0}', space=vmem, size = 0x1000, scoped, tag = 'output window, operand 3, single buffered']
    #allocation9 [shape = 's32[1]{0}', space=sflag, size = 0x4, scoped, tag = 'scoped memory for attn_decoder_decode.1']
    %20 = vsyncpa [#allocation4], 0
    %21 = vsyncpa [#allocation6], 0
    %22 = vsyncpa [#allocation9], 0
    // Predicated region
    $region2: #{attn_decoder_decode.1} parent=1 // pred_check
      _
    $region3: #{attn_decoder_decode.1} parent=1 // pred_check_branch
      %24 = sbr.rel (0) target = $region5
    $region4: #{attn_decoder_decode.1} parent=1 // pred_region
      _
    $region5: #{attn_decoder_decode.1} parent=1 // pred_fallthru
      _
    // Predicated region
    $region6: #{attn_decoder_decode.1} parent=1 // pred_check
      _
    $region7: #{attn_decoder_decode.1} parent=1 // pred_check_branch
      %26 = sbr.rel (0) target = $region9
    $region8: #{attn_decoder_decode.1} parent=1 // pred_region
      _
    $region9: #{attn_decoder_decode.1} parent=1 // pred_fallthru
      _
    // Predicated region
    $region10: #{attn_decoder_decode.1} parent=1 // pred_check
      _
    $region11: #{attn_decoder_decode.1} parent=1 // pred_check_branch
      %28 = sbr.rel (0) target = $region13
    $region12: #{attn_decoder_decode.1} parent=1 // pred_region
      _
    $region13: #{attn_decoder_decode.1} parent=1 // pred_fallthru
      _
    // Predicated region
    $region14: #{attn_decoder_decode.1} parent=1 // pred_check
      _
    $region15: #{attn_decoder_decode.1} parent=1 // pred_check_branch
      %30 = sbr.rel (0) target = $region17
    $region16: #{attn_decoder_decode.1} parent=1 // pred_region
      _
    $region17: #{attn_decoder_decode.1} parent=1 // pred_fallthru
      _
    // Predicated region
    $region18: #{attn_decoder_decode.1} parent=1 // pred_check
      _
    $region19: #{attn_decoder_decode.1} parent=1 // pred_check_branch
      %32 = sbr.rel (0) target = $region21
    $region20: #{attn_decoder_decode.1} parent=1 // pred_region
      _
    $region21: #{attn_decoder_decode.1} parent=1 // pred_fallthru
      _
    // Predicated region
    $region22: #{attn_decoder_decode.1} parent=1 // pred_check
      _
    $region23: #{attn_decoder_decode.1} parent=1 // pred_check_branch
      %34 = sbr.rel (0) target = $region25
    $region24: #{attn_decoder_decode.1} parent=1 // pred_region
      _
    $region25: #{attn_decoder_decode.1} parent=1 // pred_fallthru
      _
    // Predicated region
    $region26: #{attn_decoder_decode.1} parent=1 // pred_check
      _
    $region27: #{attn_decoder_decode.1} parent=1 // pred_check_branch
      %36 = sbr.rel (0) target = $region29
    $region28: #{attn_decoder_decode.1} parent=1 // pred_region
      _
    $region29: #{attn_decoder_decode.1} parent=1 // pred_fallthru
      _
    // Predicated region
    $region30: #{attn_decoder_decode.1} parent=1 // pred_check
      _
    $region31: #{attn_decoder_decode.1} parent=1 // pred_check_branch
      %38 = sbr.rel (0) target = $region33
    $region32: #{attn_decoder_decode.1} parent=1 // pred_region
      _
    $region33: #{attn_decoder_decode.1} parent=1 // pred_fallthru
      _
    // Predicated region
    $region34: #{attn_decoder_decode.1} parent=1 // pred_check
      _
    $region35: #{attn_decoder_decode.1} parent=1 // pred_check_branch
      %40 = sbr.rel (0) target = $region37
    $region36: #{attn_decoder_decode.1} parent=1 // pred_region
      _
    $region37: #{attn_decoder_decode.1} parent=1 // pred_fallthru
      _
    // Predicated region
    $region38: #{attn_decoder_decode.1} parent=1 // pred_check
      _
    $region39: #{attn_decoder_decode.1} parent=1 // pred_check_branch
      %42 = sbr.rel (0) target = $region41
    $region40: #{attn_decoder_decode.1} parent=1 // pred_region
      _
    $region41: #{attn_decoder_decode.1} parent=1 // pred_fallthru
      _
    // Predicated region
    $region42: #{attn_decoder_decode.1} parent=1 // pred_check
      _
    $region43: #{attn_decoder_decode.1} parent=1 // pred_check_branch
      %44 = sbr.rel (0) target = $region45
    $region44: #{attn_decoder_decode.1} parent=1 // pred_region
      _
    $region45: #{attn_decoder_decode.1} parent=1 // pred_fallthru
      _
    %v45 = vld [vmem:[%s10] sm:$0x1]
    %v46 = vld [vmem:[%s9] sm:$0x1]
    %v47 = vld [vmem:[%s0] ss:$8 sm:$0x7]
    %v48 = vld [vmem:[%s4] sm:$0xff]
    %v49 = vld [vmem:[%s4 + $0x8] sm:$0xff]
    %v50 = vld [vmem:[%s4 + $0x10] sm:$0xff]
    %v51 = vld [vmem:[%s4 + $0x18] sm:$0xff]
    %v52 = vld [vmem:[%s4 + $0x20] sm:$0xff]
    %v53 = vld [vmem:[%s4 + $0x28] sm:$0xff]
    %v54 = vld [vmem:[%s4 + $0x30] sm:$0xff]
    %v55 = vld [vmem:[%s4 + $0x38] sm:$0xff]
    %v56 = vld [vmem:[%s4 + $0x40] sm:$0xff]
    %v57 = vld [vmem:[%s4 + $0x48] sm:$0xff]
    %v58 = vld [vmem:[%s4 + $0x50] sm:$0xff]
    %v59 = vld [vmem:[%s4 + $0x58] sm:$0xff]
    %v60 = vld [vmem:[%s4 + $0x60] sm:$0xff]
    %v61 = vld [vmem:[%s4 + $0x68] sm:$0xff]
    %v62 = vld [vmem:[%s4 + $0x70] sm:$0xff]
    %v63 = vld [vmem:[%s4 + $0x78] sm:$0xff]
    %v64 = vld [vmem:[%s4 + $0x80] sm:$0xff]
    %v65 = vld [vmem:[%s4 + $0x88] sm:$0xff]
    %v66 = vld [vmem:[%s4 + $0x90] sm:$0xff]
    %v67 = vld [vmem:[%s4 + $0x98] sm:$0xff]
    %v68 = vld [vmem:[%s4 + $0xa0] sm:$0xff]
    %v69 = vld [vmem:[%s4 + $0xa8] sm:$0xff]
    %v70 = vld [vmem:[%s4 + $0xb0] sm:$0xff]
    %v71 = vld [vmem:[%s4 + $0xb8] sm:$0xff]
    %v72 = vld [vmem:[%s4 + $0xc0] sm:$0xff]
    %v73 = vld [vmem:[%s4 + $0xc8] sm:$0xff]
    %v74 = vld [vmem:[%s4 + $0xd0] sm:$0xff]
    %v75 = vld [vmem:[%s4 + $0xd8] sm:$0xff]
    %v76 = vld [vmem:[%s4 + $0xe0] sm:$0xff]
    %v77 = vld [vmem:[%s4 + $0xe8] sm:$0xff]
    %v78 = vld [vmem:[%s4 + $0xf0] sm:$0xff]
    %v79 = vld [vmem:[%s4 + $0xf8] sm:$0xff]
    %v80 = vld [vmem:[%s4 + $0x100] sm:$0xff]
    %v81 = vld [vmem:[%s4 + $0x108] sm:$0xff]
    %v82 = vld [vmem:[%s4 + $0x110] sm:$0xff]
    %v83 = vld [vmem:[%s4 + $0x118] sm:$0xff]
    %v84 = vld [vmem:[%s4 + $0x120] sm:$0xff]
    %v85 = vld [vmem:[%s4 + $0x128] sm:$0xff]
    %v86 = vld [vmem:[%s4 + $0x130] sm:$0xff]
    %v87 = vld [vmem:[%s4 + $0x138] sm:$0xff]
    %v88 = vld [vmem:[%s4 + $0x140] sm:$0xff]
    %v89 = vld [vmem:[%s4 + $0x148] sm:$0xff]
    %v90 = vld [vmem:[%s4 + $0x150] sm:$0xff]
    %v91 = vld [vmem:[%s4 + $0x158] sm:$0xff]
    %v92 = vld [vmem:[%s4 + $0x160] sm:$0xff]
    %v93 = vld [vmem:[%s4 + $0x168] sm:$0xff]
    %v94 = vld [vmem:[%s4 + $0x170] sm:$0xff]
    %v95 = vld [vmem:[%s4 + $0x178] sm:$0xff]
    %96 = vmatprep.subr.mxu0 %v94
    %97 = vmatpush1.msra.mxu0 %v93
    %98 = vmatprep.subr.mxu0 %v91
    %99 = vmatpush1.msra.mxu0 %v90
    %100 = vmatprep.subr.mxu0 %v88
    %101 = vmatpush1.msra.mxu0 %v87
    %102 = vmatprep.subr.mxu0 %v85
    %103 = vmatpush1.msra.mxu0 %v84
    %104 = vmatprep.subr.mxu0 %v82
    %105 = vmatpush1.msra.mxu0 %v81
    %106 = vmatprep.subr.mxu0 %v79
    %107 = vmatpush1.msra.mxu0 %v78
    %108 = vmatprep.subr.mxu0 %v76
    %109 = vmatpush1.msra.mxu0 %v75
    %110 = vmatprep.subr.mxu0 %v73
    %111 = vmatpush1.msra.mxu0 %v72
    %112 = vmatprep.subr.mxu0 %v70
    %113 = vmatpush1.msra.mxu0 %v69
    %114 = vmatprep.subr.mxu0 %v67
    %115 = vmatpush1.msra.mxu0 %v66
    %116 = vmatprep.subr.mxu0 %v64
    %117 = vmatpush1.msra.mxu0 %v63
    %118 = vmatprep.subr.mxu0 %v61
    %119 = vmatpush1.msra.mxu0 %v60
    %120 = vmatprep.subr.mxu0 %v58
    %121 = vmatpush1.msra.mxu0 %v57
    %122 = vmatprep.subr.mxu0 %v55
    %123 = vmatpush1.msra.mxu0 %v54
    %124 = vmatprep.subr.mxu0 %v52
    %125 = vmatpush1.msra.mxu0 %v51
    %126 = vmatprep.subr.mxu0 %v49
    %127 = vmatpush1.msra.mxu0 %v48
    %128 = vmatprep.subr.mxu0 0.0
    %129 = vmatpush2.msra.mxu0 0.0
    %130 = vmatprep.subr.mxu0 0.0
    %131 = vmatpush2.msra.mxu0 0.0
    %132 = vmatprep.subr.mxu0 0.0
    %133 = vmatpush2.msra.mxu0 0.0
    %134 = vmatprep.subr.mxu0 0.0
    %135 = vmatpush2.msra.mxu0 0.0
    %136 = vmatprep.subr.mxu0 0.0
    %137 = vmatpush2.msra.mxu0 0.0
    %138 = vmatprep.subr.mxu0 0.0
    %139 = vmatpush2.msra.mxu0 0.0
    %140 = vmatprep.subr.mxu0 0.0
    %141 = vmatpush2.msra.mxu0 0.0
    %142 = vmatprep.subr.mxu0 0.0
    %143 = vmatpush2.msra.mxu0 0.0
    %144 = vmatprep.subr.mxu0 0.0
    %145 = vmatpush2.msra.mxu0 0.0
    %146 = vmatprep.subr.mxu0 0.0
    %147 = vmatpush2.msra.mxu0 0.0
    %148 = vmatprep.subr.mxu0 0.0
    %149 = vmatpush2.msra.mxu0 0.0
    %150 = vmatprep.subr.mxu0 0.0
    %151 = vmatpush2.msra.mxu0 0.0
    %152 = vmatprep.subr.mxu0 0.0
    %153 = vmatpush2.msra.mxu0 0.0
    %154 = vmatprep.subr.mxu0 0.0
    %155 = vmatpush2.msra.mxu0 0.0
    %156 = vmatprep.subr.mxu0 0.0
    %157 = vmatpush2.msra.mxu0 0.0
    %158 = vmatprep.subr.mxu0 0.0
    %159 = vmatpush2.msra.mxu0 0.0
    %160 = vmatprep.mubr.f32.mxu0 0.0
    %161 = vmatmul.mubr.f32.gmra.mxu0 %v46
    %v162 = vpop.f32.mrf.mxu0
    %v163 = vadd.f32 0.0, %v162
    %v164 = vpop.f32.mrf.mxu0
    %v165 = vadd.f32 0.0, %v164
    %166 = vdwg.mxu0
    %167 = vmatprep.subr.mxu0 0.0
    %168 = vmatpush1.msra.mxu0 %v95
    %169 = vmatprep.subr.mxu0 0.0
    %170 = vmatpush1.msra.mxu0 %v92
    %171 = vmatprep.subr.mxu0 0.0
    %172 = vmatpush1.msra.mxu0 %v89
    %173 = vmatprep.subr.mxu0 0.0
    %174 = vmatpush1.msra.mxu0 %v86
    %175 = vmatprep.subr.mxu0 0.0
    %176 = vmatpush1.msra.mxu0 %v83
    %177 = vmatprep.subr.mxu0 0.0
    %178 = vmatpush1.msra.mxu0 %v80
    %179 = vmatprep.subr.mxu0 0.0
    %180 = vmatpush1.msra.mxu0 %v77
    %181 = vmatprep.subr.mxu0 0.0
    %182 = vmatpush1.msra.mxu0 %v74
    %183 = vmatprep.subr.mxu0 0.0
    %184 = vmatpush1.msra.mxu0 %v71
    %185 = vmatprep.subr.mxu0 0.0
    %186 = vmatpush1.msra.mxu0 %v68
    %187 = vmatprep.subr.mxu0 0.0
    %188 = vmatpush1.msra.mxu0 %v65
    %189 = vmatprep.subr.mxu0 0.0
    %190 = vmatpush1.msra.mxu0 %v62
    %191 = vmatprep.subr.mxu0 0.0
    %192 = vmatpush1.msra.mxu0 %v59
    %193 = vmatprep.subr.mxu0 0.0
    %194 = vmatpush1.msra.mxu0 %v56
    %195 = vmatprep.subr.mxu0 0.0
    %196 = vmatpush1.msra.mxu0 %v53
    %197 = vmatprep.subr.mxu0 0.0
    %198 = vmatpush1.msra.mxu0 %v50
    %199 = vmatprep.subr.mxu0 0.0
    %200 = vmatpush2.msra.mxu0 0.0
    %201 = vmatprep.subr.mxu0 0.0
    %202 = vmatpush2.msra.mxu0 0.0
    %203 = vmatprep.subr.mxu0 0.0
    %204 = vmatpush2.msra.mxu0 0.0
    %205 = vmatprep.subr.mxu0 0.0
    %206 = vmatpush2.msra.mxu0 0.0
    %207 = vmatprep.subr.mxu0 0.0
    %208 = vmatpush2.msra.mxu0 0.0
    %209 = vmatprep.subr.mxu0 0.0
    %210 = vmatpush2.msra.mxu0 0.0
    %211 = vmatprep.subr.mxu0 0.0
    %212 = vmatpush2.msra.mxu0 0.0
    %213 = vmatprep.subr.mxu0 0.0
    %214 = vmatpush2.msra.mxu0 0.0
    %215 = vmatprep.subr.mxu0 0.0
    %216 = vmatpush2.msra.mxu0 0.0
    %217 = vmatprep.subr.mxu0 0.0
    %218 = vmatpush2.msra.mxu0 0.0
    %219 = vmatprep.subr.mxu0 0.0
    %220 = vmatpush2.msra.mxu0 0.0
    %221 = vmatprep.subr.mxu0 0.0
    %222 = vmatpush2.msra.mxu0 0.0
    %223 = vmatprep.subr.mxu0 0.0
    %224 = vmatpush2.msra.mxu0 0.0
    %225 = vmatprep.subr.mxu0 0.0
    %226 = vmatpush2.msra.mxu0 0.0
    %227 = vmatprep.subr.mxu0 0.0
    %228 = vmatpush2.msra.mxu0 0.0
    %229 = vmatprep.subr.mxu0 0.0
    %230 = vmatpush2.msra.mxu0 0.0
    %231 = vmatprep.mubr.f32.mxu0 0.0
    %232 = vmatmul.mubr.f32.gmra.mxu0 %v46
    %v233 = vpop.f32.mrf.mxu0
    %v234 = vadd.f32 0.0, %v233
    %v235 = vpop.f32.mrf.mxu0
    %236 = vdwg.mxu0
    %v240 = vcombine.low %v163, %v165
    %v242 = vunpack.c.l.s4 1966171168
    %v243 = vunpack.c.0.s8 %v242
    %v244 = vlaneseq
    %v245 = vshrl.u32 %v244, 7
    %v246 = vsub.s32 %v243, %v245
    %v247 = vrot.slane %v240, %v246
    %v249 = vunpack.c.l.s4 1966171168
    %v250 = vunpack.c.0.s8 %v249
    %v251 = vlaneseq
    %v252 = vshrl.u32 %v251, 7
    %v253 = vsub.s32 %v250, %v252
    %v254 = vrot.slane %v234, %v253
    %v255 = vcombine.low %v247, %v254
    %v257 = vunpack.c.l.s4 1966171168
    %v258 = vunpack.c.0.s8 %v257
    %v259 = vlaneseq
    %v260 = vshrl.u32 %v259, 7
    %v261 = vsub.s32 %v258, %v260
    %v262 = vrot.slane %v255, %v261
    %v264 = vadd.f32 %v47, %v262
    %v265 = vld [vmem:[%s5] sm:$0xff]
    %v266 = vld [vmem:[%s5 + $0x8] sm:$0xff]
    %v267 = vld [vmem:[%s5 + $0x10] sm:$0xff]
    %v268 = vld [vmem:[%s5 + $0x18] sm:$0xff]
    %v269 = vld [vmem:[%s5 + $0x20] sm:$0xff]
    %v270 = vld [vmem:[%s5 + $0x28] sm:$0xff]
    %v271 = vld [vmem:[%s5 + $0x30] sm:$0xff]
    %v272 = vld [vmem:[%s5 + $0x38] sm:$0xff]
    %v273 = vld [vmem:[%s5 + $0x40] sm:$0xff]
    %v274 = vld [vmem:[%s5 + $0x48] sm:$0xff]
    %v275 = vld [vmem:[%s5 + $0x50] sm:$0xff]
    %v276 = vld [vmem:[%s5 + $0x58] sm:$0xff]
    %v277 = vld [vmem:[%s5 + $0x60] sm:$0xff]
    %v278 = vld [vmem:[%s5 + $0x68] sm:$0xff]
    %v279 = vld [vmem:[%s5 + $0x70] sm:$0xff]
    %v280 = vld [vmem:[%s5 + $0x78] sm:$0xff]
    %v281 = vld [vmem:[%s5 + $0x80] sm:$0xff]
    %v282 = vld [vmem:[%s5 + $0x88] sm:$0xff]
    %v283 = vld [vmem:[%s5 + $0x90] sm:$0xff]
    %v284 = vld [vmem:[%s5 + $0x98] sm:$0xff]
    %v285 = vld [vmem:[%s5 + $0xa0] sm:$0xff]
    %v286 = vld [vmem:[%s5 + $0xa8] sm:$0xff]
    %v287 = vld [vmem:[%s5 + $0xb0] sm:$0xff]
    %v288 = vld [vmem:[%s5 + $0xb8] sm:$0xff]
    %v289 = vld [vmem:[%s5 + $0xc0] sm:$0xff]
    %v290 = vld [vmem:[%s5 + $0xc8] sm:$0xff]
    %v291 = vld [vmem:[%s5 + $0xd0] sm:$0xff]
    %v292 = vld [vmem:[%s5 + $0xd8] sm:$0xff]
    %v293 = vld [vmem:[%s5 + $0xe0] sm:$0xff]
    %v294 = vld [vmem:[%s5 + $0xe8] sm:$0xff]
    %v295 = vld [vmem:[%s5 + $0xf0] sm:$0xff]
    %v296 = vld [vmem:[%s5 + $0xf8] sm:$0xff]
    %v297 = vld [vmem:[%s5 + $0x100] sm:$0xff]
    %v298 = vld [vmem:[%s5 + $0x108] sm:$0xff]
    %v299 = vld [vmem:[%s5 + $0x110] sm:$0xff]
    %v300 = vld [vmem:[%s5 + $0x118] sm:$0xff]
    %v301 = vld [vmem:[%s5 + $0x120] sm:$0xff]
    %v302 = vld [vmem:[%s5 + $0x128] sm:$0xff]
    %v303 = vld [vmem:[%s5 + $0x130] sm:$0xff]
    %v304 = vld [vmem:[%s5 + $0x138] sm:$0xff]
    %v305 = vld [vmem:[%s5 + $0x140] sm:$0xff]
    %v306 = vld [vmem:[%s5 + $0x148] sm:$0xff]
    %v307 = vld [vmem:[%s5 + $0x150] sm:$0xff]
    %v308 = vld [vmem:[%s5 + $0x158] sm:$0xff]
    %v309 = vld [vmem:[%s5 + $0x160] sm:$0xff]
    %v310 = vld [vmem:[%s5 + $0x168] sm:$0xff]
    %v311 = vld [vmem:[%s5 + $0x170] sm:$0xff]
    %v312 = vld [vmem:[%s5 + $0x178] sm:$0xff]
    %v313 = vld [vmem:[%s6] sm:$0x7]
    %v315 = vlaneseq
    %v316 = vshrl.u32 %v315, 7
    %v317 = vsub.s32 0, %v316
    %v318 = vrot.slane %v313, %v317
    %v319 = vlaneseq
    %v320 = vshrl.u32 %v319, 7
    %v321 = vsub.s32 1, %v320
    %v322 = vrot.slane %v313, %v321
    %v323 = vlaneseq
    %v324 = vshrl.u32 %v323, 7
    %v325 = vsub.s32 2, %v324
    %v326 = vrot.slane %v313, %v325
    %330 = vmatprep.subr.mxu0 %v311
    %331 = vmatpush1.msra.mxu0 %v310
    %332 = vmatprep.subr.mxu0 %v308
    %333 = vmatpush1.msra.mxu0 %v307
    %334 = vmatprep.subr.mxu0 %v305
    %335 = vmatpush1.msra.mxu0 %v304
    %336 = vmatprep.subr.mxu0 %v302
    %337 = vmatpush1.msra.mxu0 %v301
    %338 = vmatprep.subr.mxu0 %v299
    %339 = vmatpush1.msra.mxu0 %v298
    %340 = vmatprep.subr.mxu0 %v296
    %341 = vmatpush1.msra.mxu0 %v295
    %342 = vmatprep.subr.mxu0 %v293
    %343 = vmatpush1.msra.mxu0 %v292
    %344 = vmatprep.subr.mxu0 %v290
    %345 = vmatpush1.msra.mxu0 %v289
    %346 = vmatprep.subr.mxu0 %v287
    %347 = vmatpush1.msra.mxu0 %v286
    %348 = vmatprep.subr.mxu0 %v284
    %349 = vmatpush1.msra.mxu0 %v283
    %350 = vmatprep.subr.mxu0 %v281
    %351 = vmatpush1.msra.mxu0 %v280
    %352 = vmatprep.subr.mxu0 %v278
    %353 = vmatpush1.msra.mxu0 %v277
    %354 = vmatprep.subr.mxu0 %v275
    %355 = vmatpush1.msra.mxu0 %v274
    %356 = vmatprep.subr.mxu0 %v272
    %357 = vmatpush1.msra.mxu0 %v271
    %358 = vmatprep.subr.mxu0 %v269
    %359 = vmatpush1.msra.mxu0 %v268
    %360 = vmatprep.subr.mxu0 %v266
    %361 = vmatpush1.msra.mxu0 %v265
    %362 = vmatprep.subr.mxu0 0.0
    %363 = vmatpush2.msra.mxu0 0.0
    %364 = vmatprep.subr.mxu0 0.0
    %365 = vmatpush2.msra.mxu0 0.0
    %366 = vmatprep.subr.mxu0 0.0
    %367 = vmatpush2.msra.mxu0 0.0
    %368 = vmatprep.subr.mxu0 0.0
    %369 = vmatpush2.msra.mxu0 0.0
    %370 = vmatprep.subr.mxu0 0.0
    %371 = vmatpush2.msra.mxu0 0.0
    %372 = vmatprep.subr.mxu0 0.0
    %373 = vmatpush2.msra.mxu0 0.0
    %374 = vmatprep.subr.mxu0 0.0
    %375 = vmatpush2.msra.mxu0 0.0
    %376 = vmatprep.subr.mxu0 0.0
    %377 = vmatpush2.msra.mxu0 0.0
    %378 = vmatprep.subr.mxu0 0.0
    %379 = vmatpush2.msra.mxu0 0.0
    %380 = vmatprep.subr.mxu0 0.0
    %381 = vmatpush2.msra.mxu0 0.0
    %382 = vmatprep.subr.mxu0 0.0
    %383 = vmatpush2.msra.mxu0 0.0
    %384 = vmatprep.subr.mxu0 0.0
    %385 = vmatpush2.msra.mxu0 0.0
    %386 = vmatprep.subr.mxu0 0.0
    %387 = vmatpush2.msra.mxu0 0.0
    %388 = vmatprep.subr.mxu0 0.0
    %389 = vmatpush2.msra.mxu0 0.0
    %390 = vmatprep.subr.mxu0 0.0
    %391 = vmatpush2.msra.mxu0 0.0
    %392 = vmatprep.subr.mxu0 0.0
    %393 = vmatpush2.msra.mxu0 0.0
    %394 = vmatprep.mubr.f32.mxu0 0.0
    %395 = vmatmul.mubr.f32.gmra.mxu0 %v45
    %v396 = vpop.f32.mrf.mxu0
    %v397 = vadd.f32 %v318, %v396
    %v398 = vpop.f32.mrf.mxu0
    %v399 = vadd.f32 %v322, %v398
    %400 = vdwg.mxu0
    %401 = vmatprep.subr.mxu0 0.0
    %402 = vmatpush1.msra.mxu0 %v312
    %403 = vmatprep.subr.mxu0 0.0
    %404 = vmatpush1.msra.mxu0 %v309
    %405 = vmatprep.subr.mxu0 0.0
    %406 = vmatpush1.msra.mxu0 %v306
    %407 = vmatprep.subr.mxu0 0.0
    %408 = vmatpush1.msra.mxu0 %v303
    %409 = vmatprep.subr.mxu0 0.0
    %410 = vmatpush1.msra.mxu0 %v300
    %411 = vmatprep.subr.mxu0 0.0
    %412 = vmatpush1.msra.mxu0 %v297
    %413 = vmatprep.subr.mxu0 0.0
    %414 = vmatpush1.msra.mxu0 %v294
    %415 = vmatprep.subr.mxu0 0.0
    %416 = vmatpush1.msra.mxu0 %v291
    %417 = vmatprep.subr.mxu0 0.0
    %418 = vmatpush1.msra.mxu0 %v288
    %419 = vmatprep.subr.mxu0 0.0
    %420 = vmatpush1.msra.mxu0 %v285
    %421 = vmatprep.subr.mxu0 0.0
    %422 = vmatpush1.msra.mxu0 %v282
    %423 = vmatprep.subr.mxu0 0.0
    %424 = vmatpush1.msra.mxu0 %v279
    %425 = vmatprep.subr.mxu0 0.0
    %426 = vmatpush1.msra.mxu0 %v276
    %427 = vmatprep.subr.mxu0 0.0
    %428 = vmatpush1.msra.mxu0 %v273
    %429 = vmatprep.subr.mxu0 0.0
    %430 = vmatpush1.msra.mxu0 %v270
    %431 = vmatprep.subr.mxu0 0.0
    %432 = vmatpush1.msra.mxu0 %v267
    %433 = vmatprep.subr.mxu0 0.0
    %434 = vmatpush2.msra.mxu0 0.0
    %435 = vmatprep.subr.mxu0 0.0
    %436 = vmatpush2.msra.mxu0 0.0
    %437 = vmatprep.subr.mxu0 0.0
    %438 = vmatpush2.msra.mxu0 0.0
    %439 = vmatprep.subr.mxu0 0.0
    %440 = vmatpush2.msra.mxu0 0.0
    %441 = vmatprep.subr.mxu0 0.0
    %442 = vmatpush2.msra.mxu0 0.0
    %443 = vmatprep.subr.mxu0 0.0
    %444 = vmatpush2.msra.mxu0 0.0
    %445 = vmatprep.subr.mxu0 0.0
    %446 = vmatpush2.msra.mxu0 0.0
    %447 = vmatprep.subr.mxu0 0.0
    %448 = vmatpush2.msra.mxu0 0.0
    %449 = vmatprep.subr.mxu0 0.0
    %450 = vmatpush2.msra.mxu0 0.0
    %451 = vmatprep.subr.mxu0 0.0
    %452 = vmatpush2.msra.mxu0 0.0
    %453 = vmatprep.subr.mxu0 0.0
    %454 = vmatpush2.msra.mxu0 0.0
    %455 = vmatprep.subr.mxu0 0.0
    %456 = vmatpush2.msra.mxu0 0.0
    %457 = vmatprep.subr.mxu0 0.0
    %458 = vmatpush2.msra.mxu0 0.0
    %459 = vmatprep.subr.mxu0 0.0
    %460 = vmatpush2.msra.mxu0 0.0
    %461 = vmatprep.subr.mxu0 0.0
    %462 = vmatpush2.msra.mxu0 0.0
    %463 = vmatprep.subr.mxu0 0.0
    %464 = vmatpush2.msra.mxu0 0.0
    %465 = vmatprep.mubr.f32.mxu0 0.0
    %466 = vmatmul.mubr.f32.gmra.mxu0 %v45
    %v467 = vpop.f32.mrf.mxu0
    %v468 = vadd.f32 %v326, %v467
    %v469 = vpop.f32.mrf.mxu0
    %470 = vdwg.mxu0
    %v471 = vadd.f32 %v264, %v397
    %v472 = vxor.u32 %v471, 2147483648
    %v473 = vmul.f32 %v472, 1.442695
    %v474 = vpow.pop %v473
    %v475 = vadd.f32 %v474, 1.0
    %v476 = vrcp.pop %v475
    %v477 = vmul.f32 1.0, %v476
    %v479 = vrot.slane %v264, 1
    %v481 = vadd.f32 %v479, %v399
    %v482 = vxor.u32 %v481, 2147483648
    %v483 = vmul.f32 %v482, 1.442695
    %v484 = vpow.pop %v483
    %v485 = vadd.f32 %v484, 1.0
    %v486 = vrcp.pop %v485
    %v487 = vmul.f32 1.0, %v486
    %v488 = vmul.f32 %v477, %v468
    %v489 = vrot.slane %v264, 2
    %v491 = vadd.f32 %v489, %v488
    %v492 = vtanh.pop %v491
    %v493 = vsub.f32 1.0, %v487
    %v494 = vmul.f32 %v493, %v492
    %v495 = vmul.f32 %v487, %v45
    %v496 = vadd.f32 %v494, %v495
    %v497 = vld [vmem:[%s2] sm:$0xff]
    %v498 = vld [vmem:[%s2 + $0x8] sm:$0xff]
    %v499 = vld [vmem:[%s2 + $0x10] sm:$0xff]
    %v500 = vld [vmem:[%s2 + $0x18] sm:$0xff]
    %v501 = vld [vmem:[%s2 + $0x20] sm:$0xff]
    %v502 = vld [vmem:[%s2 + $0x28] sm:$0xff]
    %v503 = vld [vmem:[%s2 + $0x30] sm:$0xff]
    %v504 = vld [vmem:[%s2 + $0x38] sm:$0xff]
    %v505 = vld [vmem:[%s2 + $0x40] sm:$0xff]
    %v506 = vld [vmem:[%s2 + $0x48] sm:$0xff]
    %v507 = vld [vmem:[%s2 + $0x50] sm:$0xff]
    %v508 = vld [vmem:[%s2 + $0x58] sm:$0xff]
    %v509 = vld [vmem:[%s2 + $0x60] sm:$0xff]
    %v510 = vld [vmem:[%s2 + $0x68] sm:$0xff]
    %v511 = vld [vmem:[%s2 + $0x70] sm:$0xff]
    %v512 = vld [vmem:[%s2 + $0x78] sm:$0xff]
    %v513 = vld [vmem:[%s3] sm:$0x1]
    %514 = vmatprep.subr.mxu0 0.0
    %515 = vmatpush1.msra.mxu0 %v512
    %516 = vmatprep.subr.mxu0 0.0
    %517 = vmatpush1.msra.mxu0 %v511
    %518 = vmatprep.subr.mxu0 0.0
    %519 = vmatpush1.msra.mxu0 %v510
    %520 = vmatprep.subr.mxu0 0.0
    %521 = vmatpush1.msra.mxu0 %v509
    %522 = vmatprep.subr.mxu0 0.0
    %523 = vmatpush1.msra.mxu0 %v508
    %524 = vmatprep.subr.mxu0 0.0
    %525 = vmatpush1.msra.mxu0 %v507
    %526 = vmatprep.subr.mxu0 0.0
    %527 = vmatpush1.msra.mxu0 %v506
    %528 = vmatprep.subr.mxu0 0.0
    %529 = vmatpush1.msra.mxu0 %v505
    %530 = vmatprep.subr.mxu0 0.0
    %531 = vmatpush1.msra.mxu0 %v504
    %532 = vmatprep.subr.mxu0 0.0
    %533 = vmatpush1.msra.mxu0 %v503
    %534 = vmatprep.subr.mxu0 0.0
    %535 = vmatpush1.msra.mxu0 %v502
    %536 = vmatprep.subr.mxu0 0.0
    %537 = vmatpush1.msra.mxu0 %v501
    %538 = vmatprep.subr.mxu0 0.0
    %539 = vmatpush1.msra.mxu0 %v500
    %540 = vmatprep.subr.mxu0 0.0
    %541 = vmatpush1.msra.mxu0 %v499
    %542 = vmatprep.subr.mxu0 0.0
    %543 = vmatpush1.msra.mxu0 %v498
    %544 = vmatprep.subr.mxu0 0.0
    %545 = vmatpush1.msra.mxu0 %v497
    %546 = vmatprep.subr.mxu0 0.0
    %547 = vmatpush2.msra.mxu0 0.0
    %548 = vmatprep.subr.mxu0 0.0
    %549 = vmatpush2.msra.mxu0 0.0
    %550 = vmatprep.subr.mxu0 0.0
    %551 = vmatpush2.msra.mxu0 0.0
    %552 = vmatprep.subr.mxu0 0.0
    %553 = vmatpush2.msra.mxu0 0.0
    %554 = vmatprep.subr.mxu0 0.0
    %555 = vmatpush2.msra.mxu0 0.0
    %556 = vmatprep.subr.mxu0 0.0
    %557 = vmatpush2.msra.mxu0 0.0
    %558 = vmatprep.subr.mxu0 0.0
    %559 = vmatpush2.msra.mxu0 0.0
    %560 = vmatprep.subr.mxu0 0.0
    %561 = vmatpush2.msra.mxu0 0.0
    %562 = vmatprep.subr.mxu0 0.0
    %563 = vmatpush2.msra.mxu0 0.0
    %564 = vmatprep.subr.mxu0 0.0
    %565 = vmatpush2.msra.mxu0 0.0
    %566 = vmatprep.subr.mxu0 0.0
    %567 = vmatpush2.msra.mxu0 0.0
    %568 = vmatprep.subr.mxu0 0.0
    %569 = vmatpush2.msra.mxu0 0.0
    %570 = vmatprep.subr.mxu0 0.0
    %571 = vmatpush2.msra.mxu0 0.0
    %572 = vmatprep.subr.mxu0 0.0
    %573 = vmatpush2.msra.mxu0 0.0
    %574 = vmatprep.subr.mxu0 0.0
    %575 = vmatpush2.msra.mxu0 0.0
    %576 = vmatprep.subr.mxu0 0.0
    %577 = vmatpush2.msra.mxu0 0.0
    %578 = vmatprep.mubr.f32.mxu0 0.0
    %579 = vmatmul.mubr.f32.gmra.mxu0 %v496
    %v580 = vpop.f32.mrf.mxu0
    %v581 = vadd.f32 %v513, %v580
    %v582 = vpop.f32.mrf.mxu0
    %583 = vdwg.mxu0
    %vm584 = vcmask 1040384
    %v585 = vsel %vm584, %v581, -inf
    %586 = vmax.xlane.f32.xlu0 %v585
    %v587 = vpop.xlane.xlu0 %586
    %v588 = vsub.f32 %v581, %v587
    %v589 = vmul.f32 %v588, 1.442695
    %v590 = vpow.pop %v589
    %v591 = vsel %vm584, %v590, 0.0
    %592 = vadd.xlane.f32.xlu0 %v591
    %v593 = vpop.xlane.xlu0 %592
    %v594 = vrcp.pop %v593
    %v595 = vmul.f32 %v590, %v594
    %v596 = vld [vmem:[%s1] sm:$0xff]
    %v597 = vld [vmem:[%s1 + $0x8] sm:$0xff]
    %v598 = vld [vmem:[%s1 + $0x10] sm:$0xff]
    %v599 = vld [vmem:[%s1 + $0x18] sm:$0xff]
    %v600 = vld [vmem:[%s1 + $0x20] sm:$0xff]
    %v601 = vld [vmem:[%s1 + $0x28] sm:$0xff]
    %v602 = vld [vmem:[%s1 + $0x30] sm:$0xff]
    %v603 = vld [vmem:[%s1 + $0x38] sm:$0xff]
    %v604 = vld [vmem:[%s1 + $0x40] sm:$0xff]
    %v605 = vld [vmem:[%s1 + $0x48] sm:$0xff]
    %v606 = vld [vmem:[%s1 + $0x50] sm:$0xff]
    %v607 = vld [vmem:[%s1 + $0x58] sm:$0xff]
    %v608 = vld [vmem:[%s1 + $0x60] sm:$0xff]
    %v609 = vld [vmem:[%s1 + $0x68] sm:$0xff]
    %v610 = vld [vmem:[%s1 + $0x70] sm:$0xff]
    %v611 = vld [vmem:[%s1 + $0x78] sm:$0xff]
    %612 = vmatprep.subr.mxu0 0.0
    %613 = vmatpush1.msra.mxu0 %v611
    %614 = vmatprep.subr.mxu0 0.0
    %615 = vmatpush1.msra.mxu0 %v610
    %616 = vmatprep.subr.mxu0 0.0
    %617 = vmatpush1.msra.mxu0 %v609
    %618 = vmatprep.subr.mxu0 0.0
    %619 = vmatpush1.msra.mxu0 %v608
    %620 = vmatprep.subr.mxu0 0.0
    %621 = vmatpush1.msra.mxu0 %v607
    %622 = vmatprep.subr.mxu0 0.0
    %623 = vmatpush1.msra.mxu0 %v606
    %624 = vmatprep.subr.mxu0 0.0
    %625 = vmatpush1.msra.mxu0 %v605
    %626 = vmatprep.subr.mxu0 0.0
    %627 = vmatpush1.msra.mxu0 %v604
    %628 = vmatprep.subr.mxu0 0.0
    %629 = vmatpush1.msra.mxu0 %v603
    %630 = vmatprep.subr.mxu0 0.0
    %631 = vmatpush1.msra.mxu0 %v602
    %632 = vmatprep.subr.mxu0 0.0
    %633 = vmatpush1.msra.mxu0 %v601
    %634 = vmatprep.subr.mxu0 0.0
    %635 = vmatpush1.msra.mxu0 %v600
    %636 = vmatprep.subr.mxu0 0.0
    %637 = vmatpush1.msra.mxu0 %v599
    %638 = vmatprep.subr.mxu0 0.0
    %639 = vmatpush1.msra.mxu0 %v598
    %640 = vmatprep.subr.mxu0 0.0
    %641 = vmatpush1.msra.mxu0 %v597
    %642 = vmatprep.subr.mxu0 0.0
    %643 = vmatpush1.msra.mxu0 %v596
    %644 = vmatprep.subr.mxu0 0.0
    %645 = vmatpush2.msra.mxu0 0.0
    %646 = vmatprep.subr.mxu0 0.0
    %647 = vmatpush2.msra.mxu0 0.0
    %648 = vmatprep.subr.mxu0 0.0
    %649 = vmatpush2.msra.mxu0 0.0
    %650 = vmatprep.subr.mxu0 0.0
    %651 = vmatpush2.msra.mxu0 0.0
    %652 = vmatprep.subr.mxu0 0.0
    %653 = vmatpush2.msra.mxu0 0.0
    %654 = vmatprep.subr.mxu0 0.0
    %655 = vmatpush2.msra.mxu0 0.0
    %656 = vmatprep.subr.mxu0 0.0
    %657 = vmatpush2.msra.mxu0 0.0
    %658 = vmatprep.subr.mxu0 0.0
    %659 = vmatpush2.msra.mxu0 0.0
    %660 = vmatprep.subr.mxu0 0.0
    %661 = vmatpush2.msra.mxu0 0.0
    %662 = vmatprep.subr.mxu0 0.0
    %663 = vmatpush2.msra.mxu0 0.0
    %664 = vmatprep.subr.mxu0 0.0
    %665 = vmatpush2.msra.mxu0 0.0
    %666 = vmatprep.subr.mxu0 0.0
    %667 = vmatpush2.msra.mxu0 0.0
    %668 = vmatprep.subr.mxu0 0.0
    %669 = vmatpush2.msra.mxu0 0.0
    %670 = vmatprep.subr.mxu0 0.0
    %671 = vmatpush2.msra.mxu0 0.0
    %672 = vmatprep.subr.mxu0 0.0
    %673 = vmatpush2.msra.mxu0 0.0
    %674 = vmatprep.subr.mxu0 0.0
    %675 = vmatpush2.msra.mxu0 0.0
    %676 = vmatprep.mubr.f32.mxu0 0.0
    %677 = vmatmul.mubr.f32.gmra.mxu0 %v595
    %v678 = vpop.f32.mrf.mxu0
    %v679 = vadd.f32 0.0, %v678
    %v680 = vpop.f32.mrf.mxu0
    %681 = vdwg.mxu0
    %v682 = vlaneseq
    %vm683 = vcmp.ge.s32.totalorder %v682, 0
    %vm684 = vcmp.lt.s32.totalorder %v682, 128
    %vm685 = vmand %vm683, %vm684
    %686 = vst.msk [vmem:[#allocation2] sm:$0x1] %vm685, %v496
    %687 = vst.msk [vmem:[#allocation2 + $0x1] sm:$0x1] %vm685, %v679
    %v688 = vld [vmem:[#allocation2] sm:$0x3]
    %v689 = vld [vmem:[%s7] sm:$0xff]
    %v690 = vld [vmem:[%s7 + $0x8] sm:$0xff]
    %v691 = vld [vmem:[%s7 + $0x10] sm:$0xff]
    %v692 = vld [vmem:[%s7 + $0x18] sm:$0xff]
    %v693 = vld [vmem:[%s7 + $0x20] sm:$0xff]
    %v694 = vld [vmem:[%s7 + $0x28] sm:$0xff]
    %v695 = vld [vmem:[%s7 + $0x30] sm:$0xff]
    %v696 = vld [vmem:[%s7 + $0x38] sm:$0xff]
    %v697 = vld [vmem:[%s7 + $0x40] sm:$0xff]
    %v698 = vld [vmem:[%s7 + $0x48] sm:$0xff]
    %v699 = vld [vmem:[%s7 + $0x50] sm:$0xff]
    %v700 = vld [vmem:[%s7 + $0x58] sm:$0xff]
    %v701 = vld [vmem:[%s7 + $0x60] sm:$0xff]
    %v702 = vld [vmem:[%s7 + $0x68] sm:$0xff]
    %v703 = vld [vmem:[%s7 + $0x70] sm:$0xff]
    %v704 = vld [vmem:[%s7 + $0x78] sm:$0xff]
    %v705 = vld [vmem:[%s7 + $0x80] sm:$0xff]
    %v706 = vld [vmem:[%s7 + $0x88] sm:$0xff]
    %v707 = vld [vmem:[%s7 + $0x90] sm:$0xff]
    %v708 = vld [vmem:[%s7 + $0x98] sm:$0xff]
    %v709 = vld [vmem:[%s7 + $0xa0] sm:$0xff]
    %v710 = vld [vmem:[%s7 + $0xa8] sm:$0xff]
    %v711 = vld [vmem:[%s7 + $0xb0] sm:$0xff]
    %v712 = vld [vmem:[%s7 + $0xb8] sm:$0xff]
    %v713 = vld [vmem:[%s7 + $0xc0] sm:$0xff]
    %v714 = vld [vmem:[%s7 + $0xc8] sm:$0xff]
    %v715 = vld [vmem:[%s7 + $0xd0] sm:$0xff]
    %v716 = vld [vmem:[%s7 + $0xd8] sm:$0xff]
    %v717 = vld [vmem:[%s7 + $0xe0] sm:$0xff]
    %v718 = vld [vmem:[%s7 + $0xe8] sm:$0xff]
    %v719 = vld [vmem:[%s7 + $0xf0] sm:$0xff]
    %v720 = vld [vmem:[%s7 + $0xf8] sm:$0xff]
    %v721 = vld [vmem:[%s8] sm:$0x1]
    %v723 = vlaneseq
    %v724 = vshrl.u32 %v723, 7
    %v725 = vsub.s32 0, %v724
    %v726 = vrot.slane %v688, %v725
    %v727 = vlaneseq
    %v728 = vshrl.u32 %v727, 7
    %v729 = vsub.s32 1, %v728
    %v730 = vrot.slane %v688, %v729
    %733 = vmatprep.subr.mxu0 0.0
    %734 = vmatpush1.msra.mxu0 %v704
    %735 = vmatprep.subr.mxu0 0.0
    %736 = vmatpush1.msra.mxu0 %v703
    %737 = vmatprep.subr.mxu0 0.0
    %738 = vmatpush1.msra.mxu0 %v702
    %739 = vmatprep.subr.mxu0 0.0
    %740 = vmatpush1.msra.mxu0 %v701
    %741 = vmatprep.subr.mxu0 0.0
    %742 = vmatpush1.msra.mxu0 %v700
    %743 = vmatprep.subr.mxu0 0.0
    %744 = vmatpush1.msra.mxu0 %v699
    %745 = vmatprep.subr.mxu0 0.0
    %746 = vmatpush1.msra.mxu0 %v698
    %747 = vmatprep.subr.mxu0 0.0
    %748 = vmatpush1.msra.mxu0 %v697
    %749 = vmatprep.subr.mxu0 0.0
    %750 = vmatpush1.msra.mxu0 %v696
    %751 = vmatprep.subr.mxu0 0.0
    %752 = vmatpush1.msra.mxu0 %v695
    %753 = vmatprep.subr.mxu0 0.0
    %754 = vmatpush1.msra.mxu0 %v694
    %755 = vmatprep.subr.mxu0 0.0
    %756 = vmatpush1.msra.mxu0 %v693
    %757 = vmatprep.subr.mxu0 0.0
    %758 = vmatpush1.msra.mxu0 %v692
    %759 = vmatprep.subr.mxu0 0.0
    %760 = vmatpush1.msra.mxu0 %v691
    %761 = vmatprep.subr.mxu0 0.0
    %762 = vmatpush1.msra.mxu0 %v690
    %763 = vmatprep.subr.mxu0 0.0
    %764 = vmatpush1.msra.mxu0 %v689
    %765 = vmatprep.subr.mxu0 0.0
    %766 = vmatpush2.msra.mxu0 %v720
    %767 = vmatprep.subr.mxu0 0.0
    %768 = vmatpush2.msra.mxu0 %v719
    %769 = vmatprep.subr.mxu0 0.0
    %770 = vmatpush2.msra.mxu0 %v718
    %771 = vmatprep.subr.mxu0 0.0
    %772 = vmatpush2.msra.mxu0 %v717
    %773 = vmatprep.subr.mxu0 0.0
    %774 = vmatpush2.msra.mxu0 %v716
    %775 = vmatprep.subr.mxu0 0.0
    %776 = vmatpush2.msra.mxu0 %v715
    %777 = vmatprep.subr.mxu0 0.0
    %778 = vmatpush2.msra.mxu0 %v714
    %779 = vmatprep.subr.mxu0 0.0
    %780 = vmatpush2.msra.mxu0 %v713
    %781 = vmatprep.subr.mxu0 0.0
    %782 = vmatpush2.msra.mxu0 %v712
    %783 = vmatprep.subr.mxu0 0.0
    %784 = vmatpush2.msra.mxu0 %v711
    %785 = vmatprep.subr.mxu0 0.0
    %786 = vmatpush2.msra.mxu0 %v710
    %787 = vmatprep.subr.mxu0 0.0
    %788 = vmatpush2.msra.mxu0 %v709
    %789 = vmatprep.subr.mxu0 0.0
    %790 = vmatpush2.msra.mxu0 %v708
    %791 = vmatprep.subr.mxu0 0.0
    %792 = vmatpush2.msra.mxu0 %v707
    %793 = vmatprep.subr.mxu0 0.0
    %794 = vmatpush2.msra.mxu0 %v706
    %795 = vmatprep.subr.mxu0 0.0
    %796 = vmatpush2.msra.mxu0 %v705
    %797 = vmatprep.mubr.f32.mxu0 %v730
    %798 = vmatmul.mubr.f32.gmra.mxu0 %v726
    %v799 = vpop.f32.mrf.mxu0
    %v800 = vadd.f32 %v721, %v799
    %v801 = vpop.f32.mrf.mxu0
    %802 = vdwg.mxu0
    %v803 = vsel %vm584, %v800, -inf
    %804 = vmax.xlane.f32.xlu0 %v803
    %v805 = vpop.xlane.xlu0 %804
    %v806 = vsub.f32 %v800, %v805
    %v807 = vmul.f32 %v806, 1.442695
    %v808 = vpow.pop %v807
    %v809 = vsel %vm584, %v808, 0.0
    %810 = vadd.xlane.f32.xlu0 %v809
    %v811 = vpop.xlane.xlu0 %810
    %v812 = vlog2.pop %v811
    %v813 = vmul.f32 %v812, 0.6931472
    %v814 = vadd.f32 %v805, %v813
    %v815 = vsub.f32 %v800, %v814
    %816 = vst [vmem:[#allocation3] sm:$0x1] %v815
    %817 = vst [vmem:[#allocation5] sm:$0x1] %v679
    %818 = vst [vmem:[#allocation7] sm:$0x1] %v496
    %819 = vst [vmem:[#allocation8] sm:$0x1] %v595
    %s820 = scalar_lea.vmem %s0, 1
    %v821 = vld [vmem:[%s820] ss:$8 sm:$0x7]
    %v822 = vld [vmem:[%s4] sm:$0xff]
    %v823 = vld [vmem:[%s4 + $0x8] sm:$0xff]
    %v824 = vld [vmem:[%s4 + $0x10] sm:$0xff]
    %v825 = vld [vmem:[%s4 + $0x18] sm:$0xff]
    %v826 = vld [vmem:[%s4 + $0x20] sm:$0xff]
    %v827 = vld [vmem:[%s4 + $0x28] sm:$0xff]
    %v828 = vld [vmem:[%s4 + $0x30] sm:$0xff]
    %v829 = vld [vmem:[%s4 + $0x38] sm:$0xff]
    %v830 = vld [vmem:[%s4 + $0x40] sm:$0xff]
    %v831 = vld [vmem:[%s4 + $0x48] sm:$0xff]
    %v832 = vld [vmem:[%s4 + $0x50] sm:$0xff]
    %v833 = vld [vmem:[%s4 + $0x58] sm:$0xff]
    %v834 = vld [vmem:[%s4 + $0x60] sm:$0xff]
    %v835 = vld [vmem:[%s4 + $0x68] sm:$0xff]
    %v836 = vld [vmem:[%s4 + $0x70] sm:$0xff]
    %v837 = vld [vmem:[%s4 + $0x78] sm:$0xff]
    %v838 = vld [vmem:[%s4 + $0x80] sm:$0xff]
    %v839 = vld [vmem:[%s4 + $0x88] sm:$0xff]
    %v840 = vld [vmem:[%s4 + $0x90] sm:$0xff]
    %v841 = vld [vmem:[%s4 + $0x98] sm:$0xff]
    %v842 = vld [vmem:[%s4 + $0xa0] sm:$0xff]
    %v843 = vld [vmem:[%s4 + $0xa8] sm:$0xff]
    %v844 = vld [vmem:[%s4 + $0xb0] sm:$0xff]
    %v845 = vld [vmem:[%s4 + $0xb8] sm:$0xff]
    %v846 = vld [vmem:[%s4 + $0xc0] sm:$0xff]
    %v847 = vld [vmem:[%s4 + $0xc8] sm:$0xff]
    %v848 = vld [vmem:[%s4 + $0xd0] sm:$0xff]
    %v849 = vld [vmem:[%s4 + $0xd8] sm:$0xff]
    %v850 = vld [vmem:[%s4 + $0xe0] sm:$0xff]
    %v851 = vld [vmem:[%s4 + $0xe8] sm:$0xff]
    %v852 = vld [vmem:[%s4 + $0xf0] sm:$0xff]
    %v853 = vld [vmem:[%s4 + $0xf8] sm:$0xff]
    %v854 = vld [vmem:[%s4 + $0x100] sm:$0xff]
    %v855 = vld [vmem:[%s4 + $0x108] sm:$0xff]
    %v856 = vld [vmem:[%s4 + $0x110] sm:$0xff]
    %v857 = vld [vmem:[%s4 + $0x118] sm:$0xff]
    %v858 = vld [vmem:[%s4 + $0x120] sm:$0xff]
    %v859 = vld [vmem:[%s4 + $0x128] sm:$0xff]
    %v860 = vld [vmem:[%s4 + $0x130] sm:$0xff]
    %v861 = vld [vmem:[%s4 + $0x138] sm:$0xff]
    %v862 = vld [vmem:[%s4 + $0x140] sm:$0xff]
    %v863 = vld [vmem:[%s4 + $0x148] sm:$0xff]
    %v864 = vld [vmem:[%s4 + $0x150] sm:$0xff]
    %v865 = vld [vmem:[%s4 + $0x158] sm:$0xff]
    %v866 = vld [vmem:[%s4 + $0x160] sm:$0xff]
    %v867 = vld [vmem:[%s4 + $0x168] sm:$0xff]
    %v868 = vld [vmem:[%s4 + $0x170] sm:$0xff]
    %v869 = vld [vmem:[%s4 + $0x178] sm:$0xff]
    %870 = vmatprep.subr.mxu0 %v868
    %871 = vmatpush1.msra.mxu0 %v867
    %872 = vmatprep.subr.mxu0 %v865
    %873 = vmatpush1.msra.mxu0 %v864
    %874 = vmatprep.subr.mxu0 %v862
    %875 = vmatpush1.msra.mxu0 %v861
    %876 = vmatprep.subr.mxu0 %v859
    %877 = vmatpush1.msra.mxu0 %v858
    %878 = vmatprep.subr.mxu0 %v856
    %879 = vmatpush1.msra.mxu0 %v855
    %880 = vmatprep.subr.mxu0 %v853
    %881 = vmatpush1.msra.mxu0 %v852
    %882 = vmatprep.subr.mxu0 %v850
    %883 = vmatpush1.msra.mxu0 %v849
    %884 = vmatprep.subr.mxu0 %v847
    %885 = vmatpush1.msra.mxu0 %v846
    %886 = vmatprep.subr.mxu0 %v844
    %887 = vmatpush1.msra.mxu0 %v843
    %888 = vmatprep.subr.mxu0 %v841
    %889 = vmatpush1.msra.mxu0 %v840
    %890 = vmatprep.subr.mxu0 %v838
    %891 = vmatpush1.msra.mxu0 %v837
    %892 = vmatprep.subr.mxu0 %v835
    %893 = vmatpush1.msra.mxu0 %v834
    %894 = vmatprep.subr.mxu0 %v832
    %895 = vmatpush1.msra.mxu0 %v831
    %896 = vmatprep.subr.mxu0 %v829
    %897 = vmatpush1.msra.mxu0 %v828
    %898 = vmatprep.subr.mxu0 %v826
    %899 = vmatpush1.msra.mxu0 %v825
    %900 = vmatprep.subr.mxu0 %v823
    %901 = vmatpush1.msra.mxu0 %v822
    %902 = vmatprep.subr.mxu0 0.0
    %903 = vmatpush2.msra.mxu0 0.0
    %904 = vmatprep.subr.mxu0 0.0
    %905 = vmatpush2.msra.mxu0 0.0
    %906 = vmatprep.subr.mxu0 0.0
    %907 = vmatpush2.msra.mxu0 0.0
    %908 = vmatprep.subr.mxu0 0.0
    %909 = vmatpush2.msra.mxu0 0.0
    %910 = vmatprep.subr.mxu0 0.0
    %911 = vmatpush2.msra.mxu0 0.0
    %912 = vmatprep.subr.mxu0 0.0
    %913 = vmatpush2.msra.mxu0 0.0
    %914 = vmatprep.subr.mxu0 0.0
    %915 = vmatpush2.msra.mxu0 0.0
    %916 = vmatprep.subr.mxu0 0.0
    %917 = vmatpush2.msra.mxu0 0.0
    %918 = vmatprep.subr.mxu0 0.0
    %919 = vmatpush2.msra.mxu0 0.0
    %920 = vmatprep.subr.mxu0 0.0
    %921 = vmatpush2.msra.mxu0 0.0
    %922 = vmatprep.subr.mxu0 0.0
    %923 = vmatpush2.msra.mxu0 0.0
    %924 = vmatprep.subr.mxu0 0.0
    %925 = vmatpush2.msra.mxu0 0.0
    %926 = vmatprep.subr.mxu0 0.0
    %927 = vmatpush2.msra.mxu0 0.0
    %928 = vmatprep.subr.mxu0 0.0
    %929 = vmatpush2.msra.mxu0 0.0
    %930 = vmatprep.subr.mxu0 0.0
    %931 = vmatpush2.msra.mxu0 0.0
    %932 = vmatprep.subr.mxu0 0.0
    %933 = vmatpush2.msra.mxu0 0.0
    %934 = vmatprep.mubr.f32.mxu0 0.0
    %935 = vmatmul.mubr.f32.gmra.mxu0 %v679
    %v936 = vpop.f32.mrf.mxu0
    %v937 = vadd.f32 0.0, %v936
    %v938 = vpop.f32.mrf.mxu0
    %v939 = vadd.f32 0.0, %v938
    %940 = vdwg.mxu0
    %941 = vmatprep.subr.mxu0 0.0
    %942 = vmatpush1.msra.mxu0 %v869
    %943 = vmatprep.subr.mxu0 0.0
    %944 = vmatpush1.msra.mxu0 %v866
    %945 = vmatprep.subr.mxu0 0.0
    %946 = vmatpush1.msra.mxu0 %v863
    %947 = vmatprep.subr.mxu0 0.0
    %948 = vmatpush1.msra.mxu0 %v860
    %949 = vmatprep.subr.mxu0 0.0
    %950 = vmatpush1.msra.mxu0 %v857
    %951 = vmatprep.subr.mxu0 0.0
    %952 = vmatpush1.msra.mxu0 %v854
    %953 = vmatprep.subr.mxu0 0.0
    %954 = vmatpush1.msra.mxu0 %v851
    %955 = vmatprep.subr.mxu0 0.0
    %956 = vmatpush1.msra.mxu0 %v848
    %957 = vmatprep.subr.mxu0 0.0
    %958 = vmatpush1.msra.mxu0 %v845
    %959 = vmatprep.subr.mxu0 0.0
    %960 = vmatpush1.msra.mxu0 %v842
    %961 = vmatprep.subr.mxu0 0.0
    %962 = vmatpush1.msra.mxu0 %v839
    %963 = vmatprep.subr.mxu0 0.0
    %964 = vmatpush1.msra.mxu0 %v836
    %965 = vmatprep.subr.mxu0 0.0
    %966 = vmatpush1.msra.mxu0 %v833
    %967 = vmatprep.subr.mxu0 0.0
    %968 = vmatpush1.msra.mxu0 %v830
    %969 = vmatprep.subr.mxu0 0.0
    %970 = vmatpush1.msra.mxu0 %v827
    %971 = vmatprep.subr.mxu0 0.0
    %972 = vmatpush1.msra.mxu0 %v824
    %973 = vmatprep.subr.mxu0 0.0
    %974 = vmatpush2.msra.mxu0 0.0
    %975 = vmatprep.subr.mxu0 0.0
    %976 = vmatpush2.msra.mxu0 0.0
    %977 = vmatprep.subr.mxu0 0.0
    %978 = vmatpush2.msra.mxu0 0.0
    %979 = vmatprep.subr.mxu0 0.0
    %980 = vmatpush2.msra.mxu0 0.0
    %981 = vmatprep.subr.mxu0 0.0
    %982 = vmatpush2.msra.mxu0 0.0
    %983 = vmatprep.subr.mxu0 0.0
    %984 = vmatpush2.msra.mxu0 0.0
    %985 = vmatprep.subr.mxu0 0.0
    %986 = vmatpush2.msra.mxu0 0.0
    %987 = vmatprep.subr.mxu0 0.0
    %988 = vmatpush2.msra.mxu0 0.0
    %989 = vmatprep.subr.mxu0 0.0
    %990 = vmatpush2.msra.mxu0 0.0
    %991 = vmatprep.subr.mxu0 0.0
    %992 = vmatpush2.msra.mxu0 0.0
    %993 = vmatprep.subr.mxu0 0.0
    %994 = vmatpush2.msra.mxu0 0.0
    %995 = vmatprep.subr.mxu0 0.0
    %996 = vmatpush2.msra.mxu0 0.0
    %997 = vmatprep.subr.mxu0 0.0
    %998 = vmatpush2.msra.mxu0 0.0
    %999 = vmatprep.subr.mxu0 0.0
    %1000 = vmatpush2.msra.mxu0 0.0
    %1001 = vmatprep.subr.mxu0 0.0
    %1002 = vmatpush2.msra.mxu0 0.0
    %1003 = vmatprep.subr.mxu0 0.0
    %1004 = vmatpush2.msra.mxu0 0.0
    %1005 = vmatprep.mubr.f32.mxu0 0.0
    %1006 = vmatmul.mubr.f32.gmra.mxu0 %v679
    %v1007 = vpop.f32.mrf.mxu0
    %v1008 = vadd.f32 0.0, %v1007
    %v1009 = vpop.f32.mrf.mxu0
    %1010 = vdwg.mxu0
    %v1014 = vcombine.low %v937, %v939
    %v1016 = vunpack.c.l.s4 1966171168
    %v1017 = vunpack.c.0.s8 %v1016
    %v1018 = vlaneseq
    %v1019 = vshrl.u32 %v1018, 7
    %v1020 = vsub.s32 %v1017, %v1019
    %v1021 = vrot.slane %v1014, %v1020
    %v1023 = vunpack.c.l.s4 1966171168
    %v1024 = vunpack.c.0.s8 %v1023
    %v1025 = vlaneseq
    %v1026 = vshrl.u32 %v1025, 7
    %v1027 = vsub.s32 %v1024, %v1026
    %v1028 = vrot.slane %v1008, %v1027
    %v1029 = vcombine.low %v1021, %v1028
    %v1031 = vunpack.c.l.s4 1966171168
    %v1032 = vunpack.c.0.s8 %v1031
    %v1033 = vlaneseq
    %v1034 = vshrl.u32 %v1033, 7
    %v1035 = vsub.s32 %v1032, %v1034
    %v1036 = vrot.slane %v1029, %v1035
    %v1038 = vadd.f32 %v821, %v1036
    %v1039 = vld [vmem:[%s5] sm:$0xff]
    %v1040 = vld [vmem:[%s5 + $0x8] sm:$0xff]
    %v1041 = vld [vmem:[%s5 + $0x10] sm:$0xff]
    %v1042 = vld [vmem:[%s5 + $0x18] sm:$0xff]
    %v1043 = vld [vmem:[%s5 + $0x20] sm:$0xff]
    %v1044 = vld [vmem:[%s5 + $0x28] sm:$0xff]
    %v1045 = vld [vmem:[%s5 + $0x30] sm:$0xff]
    %v1046 = vld [vmem:[%s5 + $0x38] sm:$0xff]
    %v1047 = vld [vmem:[%s5 + $0x40] sm:$0xff]
    %v1048 = vld [vmem:[%s5 + $0x48] sm:$0xff]
    %v1049 = vld [vmem:[%s5 + $0x50] sm:$0xff]
    %v1050 = vld [vmem:[%s5 + $0x58] sm:$0xff]
    %v1051 = vld [vmem:[%s5 + $0x60] sm:$0xff]
    %v1052 = vld [vmem:[%s5 + $0x68] sm:$0xff]
    %v1053 = vld [vmem:[%s5 + $0x70] sm:$0xff]
    %v1054 = vld [vmem:[%s5 + $0x78] sm:$0xff]
    %v1055 = vld [vmem:[%s5 + $0x80] sm:$0xff]
    %v1056 = vld [vmem:[%s5 + $0x88] sm:$0xff]
    %v1057 = vld [vmem:[%s5 + $0x90] sm:$0xff]
    %v1058 = vld [vmem:[%s5 + $0x98] sm:$0xff]
    %v1059 = vld [vmem:[%s5 + $0xa0] sm:$0xff]
    %v1060 = vld [vmem:[%s5 + $0xa8] sm:$0xff]
    %v1061 = vld [vmem:[%s5 + $0xb0] sm:$0xff]
    %v1062 = vld [vmem:[%s5 + $0xb8] sm:$0xff]
    %v1063 = vld [vmem:[%s5 + $0xc0] sm:$0xff]
    %v1064 = vld [vmem:[%s5 + $0xc8] sm:$0xff]
    %v1065 = vld [vmem:[%s5 + $0xd0] sm:$0xff]
    %v1066 = vld [vmem:[%s5 + $0xd8] sm:$0xff]
    %v1067 = vld [vmem:[%s5 + $0xe0] sm:$0xff]
    %v1068 = vld [vmem:[%s5 + $0xe8] sm:$0xff]
    %v1069 = vld [vmem:[%s5 + $0xf0] sm:$0xff]
    %v1070 = vld [vmem:[%s5 + $0xf8] sm:$0xff]
    %v1071 = vld [vmem:[%s5 + $0x100] sm:$0xff]
    %v1072 = vld [vmem:[%s5 + $0x108] sm:$0xff]
    %v1073 = vld [vmem:[%s5 + $0x110] sm:$0xff]
    %v1074 = vld [vmem:[%s5 + $0x118] sm:$0xff]
    %v1075 = vld [vmem:[%s5 + $0x120] sm:$0xff]
    %v1076 = vld [vmem:[%s5 + $0x128] sm:$0xff]
    %v1077 = vld [vmem:[%s5 + $0x130] sm:$0xff]
    %v1078 = vld [vmem:[%s5 + $0x138] sm:$0xff]
    %v1079 = vld [vmem:[%s5 + $0x140] sm:$0xff]
    %v1080 = vld [vmem:[%s5 + $0x148] sm:$0xff]
    %v1081 = vld [vmem:[%s5 + $0x150] sm:$0xff]
    %v1082 = vld [vmem:[%s5 + $0x158] sm:$0xff]
    %v1083 = vld [vmem:[%s5 + $0x160] sm:$0xff]
    %v1084 = vld [vmem:[%s5 + $0x168] sm:$0xff]
    %v1085 = vld [vmem:[%s5 + $0x170] sm:$0xff]
    %v1086 = vld [vmem:[%s5 + $0x178] sm:$0xff]
    %v1087 = vld [vmem:[%s6] sm:$0x7]
    %v1089 = vlaneseq
    %v1090 = vshrl.u32 %v1089, 7
    %v1091 = vsub.s32 0, %v1090
    %v1092 = vrot.slane %v1087, %v1091
    %v1093 = vlaneseq
    %v1094 = vshrl.u32 %v1093, 7
    %v1095 = vsub.s32 1, %v1094
    %v1096 = vrot.slane %v1087, %v1095
    %v1097 = vlaneseq
    %v1098 = vshrl.u32 %v1097, 7
    %v1099 = vsub.s32 2, %v1098
    %v1100 = vrot.slane %v1087, %v1099
    %1104 = vmatprep.subr.mxu0 %v1085
    %1105 = vmatpush1.msra.mxu0 %v1084
    %1106 = vmatprep.subr.mxu0 %v1082
    %1107 = vmatpush1.msra.mxu0 %v1081
    %1108 = vmatprep.subr.mxu0 %v1079
    %1109 = vmatpush1.msra.mxu0 %v1078
    %1110 = vmatprep.subr.mxu0 %v1076
    %1111 = vmatpush1.msra.mxu0 %v1075
    %1112 = vmatprep.subr.mxu0 %v1073
    %1113 = vmatpush1.msra.mxu0 %v1072
    %1114 = vmatprep.subr.mxu0 %v1070
    %1115 = vmatpush1.msra.mxu0 %v1069
    %1116 = vmatprep.subr.mxu0 %v1067
    %1117 = vmatpush1.msra.mxu0 %v1066
    %1118 = vmatprep.subr.mxu0 %v1064
    %1119 = vmatpush1.msra.mxu0 %v1063
    %1120 = vmatprep.subr.mxu0 %v1061
    %1121 = vmatpush1.msra.mxu0 %v1060
    %1122 = vmatprep.subr.mxu0 %v1058
    %1123 = vmatpush1.msra.mxu0 %v1057
    %1124 = vmatprep.subr.mxu0 %v1055
    %1125 = vmatpush1.msra.mxu0 %v1054
    %1126 = vmatprep.subr.mxu0 %v1052
    %1127 = vmatpush1.msra.mxu0 %v1051
    %1128 = vmatprep.subr.mxu0 %v1049
    %1129 = vmatpush1.msra.mxu0 %v1048
    %1130 = vmatprep.subr.mxu0 %v1046
    %1131 = vmatpush1.msra.mxu0 %v1045
    %1132 = vmatprep.subr.mxu0 %v1043
    %1133 = vmatpush1.msra.mxu0 %v1042
    %1134 = vmatprep.subr.mxu0 %v1040
    %1135 = vmatpush1.msra.mxu0 %v1039
    %1136 = vmatprep.subr.mxu0 0.0
    %1137 = vmatpush2.msra.mxu0 0.0
    %1138 = vmatprep.subr.mxu0 0.0
    %1139 = vmatpush2.msra.mxu0 0.0
    %1140 = vmatprep.subr.mxu0 0.0
    %1141 = vmatpush2.msra.mxu0 0.0
    %1142 = vmatprep.subr.mxu0 0.0
    %1143 = vmatpush2.msra.mxu0 0.0
    %1144 = vmatprep.subr.mxu0 0.0
    %1145 = vmatpush2.msra.mxu0 0.0
    %1146 = vmatprep.subr.mxu0 0.0
    %1147 = vmatpush2.msra.mxu0 0.0
    %1148 = vmatprep.subr.mxu0 0.0
    %1149 = vmatpush2.msra.mxu0 0.0
    %1150 = vmatprep.subr.mxu0 0.0
    %1151 = vmatpush2.msra.mxu0 0.0
    %1152 = vmatprep.subr.mxu0 0.0
    %1153 = vmatpush2.msra.mxu0 0.0
    %1154 = vmatprep.subr.mxu0 0.0
    %1155 = vmatpush2.msra.mxu0 0.0
    %1156 = vmatprep.subr.mxu0 0.0
    %1157 = vmatpush2.msra.mxu0 0.0
    %1158 = vmatprep.subr.mxu0 0.0
    %1159 = vmatpush2.msra.mxu0 0.0
    %1160 = vmatprep.subr.mxu0 0.0
    %1161 = vmatpush2.msra.mxu0 0.0
    %1162 = vmatprep.subr.mxu0 0.0
    %1163 = vmatpush2.msra.mxu0 0.0
    %1164 = vmatprep.subr.mxu0 0.0
    %1165 = vmatpush2.msra.mxu0 0.0
    %1166 = vmatprep.subr.mxu0 0.0
    %1167 = vmatpush2.msra.mxu0 0.0
    %1168 = vmatprep.mubr.f32.mxu0 0.0
    %1169 = vmatmul.mubr.f32.gmra.mxu0 %v496
    %v1170 = vpop.f32.mrf.mxu0
    %v1171 = vadd.f32 %v1092, %v1170
    %v1172 = vpop.f32.mrf.mxu0
    %v1173 = vadd.f32 %v1096, %v1172
    %1174 = vdwg.mxu0
    %1175 = vmatprep.subr.mxu0 0.0
    %1176 = vmatpush1.msra.mxu0 %v1086
    %1177 = vmatprep.subr.mxu0 0.0
    %1178 = vmatpush1.msra.mxu0 %v1083
    %1179 = vmatprep.subr.mxu0 0.0
    %1180 = vmatpush1.msra.mxu0 %v1080
    %1181 = vmatprep.subr.mxu0 0.0
    %1182 = vmatpush1.msra.mxu0 %v1077
    %1183 = vmatprep.subr.mxu0 0.0
    %1184 = vmatpush1.msra.mxu0 %v1074
    %1185 = vmatprep.subr.mxu0 0.0
    %1186 = vmatpush1.msra.mxu0 %v1071
    %1187 = vmatprep.subr.mxu0 0.0
    %1188 = vmatpush1.msra.mxu0 %v1068
    %1189 = vmatprep.subr.mxu0 0.0
    %1190 = vmatpush1.msra.mxu0 %v1065
    %1191 = vmatprep.subr.mxu0 0.0
    %1192 = vmatpush1.msra.mxu0 %v1062
    %1193 = vmatprep.subr.mxu0 0.0
    %1194 = vmatpush1.msra.mxu0 %v1059
    %1195 = vmatprep.subr.mxu0 0.0
    %1196 = vmatpush1.msra.mxu0 %v1056
    %1197 = vmatprep.subr.mxu0 0.0
    %1198 = vmatpush1.msra.mxu0 %v1053
    %1199 = vmatprep.subr.mxu0 0.0
    %1200 = vmatpush1.msra.mxu0 %v1050
    %1201 = vmatprep.subr.mxu0 0.0
    %1202 = vmatpush1.msra.mxu0 %v1047
    %1203 = vmatprep.subr.mxu0 0.0
    %1204 = vmatpush1.msra.mxu0 %v1044
    %1205 = vmatprep.subr.mxu0 0.0
    %1206 = vmatpush1.msra.mxu0 %v1041
    %1207 = vmatprep.subr.mxu0 0.0
    %1208 = vmatpush2.msra.mxu0 0.0
    %1209 = vmatprep.subr.mxu0 0.0
    %1210 = vmatpush2.msra.mxu0 0.0
    %1211 = vmatprep.subr.mxu0 0.0
    %1212 = vmatpush2.msra.mxu0 0.0
    %1213 = vmatprep.subr.mxu0 0.0
    %1214 = vmatpush2.msra.mxu0 0.0
    %1215 = vmatprep.subr.mxu0 0.0
    %1216 = vmatpush2.msra.mxu0 0.0
    %1217 = vmatprep.subr.mxu0 0.0
    %1218 = vmatpush2.msra.mxu0 0.0
    %1219 = vmatprep.subr.mxu0 0.0
    %1220 = vmatpush2.msra.mxu0 0.0
    %1221 = vmatprep.subr.mxu0 0.0
    %1222 = vmatpush2.msra.mxu0 0.0
    %1223 = vmatprep.subr.mxu0 0.0
    %1224 = vmatpush2.msra.mxu0 0.0
    %1225 = vmatprep.subr.mxu0 0.0
    %1226 = vmatpush2.msra.mxu0 0.0
    %1227 = vmatprep.subr.mxu0 0.0
    %1228 = vmatpush2.msra.mxu0 0.0
    %1229 = vmatprep.subr.mxu0 0.0
    %1230 = vmatpush2.msra.mxu0 0.0
    %1231 = vmatprep.subr.mxu0 0.0
    %1232 = vmatpush2.msra.mxu0 0.0
    %1233 = vmatprep.subr.mxu0 0.0
    %1234 = vmatpush2.msra.mxu0 0.0
    %1235 = vmatprep.subr.mxu0 0.0
    %1236 = vmatpush2.msra.mxu0 0.0
    %1237 = vmatprep.subr.mxu0 0.0
    %1238 = vmatpush2.msra.mxu0 0.0
    %1239 = vmatprep.mubr.f32.mxu0 0.0
    %1240 = vmatmul.mubr.f32.gmra.mxu0 %v496
    %v1241 = vpop.f32.mrf.mxu0
    %v1242 = vadd.f32 %v1100, %v1241
    %v1243 = vpop.f32.mrf.mxu0
    %1244 = vdwg.mxu0
    %v1245 = vadd.f32 %v1038, %v1171
    %v1246 = vxor.u32 %v1245, 2147483648
    %v1247 = vmul.f32 %v1246, 1.442695
    %v1248 = vpow.pop %v1247
    %v1249 = vadd.f32 %v1248, 1.0
    %v1250 = vrcp.pop %v1249
    %v1251 = vmul.f32 1.0, %v1250
    %v1253 = vrot.slane %v1038, 1
    %v1255 = vadd.f32 %v1253, %v1173
    %v1256 = vxor.u32 %v1255, 2147483648
    %v1257 = vmul.f32 %v1256, 1.442695
    %v1258 = vpow.pop %v1257
    %v1259 = vadd.f32 %v1258, 1.0
    %v1260 = vrcp.pop %v1259
    %v1261 = vmul.f32 1.0, %v1260
    %v1262 = vmul.f32 %v1251, %v1242
    %v1263 = vrot.slane %v1038, 2
    %v1265 = vadd.f32 %v1263, %v1262
    %v1266 = vtanh.pop %v1265
    %v1267 = vsub.f32 1.0, %v1261
    %v1268 = vmul.f32 %v1267, %v1266
    %v1269 = vmul.f32 %v1261, %v496
    %v1270 = vadd.f32 %v1268, %v1269
    %v1271 = vld [vmem:[%s2] sm:$0xff]
    %v1272 = vld [vmem:[%s2 + $0x8] sm:$0xff]
    %v1273 = vld [vmem:[%s2 + $0x10] sm:$0xff]
    %v1274 = vld [vmem:[%s2 + $0x18] sm:$0xff]
    %v1275 = vld [vmem:[%s2 + $0x20] sm:$0xff]
    %v1276 = vld [vmem:[%s2 + $0x28] sm:$0xff]
    %v1277 = vld [vmem:[%s2 + $0x30] sm:$0xff]
    %v1278 = vld [vmem:[%s2 + $0x38] sm:$0xff]
    %v1279 = vld [vmem:[%s2 + $0x40] sm:$0xff]
    %v1280 = vld [vmem:[%s2 + $0x48] sm:$0xff]
    %v1281 = vld [vmem:[%s2 + $0x50] sm:$0xff]
    %v1282 = vld [vmem:[%s2 + $0x58] sm:$0xff]
    %v1283 = vld [vmem:[%s2 + $0x60] sm:$0xff]
    %v1284 = vld [vmem:[%s2 + $0x68] sm:$0xff]
    %v1285 = vld [vmem:[%s2 + $0x70] sm:$0xff]
    %v1286 = vld [vmem:[%s2 + $0x78] sm:$0xff]
    %v1287 = vld [vmem:[%s3] sm:$0x1]
    %1288 = vmatprep.subr.mxu0 0.0
    %1289 = vmatpush1.msra.mxu0 %v1286
    %1290 = vmatprep.subr.mxu0 0.0
    %1291 = vmatpush1.msra.mxu0 %v1285
    %1292 = vmatprep.subr.mxu0 0.0
    %1293 = vmatpush1.msra.mxu0 %v1284
    %1294 = vmatprep.subr.mxu0 0.0
    %1295 = vmatpush1.msra.mxu0 %v1283
    %1296 = vmatprep.subr.mxu0 0.0
    %1297 = vmatpush1.msra.mxu0 %v1282
    %1298 = vmatprep.subr.mxu0 0.0
    %1299 = vmatpush1.msra.mxu0 %v1281
    %1300 = vmatprep.subr.mxu0 0.0
    %1301 = vmatpush1.msra.mxu0 %v1280
    %1302 = vmatprep.subr.mxu0 0.0
    %1303 = vmatpush1.msra.mxu0 %v1279
    %1304 = vmatprep.subr.mxu0 0.0
    %1305 = vmatpush1.msra.mxu0 %v1278
    %1306 = vmatprep.subr.mxu0 0.0
    %1307 = vmatpush1.msra.mxu0 %v1277
    %1308 = vmatprep.subr.mxu0 0.0
    %1309 = vmatpush1.msra.mxu0 %v1276
    %1310 = vmatprep.subr.mxu0 0.0
    %1311 = vmatpush1.msra.mxu0 %v1275
    %1312 = vmatprep.subr.mxu0 0.0
    %1313 = vmatpush1.msra.mxu0 %v1274
    %1314 = vmatprep.subr.mxu0 0.0
    %1315 = vmatpush1.msra.mxu0 %v1273
    %1316 = vmatprep.subr.mxu0 0.0
    %1317 = vmatpush1.msra.mxu0 %v1272
    %1318 = vmatprep.subr.mxu0 0.0
    %1319 = vmatpush1.msra.mxu0 %v1271
    %1320 = vmatprep.subr.mxu0 0.0
    %1321 = vmatpush2.msra.mxu0 0.0
    %1322 = vmatprep.subr.mxu0 0.0
    %1323 = vmatpush2.msra.mxu0 0.0
    %1324 = vmatprep.subr.mxu0 0.0
    %1325 = vmatpush2.msra.mxu0 0.0
    %1326 = vmatprep.subr.mxu0 0.0
    %1327 = vmatpush2.msra.mxu0 0.0
    %1328 = vmatprep.subr.mxu0 0.0
    %1329 = vmatpush2.msra.mxu0 0.0
    %1330 = vmatprep.subr.mxu0 0.0
    %1331 = vmatpush2.msra.mxu0 0.0
    %1332 = vmatprep.subr.mxu0 0.0
    %1333 = vmatpush2.msra.mxu0 0.0
    %1334 = vmatprep.subr.mxu0 0.0
    %1335 = vmatpush2.msra.mxu0 0.0
    %1336 = vmatprep.subr.mxu0 0.0
    %1337 = vmatpush2.msra.mxu0 0.0
    %1338 = vmatprep.subr.mxu0 0.0
    %1339 = vmatpush2.msra.mxu0 0.0
    %1340 = vmatprep.subr.mxu0 0.0
    %1341 = vmatpush2.msra.mxu0 0.0
    %1342 = vmatprep.subr.mxu0 0.0
    %1343 = vmatpush2.msra.mxu0 0.0
    %1344 = vmatprep.subr.mxu0 0.0
    %1345 = vmatpush2.msra.mxu0 0.0
    %1346 = vmatprep.subr.mxu0 0.0
    %1347 = vmatpush2.msra.mxu0 0.0
    %1348 = vmatprep.subr.mxu0 0.0
    %1349 = vmatpush2.msra.mxu0 0.0
    %1350 = vmatprep.subr.mxu0 0.0
    %1351 = vmatpush2.msra.mxu0 0.0
    %1352 = vmatprep.mubr.f32.mxu0 0.0
    %1353 = vmatmul.mubr.f32.gmra.mxu0 %v1270
    %v1354 = vpop.f32.mrf.mxu0
    %v1355 = vadd.f32 %v1287, %v1354
    %v1356 = vpop.f32.mrf.mxu0
    %1357 = vdwg.mxu0
    %v1358 = vsel %vm584, %v1355, -inf
    %1359 = vmax.xlane.f32.xlu0 %v1358
    %v1360 = vpop.xlane.xlu0 %1359
    %v1361 = vsub.f32 %v1355, %v1360
    %v1362 = vmul.f32 %v1361, 1.442695
    %v1363 = vpow.pop %v1362
    %v1364 = vsel %vm584, %v1363, 0.0
    %1365 = vadd.xlane.f32.xlu0 %v1364
    %v1366 = vpop.xlane.xlu0 %1365
    %v1367 = vrcp.pop %v1366
    %v1368 = vmul.f32 %v1363, %v1367
    %v1369 = vld [vmem:[%s1] sm:$0xff]
    %v1370 = vld [vmem:[%s1 + $0x8] sm:$0xff]
    %v1371 = vld [vmem:[%s1 + $0x10] sm:$0xff]
    %v1372 = vld [vmem:[%s1 + $0x18] sm:$0xff]
    %v1373 = vld [vmem:[%s1 + $0x20] sm:$0xff]
    %v1374 = vld [vmem:[%s1 + $0x28] sm:$0xff]
    %v1375 = vld [vmem:[%s1 + $0x30] sm:$0xff]
    %v1376 = vld [vmem:[%s1 + $0x38] sm:$0xff]
    %v1377 = vld [vmem:[%s1 + $0x40] sm:$0xff]
    %v1378 = vld [vmem:[%s1 + $0x48] sm:$0xff]
    %v1379 = vld [vmem:[%s1 + $0x50] sm:$0xff]
    %v1380 = vld [vmem:[%s1 + $0x58] sm:$0xff]
    %v1381 = vld [vmem:[%s1 + $0x60] sm:$0xff]
    %v1382 = vld [vmem:[%s1 + $0x68] sm:$0xff]
    %v1383 = vld [vmem:[%s1 + $0x70] sm:$0xff]
    %v1384 = vld [vmem:[%s1 + $0x78] sm:$0xff]
    %1385 = vmatprep.subr.mxu0 0.0
    %1386 = vmatpush1.msra.mxu0 %v1384
    %1387 = vmatprep.subr.mxu0 0.0
    %1388 = vmatpush1.msra.mxu0 %v1383
    %1389 = vmatprep.subr.mxu0 0.0
    %1390 = vmatpush1.msra.mxu0 %v1382
    %1391 = vmatprep.subr.mxu0 0.0
    %1392 = vmatpush1.msra.mxu0 %v1381
    %1393 = vmatprep.subr.mxu0 0.0
    %1394 = vmatpush1.msra.mxu0 %v1380
    %1395 = vmatprep.subr.mxu0 0.0
    %1396 = vmatpush1.msra.mxu0 %v1379
    %1397 = vmatprep.subr.mxu0 0.0
    %1398 = vmatpush1.msra.mxu0 %v1378
    %1399 = vmatprep.subr.mxu0 0.0
    %1400 = vmatpush1.msra.mxu0 %v1377
    %1401 = vmatprep.subr.mxu0 0.0
    %1402 = vmatpush1.msra.mxu0 %v1376
    %1403 = vmatprep.subr.mxu0 0.0
    %1404 = vmatpush1.msra.mxu0 %v1375
    %1405 = vmatprep.subr.mxu0 0.0
    %1406 = vmatpush1.msra.mxu0 %v1374
    %1407 = vmatprep.subr.mxu0 0.0
    %1408 = vmatpush1.msra.mxu0 %v1373
    %1409 = vmatprep.subr.mxu0 0.0
    %1410 = vmatpush1.msra.mxu0 %v1372
    %1411 = vmatprep.subr.mxu0 0.0
    %1412 = vmatpush1.msra.mxu0 %v1371
    %1413 = vmatprep.subr.mxu0 0.0
    %1414 = vmatpush1.msra.mxu0 %v1370
    %1415 = vmatprep.subr.mxu0 0.0
    %1416 = vmatpush1.msra.mxu0 %v1369
    %1417 = vmatprep.subr.mxu0 0.0
    %1418 = vmatpush2.msra.mxu0 0.0
    %1419 = vmatprep.subr.mxu0 0.0
    %1420 = vmatpush2.msra.mxu0 0.0
    %1421 = vmatprep.subr.mxu0 0.0
    %1422 = vmatpush2.msra.mxu0 0.0
    %1423 = vmatprep.subr.mxu0 0.0
    %1424 = vmatpush2.msra.mxu0 0.0
    %1425 = vmatprep.subr.mxu0 0.0
    %1426 = vmatpush2.msra.mxu0 0.0
    %1427 = vmatprep.subr.mxu0 0.0
    %1428 = vmatpush2.msra.mxu0 0.0
    %1429 = vmatprep.subr.mxu0 0.0
    %1430 = vmatpush2.msra.mxu0 0.0
    %1431 = vmatprep.subr.mxu0 0.0
    %1432 = vmatpush2.msra.mxu0 0.0
    %1433 = vmatprep.subr.mxu0 0.0
    %1434 = vmatpush2.msra.mxu0 0.0
    %1435 = vmatprep.subr.mxu0 0.0
    %1436 = vmatpush2.msra.mxu0 0.0
    %1437 = vmatprep.subr.mxu0 0.0
    %1438 = vmatpush2.msra.mxu0 0.0
    %1439 = vmatprep.subr.mxu0 0.0
    %1440 = vmatpush2.msra.mxu0 0.0
    %1441 = vmatprep.subr.mxu0 0.0
    %1442 = vmatpush2.msra.mxu0 0.0
    %1443 = vmatprep.subr.mxu0 0.0
    %1444 = vmatpush2.msra.mxu0 0.0
    %1445 = vmatprep.subr.mxu0 0.0
    %1446 = vmatpush2.msra.mxu0 0.0
    %1447 = vmatprep.subr.mxu0 0.0
    %1448 = vmatpush2.msra.mxu0 0.0
    %1449 = vmatprep.mubr.f32.mxu0 0.0
    %1450 = vmatmul.mubr.f32.gmra.mxu0 %v1368
    %v1451 = vpop.f32.mrf.mxu0
    %v1452 = vadd.f32 0.0, %v1451
    %v1453 = vpop.f32.mrf.mxu0
    %1454 = vdwg.mxu0
    %1455 = vst.msk [vmem:[#allocation2] sm:$0x1] %vm685, %v1270
    %1456 = vst.msk [vmem:[#allocation2 + $0x1] sm:$0x1] %vm685, %v1452
    %v1457 = vld [vmem:[#allocation2] sm:$0x3]
    %v1458 = vld [vmem:[%s7] sm:$0xff]
    %v1459 = vld [vmem:[%s7 + $0x8] sm:$0xff]
    %v1460 = vld [vmem:[%s7 + $0x10] sm:$0xff]
    %v1461 = vld [vmem:[%s7 + $0x18] sm:$0xff]
    %v1462 = vld [vmem:[%s7 + $0x20] sm:$0xff]
    %v1463 = vld [vmem:[%s7 + $0x28] sm:$0xff]
    %v1464 = vld [vmem:[%s7 + $0x30] sm:$0xff]
    %v1465 = vld [vmem:[%s7 + $0x38] sm:$0xff]
    %v1466 = vld [vmem:[%s7 + $0x40] sm:$0xff]
    %v1467 = vld [vmem:[%s7 + $0x48] sm:$0xff]
    %v1468 = vld [vmem:[%s7 + $0x50] sm:$0xff]
    %v1469 = vld [vmem:[%s7 + $0x58] sm:$0xff]
    %v1470 = vld [vmem:[%s7 + $0x60] sm:$0xff]
    %v1471 = vld [vmem:[%s7 + $0x68] sm:$0xff]
    %v1472 = vld [vmem:[%s7 + $0x70] sm:$0xff]
    %v1473 = vld [vmem:[%s7 + $0x78] sm:$0xff]
    %v1474 = vld [vmem:[%s7 + $0x80] sm:$0xff]
    %v1475 = vld [vmem:[%s7 + $0x88] sm:$0xff]
    %v1476 = vld [vmem:[%s7 + $0x90] sm:$0xff]
    %v1477 = vld [vmem:[%s7 + $0x98] sm:$0xff]
    %v1478 = vld [vmem:[%s7 + $0xa0] sm:$0xff]
    %v1479 = vld [vmem:[%s7 + $0xa8] sm:$0xff]
    %v1480 = vld [vmem:[%s7 + $0xb0] sm:$0xff]
    %v1481 = vld [vmem:[%s7 + $0xb8] sm:$0xff]
    %v1482 = vld [vmem:[%s7 + $0xc0] sm:$0xff]
    %v1483 = vld [vmem:[%s7 + $0xc8] sm:$0xff]
    %v1484 = vld [vmem:[%s7 + $0xd0] sm:$0xff]
    %v1485 = vld [vmem:[%s7 + $0xd8] sm:$0xff]
    %v1486 = vld [vmem:[%s7 + $0xe0] sm:$0xff]
    %v1487 = vld [vmem:[%s7 + $0xe8] sm:$0xff]
    %v1488 = vld [vmem:[%s7 + $0xf0] sm:$0xff]
    %v1489 = vld [vmem:[%s7 + $0xf8] sm:$0xff]
    %v1490 = vld [vmem:[%s8] sm:$0x1]
    %v1492 = vlaneseq
    %v1493 = vshrl.u32 %v1492, 7
    %v1494 = vsub.s32 0, %v1493
    %v1495 = vrot.slane %v1457, %v1494
    %v1496 = vlaneseq
    %v1497 = vshrl.u32 %v1496, 7
    %v1498 = vsub.s32 1, %v1497
    %v1499 = vrot.slane %v1457, %v1498
    %1502 = vmatprep.subr.mxu0 0.0
    %1503 = vmatpush1.msra.mxu0 %v1473
    %1504 = vmatprep.subr.mxu0 0.0
    %1505 = vmatpush1.msra.mxu0 %v1472
    %1506 = vmatprep.subr.mxu0 0.0
    %1507 = vmatpush1.msra.mxu0 %v1471
    %1508 = vmatprep.subr.mxu0 0.0
    %1509 = vmatpush1.msra.mxu0 %v1470
    %1510 = vmatprep.subr.mxu0 0.0
    %1511 = vmatpush1.msra.mxu0 %v1469
    %1512 = vmatprep.subr.mxu0 0.0
    %1513 = vmatpush1.msra.mxu0 %v1468
    %1514 = vmatprep.subr.mxu0 0.0
    %1515 = vmatpush1.msra.mxu0 %v1467
    %1516 = vmatprep.subr.mxu0 0.0
    %1517 = vmatpush1.msra.mxu0 %v1466
    %1518 = vmatprep.subr.mxu0 0.0
    %1519 = vmatpush1.msra.mxu0 %v1465
    %1520 = vmatprep.subr.mxu0 0.0
    %1521 = vmatpush1.msra.mxu0 %v1464
    %1522 = vmatprep.subr.mxu0 0.0
    %1523 = vmatpush1.msra.mxu0 %v1463
    %1524 = vmatprep.subr.mxu0 0.0
    %1525 = vmatpush1.msra.mxu0 %v1462
    %1526 = vmatprep.subr.mxu0 0.0
    %1527 = vmatpush1.msra.mxu0 %v1461
    %1528 = vmatprep.subr.mxu0 0.0
    %1529 = vmatpush1.msra.mxu0 %v1460
    %1530 = vmatprep.subr.mxu0 0.0
    %1531 = vmatpush1.msra.mxu0 %v1459
    %1532 = vmatprep.subr.mxu0 0.0
    %1533 = vmatpush1.msra.mxu0 %v1458
    %1534 = vmatprep.subr.mxu0 0.0
    %1535 = vmatpush2.msra.mxu0 %v1489
    %1536 = vmatprep.subr.mxu0 0.0
    %1537 = vmatpush2.msra.mxu0 %v1488
    %1538 = vmatprep.subr.mxu0 0.0
    %1539 = vmatpush2.msra.mxu0 %v1487
    %1540 = vmatprep.subr.mxu0 0.0
    %1541 = vmatpush2.msra.mxu0 %v1486
    %1542 = vmatprep.subr.mxu0 0.0
    %1543 = vmatpush2.msra.mxu0 %v1485
    %1544 = vmatprep.subr.mxu0 0.0
    %1545 = vmatpush2.msra.mxu0 %v1484
    %1546 = vmatprep.subr.mxu0 0.0
    %1547 = vmatpush2.msra.mxu0 %v1483
    %1548 = vmatprep.subr.mxu0 0.0
    %1549 = vmatpush2.msra.mxu0 %v1482
    %1550 = vmatprep.subr.mxu0 0.0
    %1551 = vmatpush2.msra.mxu0 %v1481
    %1552 = vmatprep.subr.mxu0 0.0
    %1553 = vmatpush2.msra.mxu0 %v1480
    %1554 = vmatprep.subr.mxu0 0.0
    %1555 = vmatpush2.msra.mxu0 %v1479
    %1556 = vmatprep.subr.mxu0 0.0
    %1557 = vmatpush2.msra.mxu0 %v1478
    %1558 = vmatprep.subr.mxu0 0.0
    %1559 = vmatpush2.msra.mxu0 %v1477
    %1560 = vmatprep.subr.mxu0 0.0
    %1561 = vmatpush2.msra.mxu0 %v1476
    %1562 = vmatprep.subr.mxu0 0.0
    %1563 = vmatpush2.msra.mxu0 %v1475
    %1564 = vmatprep.subr.mxu0 0.0
    %1565 = vmatpush2.msra.mxu0 %v1474
    %1566 = vmatprep.mubr.f32.mxu0 %v1499
    %1567 = vmatmul.mubr.f32.gmra.mxu0 %v1495
    %v1568 = vpop.f32.mrf.mxu0
    %v1569 = vadd.f32 %v1490, %v1568
    %v1570 = vpop.f32.mrf.mxu0
    %1571 = vdwg.mxu0
    %v1572 = vsel %vm584, %v1569, -inf
    %1573 = vmax.xlane.f32.xlu0 %v1572
    %v1574 = vpop.xlane.xlu0 %1573
    %v1575 = vsub.f32 %v1569, %v1574
    %v1576 = vmul.f32 %v1575, 1.442695
    %v1577 = vpow.pop %v1576
    %v1578 = vsel %vm584, %v1577, 0.0
    %1579 = vadd.xlane.f32.xlu0 %v1578
    %v1580 = vpop.xlane.xlu0 %1579
    %v1581 = vlog2.pop %v1580
    %v1582 = vmul.f32 %v1581, 0.6931472
    %v1583 = vadd.f32 %v1574, %v1582
    %v1584 = vsub.f32 %v1569, %v1583
    %1585 = vst [vmem:[#allocation3 + $0x1] sm:$0x1] %v1584
    %1586 = vst [vmem:[#allocation5 + $0x1] sm:$0x1] %v1452
    %1587 = vst [vmem:[#allocation7 + $0x1] sm:$0x1] %v1270
    %1588 = vst [vmem:[#allocation8 + $0x1] sm:$0x1] %v1368
    %s1589 = scalar_lea.vmem %s0, 2
    %v1590 = vld [vmem:[%s1589] ss:$8 sm:$0x7]
    %v1591 = vld [vmem:[%s4] sm:$0xff]
    %v1592 = vld [vmem:[%s4 + $0x8] sm:$0xff]
    %v1593 = vld [vmem:[%s4 + $0x10] sm:$0xff]
    %v1594 = vld [vmem:[%s4 + $0x18] sm:$0xff]
    %v1595 = vld [vmem:[%s4 + $0x20] sm:$0xff]
    %v1596 = vld [vmem:[%s4 + $0x28] sm:$0xff]
    %v1597 = vld [vmem:[%s4 + $0x30] sm:$0xff]
    %v1598 = vld [vmem:[%s4 + $0x38] sm:$0xff]
    %v1599 = vld [vmem:[%s4 + $0x40] sm:$0xff]
    %v1600 = vld [vmem:[%s4 + $0x48] sm:$0xff]
    %v1601 = vld [vmem:[%s4 + $0x50] sm:$0xff]
    %v1602 = vld [vmem:[%s4 + $0x58] sm:$0xff]
    %v1603 = vld [vmem:[%s4 + $0x60] sm:$0xff]
    %v1604 = vld [vmem:[%s4 + $0x68] sm:$0xff]
    %v1605 = vld [vmem:[%s4 + $0x70] sm:$0xff]
    %v1606 = vld [vmem:[%s4 + $0x78] sm:$0xff]
    %v1607 = vld [vmem:[%s4 + $0x80] sm:$0xff]
    %v1608 = vld [vmem:[%s4 + $0x88] sm:$0xff]
    %v1609 = vld [vmem:[%s4 + $0x90] sm:$0xff]
    %v1610 = vld [vmem:[%s4 + $0x98] sm:$0xff]
    %v1611 = vld [vmem:[%s4 + $0xa0] sm:$0xff]
    %v1612 = vld [vmem:[%s4 + $0xa8] sm:$0xff]
    %v1613 = vld [vmem:[%s4 + $0xb0] sm:$0xff]
    %v1614 = vld [vmem:[%s4 + $0xb8] sm:$0xff]
    %v1615 = vld [vmem:[%s4 + $0xc0] sm:$0xff]
    %v1616 = vld [vmem:[%s4 + $0xc8] sm:$0xff]
    %v1617 = vld [vmem:[%s4 + $0xd0] sm:$0xff]
    %v1618 = vld [vmem:[%s4 + $0xd8] sm:$0xff]
    %v1619 = vld [vmem:[%s4 + $0xe0] sm:$0xff]
    %v1620 = vld [vmem:[%s4 + $0xe8] sm:$0xff]
    %v1621 = vld [vmem:[%s4 + $0xf0] sm:$0xff]
    %v1622 = vld [vmem:[%s4 + $0xf8] sm:$0xff]
    %v1623 = vld [vmem:[%s4 + $0x100] sm:$0xff]
    %v1624 = vld [vmem:[%s4 + $0x108] sm:$0xff]
    %v1625 = vld [vmem:[%s4 + $0x110] sm:$0xff]
    %v1626 = vld [vmem:[%s4 + $0x118] sm:$0xff]
    %v1627 = vld [vmem:[%s4 + $0x120] sm:$0xff]
    %v1628 = vld [vmem:[%s4 + $0x128] sm:$0xff]
    %v1629 = vld [vmem:[%s4 + $0x130] sm:$0xff]
    %v1630 = vld [vmem:[%s4 + $0x138] sm:$0xff]
    %v1631 = vld [vmem:[%s4 + $0x140] sm:$0xff]
    %v1632 = vld [vmem:[%s4 + $0x148] sm:$0xff]
    %v1633 = vld [vmem:[%s4 + $0x150] sm:$0xff]
    %v1634 = vld [vmem:[%s4 + $0x158] sm:$0xff]
    %v1635 = vld [vmem:[%s4 + $0x160] sm:$0xff]
    %v1636 = vld [vmem:[%s4 + $0x168] sm:$0xff]
    %v1637 = vld [vmem:[%s4 + $0x170] sm:$0xff]
    %v1638 = vld [vmem:[%s4 + $0x178] sm:$0xff]
    %1639 = vmatprep.subr.mxu0 %v1637
    %1640 = vmatpush1.msra.mxu0 %v1636
    %1641 = vmatprep.subr.mxu0 %v1634
    %1642 = vmatpush1.msra.mxu0 %v1633
    %1643 = vmatprep.subr.mxu0 %v1631
    %1644 = vmatpush1.msra.mxu0 %v1630
    %1645 = vmatprep.subr.mxu0 %v1628
    %1646 = vmatpush1.msra.mxu0 %v1627
    %1647 = vmatprep.subr.mxu0 %v1625
    %1648 = vmatpush1.msra.mxu0 %v1624
    %1649 = vmatprep.subr.mxu0 %v1622
    %1650 = vmatpush1.msra.mxu0 %v1621
    %1651 = vmatprep.subr.mxu0 %v1619
    %1652 = vmatpush1.msra.mxu0 %v1618
    %1653 = vmatprep.subr.mxu0 %v1616
    %1654 = vmatpush1.msra.mxu0 %v1615
    %1655 = vmatprep.subr.mxu0 %v1613
    %1656 = vmatpush1.msra.mxu0 %v1612
    %1657 = vmatprep.subr.mxu0 %v1610
    %1658 = vmatpush1.msra.mxu0 %v1609
    %1659 = vmatprep.subr.mxu0 %v1607
    %1660 = vmatpush1.msra.mxu0 %v1606
    %1661 = vmatprep.subr.mxu0 %v1604
    %1662 = vmatpush1.msra.mxu0 %v1603
    %1663 = vmatprep.subr.mxu0 %v1601
    %1664 = vmatpush1.msra.mxu0 %v1600
    %1665 = vmatprep.subr.mxu0 %v1598
    %1666 = vmatpush1.msra.mxu0 %v1597
    %1667 = vmatprep.subr.mxu0 %v1595
    %1668 = vmatpush1.msra.mxu0 %v1594
    %1669 = vmatprep.subr.mxu0 %v1592
    %1670 = vmatpush1.msra.mxu0 %v1591
    %1671 = vmatprep.subr.mxu0 0.0
    %1672 = vmatpush2.msra.mxu0 0.0
    %1673 = vmatprep.subr.mxu0 0.0
    %1674 = vmatpush2.msra.mxu0 0.0
    %1675 = vmatprep.subr.mxu0 0.0
    %1676 = vmatpush2.msra.mxu0 0.0
    %1677 = vmatprep.subr.mxu0 0.0
    %1678 = vmatpush2.msra.mxu0 0.0
    %1679 = vmatprep.subr.mxu0 0.0
    %1680 = vmatpush2.msra.mxu0 0.0
    %1681 = vmatprep.subr.mxu0 0.0
    %1682 = vmatpush2.msra.mxu0 0.0
    %1683 = vmatprep.subr.mxu0 0.0
    %1684 = vmatpush2.msra.mxu0 0.0
    %1685 = vmatprep.subr.mxu0 0.0
    %1686 = vmatpush2.msra.mxu0 0.0
    %1687 = vmatprep.subr.mxu0 0.0
    %1688 = vmatpush2.msra.mxu0 0.0
    %1689 = vmatprep.subr.mxu0 0.0
    %1690 = vmatpush2.msra.mxu0 0.0
    %1691 = vmatprep.subr.mxu0 0.0
    %1692 = vmatpush2.msra.mxu0 0.0
    %1693 = vmatprep.subr.mxu0 0.0
    %1694 = vmatpush2.msra.mxu0 0.0
    %1695 = vmatprep.subr.mxu0 0.0
    %1696 = vmatpush2.msra.mxu0 0.0
    %1697 = vmatprep.subr.mxu0 0.0
    %1698 = vmatpush2.msra.mxu0 0.0
    %1699 = vmatprep.subr.mxu0 0.0
    %1700 = vmatpush2.msra.mxu0 0.0
    %1701 = vmatprep.subr.mxu0 0.0
    %1702 = vmatpush2.msra.mxu0 0.0
    %1703 = vmatprep.mubr.f32.mxu0 0.0
    %1704 = vmatmul.mubr.f32.gmra.mxu0 %v1452
    %v1705 = vpop.f32.mrf.mxu0
    %v1706 = vadd.f32 0.0, %v1705
    %v1707 = vpop.f32.mrf.mxu0
    %v1708 = vadd.f32 0.0, %v1707
    %1709 = vdwg.mxu0
    %1710 = vmatprep.subr.mxu0 0.0
    %1711 = vmatpush1.msra.mxu0 %v1638
    %1712 = vmatprep.subr.mxu0 0.0
    %1713 = vmatpush1.msra.mxu0 %v1635
    %1714 = vmatprep.subr.mxu0 0.0
    %1715 = vmatpush1.msra.mxu0 %v1632
    %1716 = vmatprep.subr.mxu0 0.0
    %1717 = vmatpush1.msra.mxu0 %v1629
    %1718 = vmatprep.subr.mxu0 0.0
    %1719 = vmatpush1.msra.mxu0 %v1626
    %1720 = vmatprep.subr.mxu0 0.0
    %1721 = vmatpush1.msra.mxu0 %v1623
    %1722 = vmatprep.subr.mxu0 0.0
    %1723 = vmatpush1.msra.mxu0 %v1620
    %1724 = vmatprep.subr.mxu0 0.0
    %1725 = vmatpush1.msra.mxu0 %v1617
    %1726 = vmatprep.subr.mxu0 0.0
    %1727 = vmatpush1.msra.mxu0 %v1614
    %1728 = vmatprep.subr.mxu0 0.0
    %1729 = vmatpush1.msra.mxu0 %v1611
    %1730 = vmatprep.subr.mxu0 0.0
    %1731 = vmatpush1.msra.mxu0 %v1608
    %1732 = vmatprep.subr.mxu0 0.0
    %1733 = vmatpush1.msra.mxu0 %v1605
    %1734 = vmatprep.subr.mxu0 0.0
    %1735 = vmatpush1.msra.mxu0 %v1602
    %1736 = vmatprep.subr.mxu0 0.0
    %1737 = vmatpush1.msra.mxu0 %v1599
    %1738 = vmatprep.subr.mxu0 0.0
    %1739 = vmatpush1.msra.mxu0 %v1596
    %1740 = vmatprep.subr.mxu0 0.0
    %1741 = vmatpush1.msra.mxu0 %v1593
    %1742 = vmatprep.subr.mxu0 0.0
    %1743 = vmatpush2.msra.mxu0 0.0
    %1744 = vmatprep.subr.mxu0 0.0
    %1745 = vmatpush2.msra.mxu0 0.0
    %1746 = vmatprep.subr.mxu0 0.0
    %1747 = vmatpush2.msra.mxu0 0.0
    %1748 = vmatprep.subr.mxu0 0.0
    %1749 = vmatpush2.msra.mxu0 0.0
    %1750 = vmatprep.subr.mxu0 0.0
    %1751 = vmatpush2.msra.mxu0 0.0
    %1752 = vmatprep.subr.mxu0 0.0
    %1753 = vmatpush2.msra.mxu0 0.0
    %1754 = vmatprep.subr.mxu0 0.0
    %1755 = vmatpush2.msra.mxu0 0.0
    %1756 = vmatprep.subr.mxu0 0.0
    %1757 = vmatpush2.msra.mxu0 0.0
    %1758 = vmatprep.subr.mxu0 0.0
    %1759 = vmatpush2.msra.mxu0 0.0
    %1760 = vmatprep.subr.mxu0 0.0
    %1761 = vmatpush2.msra.mxu0 0.0
    %1762 = vmatprep.subr.mxu0 0.0
    %1763 = vmatpush2.msra.mxu0 0.0
    %1764 = vmatprep.subr.mxu0 0.0
    %1765 = vmatpush2.msra.mxu0 0.0
    %1766 = vmatprep.subr.mxu0 0.0
    %1767 = vmatpush2.msra.mxu0 0.0
    %1768 = vmatprep.subr.mxu0 0.0
    %1769 = vmatpush2.msra.mxu0 0.0
    %1770 = vmatprep.subr.mxu0 0.0
    %1771 = vmatpush2.msra.mxu0 0.0
    %1772 = vmatprep.subr.mxu0 0.0
    %1773 = vmatpush2.msra.mxu0 0.0
    %1774 = vmatprep.mubr.f32.mxu0 0.0
    %1775 = vmatmul.mubr.f32.gmra.mxu0 %v1452
    %v1776 = vpop.f32.mrf.mxu0
    %v1777 = vadd.f32 0.0, %v1776
    %v1778 = vpop.f32.mrf.mxu0
    %1779 = vdwg.mxu0
    %v1783 = vcombine.low %v1706, %v1708
    %v1785 = vunpack.c.l.s4 1966171168
    %v1786 = vunpack.c.0.s8 %v1785
    %v1787 = vlaneseq
    %v1788 = vshrl.u32 %v1787, 7
    %v1789 = vsub.s32 %v1786, %v1788
    %v1790 = vrot.slane %v1783, %v1789
    %v1792 = vunpack.c.l.s4 1966171168
    %v1793 = vunpack.c.0.s8 %v1792
    %v1794 = vlaneseq
    %v1795 = vshrl.u32 %v1794, 7
    %v1796 = vsub.s32 %v1793, %v1795
    %v1797 = vrot.slane %v1777, %v1796
    %v1798 = vcombine.low %v1790, %v1797
    %v1800 = vunpack.c.l.s4 1966171168
    %v1801 = vunpack.c.0.s8 %v1800
    %v1802 = vlaneseq
    %v1803 = vshrl.u32 %v1802, 7
    %v1804 = vsub.s32 %v1801, %v1803
    %v1805 = vrot.slane %v1798, %v1804
    %v1807 = vadd.f32 %v1590, %v1805
    %v1808 = vld [vmem:[%s5] sm:$0xff]
    %v1809 = vld [vmem:[%s5 + $0x8] sm:$0xff]
    %v1810 = vld [vmem:[%s5 + $0x10] sm:$0xff]
    %v1811 = vld [vmem:[%s5 + $0x18] sm:$0xff]
    %v1812 = vld [vmem:[%s5 + $0x20] sm:$0xff]
    %v1813 = vld [vmem:[%s5 + $0x28] sm:$0xff]
    %v1814 = vld [vmem:[%s5 + $0x30] sm:$0xff]
    %v1815 = vld [vmem:[%s5 + $0x38] sm:$0xff]
    %v1816 = vld [vmem:[%s5 + $0x40] sm:$0xff]
    %v1817 = vld [vmem:[%s5 + $0x48] sm:$0xff]
    %v1818 = vld [vmem:[%s5 + $0x50] sm:$0xff]
    %v1819 = vld [vmem:[%s5 + $0x58] sm:$0xff]
    %v1820 = vld [vmem:[%s5 + $0x60] sm:$0xff]
    %v1821 = vld [vmem:[%s5 + $0x68] sm:$0xff]
    %v1822 = vld [vmem:[%s5 + $0x70] sm:$0xff]
    %v1823 = vld [vmem:[%s5 + $0x78] sm:$0xff]
    %v1824 = vld [vmem:[%s5 + $0x80] sm:$0xff]
    %v1825 = vld [vmem:[%s5 + $0x88] sm:$0xff]
    %v1826 = vld [vmem:[%s5 + $0x90] sm:$0xff]
    %v1827 = vld [vmem:[%s5 + $0x98] sm:$0xff]
    %v1828 = vld [vmem:[%s5 + $0xa0] sm:$0xff]
    %v1829 = vld [vmem:[%s5 + $0xa8] sm:$0xff]
    %v1830 = vld [vmem:[%s5 + $0xb0] sm:$0xff]
    %v1831 = vld [vmem:[%s5 + $0xb8] sm:$0xff]
    %v1832 = vld [vmem:[%s5 + $0xc0] sm:$0xff]
    %v1833 = vld [vmem:[%s5 + $0xc8] sm:$0xff]
    %v1834 = vld [vmem:[%s5 + $0xd0] sm:$0xff]
    %v1835 = vld [vmem:[%s5 + $0xd8] sm:$0xff]
    %v1836 = vld [vmem:[%s5 + $0xe0] sm:$0xff]
    %v1837 = vld [vmem:[%s5 + $0xe8] sm:$0xff]
    %v1838 = vld [vmem:[%s5 + $0xf0] sm:$0xff]
    %v1839 = vld [vmem:[%s5 + $0xf8] sm:$0xff]
    %v1840 = vld [vmem:[%s5 + $0x100] sm:$0xff]
    %v1841 = vld [vmem:[%s5 + $0x108] sm:$0xff]
    %v1842 = vld [vmem:[%s5 + $0x110] sm:$0xff]
    %v1843 = vld [vmem:[%s5 + $0x118] sm:$0xff]
    %v1844 = vld [vmem:[%s5 + $0x120] sm:$0xff]
    %v1845 = vld [vmem:[%s5 + $0x128] sm:$0xff]
    %v1846 = vld [vmem:[%s5 + $0x130] sm:$0xff]
    %v1847 = vld [vmem:[%s5 + $0x138] sm:$0xff]
    %v1848 = vld [vmem:[%s5 + $0x140] sm:$0xff]
    %v1849 = vld [vmem:[%s5 + $0x148] sm:$0xff]
    %v1850 = vld [vmem:[%s5 + $0x150] sm:$0xff]
    %v1851 = vld [vmem:[%s5 + $0x158] sm:$0xff]
    %v1852 = vld [vmem:[%s5 + $0x160] sm:$0xff]
    %v1853 = vld [vmem:[%s5 + $0x168] sm:$0xff]
    %v1854 = vld [vmem:[%s5 + $0x170] sm:$0xff]
    %v1855 = vld [vmem:[%s5 + $0x178] sm:$0xff]
    %v1856 = vld [vmem:[%s6] sm:$0x7]
    %v1858 = vlaneseq
    %v1859 = vshrl.u32 %v1858, 7
    %v1860 = vsub.s32 0, %v1859
    %v1861 = vrot.slane %v1856, %v1860
    %v1862 = vlaneseq
    %v1863 = vshrl.u32 %v1862, 7
    %v1864 = vsub.s32 1, %v1863
    %v1865 = vrot.slane %v1856, %v1864
    %v1866 = vlaneseq
    %v1867 = vshrl.u32 %v1866, 7
    %v1868 = vsub.s32 2, %v1867
    %v1869 = vrot.slane %v1856, %v1868
    %1873 = vmatprep.subr.mxu0 %v1854
    %1874 = vmatpush1.msra.mxu0 %v1853
    %1875 = vmatprep.subr.mxu0 %v1851
    %1876 = vmatpush1.msra.mxu0 %v1850
    %1877 = vmatprep.subr.mxu0 %v1848
    %1878 = vmatpush1.msra.mxu0 %v1847
    %1879 = vmatprep.subr.mxu0 %v1845
    %1880 = vmatpush1.msra.mxu0 %v1844
    %1881 = vmatprep.subr.mxu0 %v1842
    %1882 = vmatpush1.msra.mxu0 %v1841
    %1883 = vmatprep.subr.mxu0 %v1839
    %1884 = vmatpush1.msra.mxu0 %v1838
    %1885 = vmatprep.subr.mxu0 %v1836
    %1886 = vmatpush1.msra.mxu0 %v1835
    %1887 = vmatprep.subr.mxu0 %v1833
    %1888 = vmatpush1.msra.mxu0 %v1832
    %1889 = vmatprep.subr.mxu0 %v1830
    %1890 = vmatpush1.msra.mxu0 %v1829
    %1891 = vmatprep.subr.mxu0 %v1827
    %1892 = vmatpush1.msra.mxu0 %v1826
    %1893 = vmatprep.subr.mxu0 %v1824
    %1894 = vmatpush1.msra.mxu0 %v1823
    %1895 = vmatprep.subr.mxu0 %v1821
    %1896 = vmatpush1.msra.mxu0 %v1820
    %1897 = vmatprep.subr.mxu0 %v1818
    %1898 = vmatpush1.msra.mxu0 %v1817
    %1899 = vmatprep.subr.mxu0 %v1815
    %1900 = vmatpush1.msra.mxu0 %v1814
    %1901 = vmatprep.subr.mxu0 %v1812
    %1902 = vmatpush1.msra.mxu0 %v1811
    %1903 = vmatprep.subr.mxu0 %v1809
    %1904 = vmatpush1.msra.mxu0 %v1808
    %1905 = vmatprep.subr.mxu0 0.0
    %1906 = vmatpush2.msra.mxu0 0.0
    %1907 = vmatprep.subr.mxu0 0.0
    %1908 = vmatpush2.msra.mxu0 0.0
    %1909 = vmatprep.subr.mxu0 0.0
    %1910 = vmatpush2.msra.mxu0 0.0
    %1911 = vmatprep.subr.mxu0 0.0
    %1912 = vmatpush2.msra.mxu0 0.0
    %1913 = vmatprep.subr.mxu0 0.0
    %1914 = vmatpush2.msra.mxu0 0.0
    %1915 = vmatprep.subr.mxu0 0.0
    %1916 = vmatpush2.msra.mxu0 0.0
    %1917 = vmatprep.subr.mxu0 0.0
    %1918 = vmatpush2.msra.mxu0 0.0
    %1919 = vmatprep.subr.mxu0 0.0
    %1920 = vmatpush2.msra.mxu0 0.0
    %1921 = vmatprep.subr.mxu0 0.0
    %1922 = vmatpush2.msra.mxu0 0.0
    %1923 = vmatprep.subr.mxu0 0.0
    %1924 = vmatpush2.msra.mxu0 0.0
    %1925 = vmatprep.subr.mxu0 0.0
    %1926 = vmatpush2.msra.mxu0 0.0
    %1927 = vmatprep.subr.mxu0 0.0
    %1928 = vmatpush2.msra.mxu0 0.0
    %1929 = vmatprep.subr.mxu0 0.0
    %1930 = vmatpush2.msra.mxu0 0.0
    %1931 = vmatprep.subr.mxu0 0.0
    %1932 = vmatpush2.msra.mxu0 0.0
    %1933 = vmatprep.subr.mxu0 0.0
    %1934 = vmatpush2.msra.mxu0 0.0
    %1935 = vmatprep.subr.mxu0 0.0
    %1936 = vmatpush2.msra.mxu0 0.0
    %1937 = vmatprep.mubr.f32.mxu0 0.0
    %1938 = vmatmul.mubr.f32.gmra.mxu0 %v1270
    %v1939 = vpop.f32.mrf.mxu0
    %v1940 = vadd.f32 %v1861, %v1939
    %v1941 = vpop.f32.mrf.mxu0
    %v1942 = vadd.f32 %v1865, %v1941
    %1943 = vdwg.mxu0
    %1944 = vmatprep.subr.mxu0 0.0
    %1945 = vmatpush1.msra.mxu0 %v1855
    %1946 = vmatprep.subr.mxu0 0.0
    %1947 = vmatpush1.msra.mxu0 %v1852
    %1948 = vmatprep.subr.mxu0 0.0
    %1949 = vmatpush1.msra.mxu0 %v1849
    %1950 = vmatprep.subr.mxu0 0.0
    %1951 = vmatpush1.msra.mxu0 %v1846
    %1952 = vmatprep.subr.mxu0 0.0
    %1953 = vmatpush1.msra.mxu0 %v1843
    %1954 = vmatprep.subr.mxu0 0.0
    %1955 = vmatpush1.msra.mxu0 %v1840
    %1956 = vmatprep.subr.mxu0 0.0
    %1957 = vmatpush1.msra.mxu0 %v1837
    %1958 = vmatprep.subr.mxu0 0.0
    %1959 = vmatpush1.msra.mxu0 %v1834
    %1960 = vmatprep.subr.mxu0 0.0
    %1961 = vmatpush1.msra.mxu0 %v1831
    %1962 = vmatprep.subr.mxu0 0.0
    %1963 = vmatpush1.msra.mxu0 %v1828
    %1964 = vmatprep.subr.mxu0 0.0
    %1965 = vmatpush1.msra.mxu0 %v1825
    %1966 = vmatprep.subr.mxu0 0.0
    %1967 = vmatpush1.msra.mxu0 %v1822
    %1968 = vmatprep.subr.mxu0 0.0
    %1969 = vmatpush1.msra.mxu0 %v1819
    %1970 = vmatprep.subr.mxu0 0.0
    %1971 = vmatpush1.msra.mxu0 %v1816
    %1972 = vmatprep.subr.mxu0 0.0
    %1973 = vmatpush1.msra.mxu0 %v1813
    %1974 = vmatprep.subr.mxu0 0.0
    %1975 = vmatpush1.msra.mxu0 %v1810
    %1976 = vmatprep.subr.mxu0 0.0
    %1977 = vmatpush2.msra.mxu0 0.0
    %1978 = vmatprep.subr.mxu0 0.0
    %1979 = vmatpush2.msra.mxu0 0.0
    %1980 = vmatprep.subr.mxu0 0.0
    %1981 = vmatpush2.msra.mxu0 0.0
    %1982 = vmatprep.subr.mxu0 0.0
    %1983 = vmatpush2.msra.mxu0 0.0
    %1984 = vmatprep.subr.mxu0 0.0
    %1985 = vmatpush2.msra.mxu0 0.0
    %1986 = vmatprep.subr.mxu0 0.0
    %1987 = vmatpush2.msra.mxu0 0.0
    %1988 = vmatprep.subr.mxu0 0.0
    %1989 = vmatpush2.msra.mxu0 0.0
    %1990 = vmatprep.subr.mxu0 0.0
    %1991 = vmatpush2.msra.mxu0 0.0
    %1992 = vmatprep.subr.mxu0 0.0
    %1993 = vmatpush2.msra.mxu0 0.0
    %1994 = vmatprep.subr.mxu0 0.0
    %1995 = vmatpush2.msra.mxu0 0.0
    %1996 = vmatprep.subr.mxu0 0.0
    %1997 = vmatpush2.msra.mxu0 0.0
    %1998 = vmatprep.subr.mxu0 0.0
    %1999 = vmatpush2.msra.mxu0 0.0
    %2000 = vmatprep.subr.mxu0 0.0
    %2001 = vmatpush2.msra.mxu0 0.0
    %2002 = vmatprep.subr.mxu0 0.0
    %2003 = vmatpush2.msra.mxu0 0.0
    %2004 = vmatprep.subr.mxu0 0.0
    %2005 = vmatpush2.msra.mxu0 0.0
    %2006 = vmatprep.subr.mxu0 0.0
    %2007 = vmatpush2.msra.mxu0 0.0
    %2008 = vmatprep.mubr.f32.mxu0 0.0
    %2009 = vmatmul.mubr.f32.gmra.mxu0 %v1270
    %v2010 = vpop.f32.mrf.mxu0
    %v2011 = vadd.f32 %v1869, %v2010
    %v2012 = vpop.f32.mrf.mxu0
    %2013 = vdwg.mxu0
    %v2014 = vadd.f32 %v1807, %v1940
    %v2015 = vxor.u32 %v2014, 2147483648
    %v2016 = vmul.f32 %v2015, 1.442695
    %v2017 = vpow.pop %v2016
    %v2018 = vadd.f32 %v2017, 1.0
    %v2019 = vrcp.pop %v2018
    %v2020 = vmul.f32 1.0, %v2019
    %v2022 = vrot.slane %v1807, 1
    %v2024 = vadd.f32 %v2022, %v1942
    %v2025 = vxor.u32 %v2024, 2147483648
    %v2026 = vmul.f32 %v2025, 1.442695
    %v2027 = vpow.pop %v2026
    %v2028 = vadd.f32 %v2027, 1.0
    %v2029 = vrcp.pop %v2028
    %v2030 = vmul.f32 1.0, %v2029
    %v2031 = vmul.f32 %v2020, %v2011
    %v2032 = vrot.slane %v1807, 2
    %v2034 = vadd.f32 %v2032, %v2031
    %v2035 = vtanh.pop %v2034
    %v2036 = vsub.f32 1.0, %v2030
    %v2037 = vmul.f32 %v2036, %v2035
    %v2038 = vmul.f32 %v2030, %v1270
    %v2039 = vadd.f32 %v2037, %v2038
    %v2040 = vld [vmem:[%s2] sm:$0xff]
    %v2041 = vld [vmem:[%s2 + $0x8] sm:$0xff]
    %v2042 = vld [vmem:[%s2 + $0x10] sm:$0xff]
    %v2043 = vld [vmem:[%s2 + $0x18] sm:$0xff]
    %v2044 = vld [vmem:[%s2 + $0x20] sm:$0xff]
    %v2045 = vld [vmem:[%s2 + $0x28] sm:$0xff]
    %v2046 = vld [vmem:[%s2 + $0x30] sm:$0xff]
    %v2047 = vld [vmem:[%s2 + $0x38] sm:$0xff]
    %v2048 = vld [vmem:[%s2 + $0x40] sm:$0xff]
    %v2049 = vld [vmem:[%s2 + $0x48] sm:$0xff]
    %v2050 = vld [vmem:[%s2 + $0x50] sm:$0xff]
    %v2051 = vld [vmem:[%s2 + $0x58] sm:$0xff]
    %v2052 = vld [vmem:[%s2 + $0x60] sm:$0xff]
    %v2053 = vld [vmem:[%s2 + $0x68] sm:$0xff]
    %v2054 = vld [vmem:[%s2 + $0x70] sm:$0xff]
    %v2055 = vld [vmem:[%s2 + $0x78] sm:$0xff]
    %v2056 = vld [vmem:[%s3] sm:$0x1]
    %2057 = vmatprep.subr.mxu0 0.0
    %2058 = vmatpush1.msra.mxu0 %v2055
    %2059 = vmatprep.subr.mxu0 0.0
    %2060 = vmatpush1.msra.mxu0 %v2054
    %2061 = vmatprep.subr.mxu0 0.0
    %2062 = vmatpush1.msra.mxu0 %v2053
    %2063 = vmatprep.subr.mxu0 0.0
    %2064 = vmatpush1.msra.mxu0 %v2052
    %2065 = vmatprep.subr.mxu0 0.0
    %2066 = vmatpush1.msra.mxu0 %v2051
    %2067 = vmatprep.subr.mxu0 0.0
    %2068 = vmatpush1.msra.mxu0 %v2050
    %2069 = vmatprep.subr.mxu0 0.0
    %2070 = vmatpush1.msra.mxu0 %v2049
    %2071 = vmatprep.subr.mxu0 0.0
    %2072 = vmatpush1.msra.mxu0 %v2048
    %2073 = vmatprep.subr.mxu0 0.0
    %2074 = vmatpush1.msra.mxu0 %v2047
    %2075 = vmatprep.subr.mxu0 0.0
    %2076 = vmatpush1.msra.mxu0 %v2046
    %2077 = vmatprep.subr.mxu0 0.0
    %2078 = vmatpush1.msra.mxu0 %v2045
    %2079 = vmatprep.subr.mxu0 0.0
    %2080 = vmatpush1.msra.mxu0 %v2044
    %2081 = vmatprep.subr.mxu0 0.0
    %2082 = vmatpush1.msra.mxu0 %v2043
    %2083 = vmatprep.subr.mxu0 0.0
    %2084 = vmatpush1.msra.mxu0 %v2042
    %2085 = vmatprep.subr.mxu0 0.0
    %2086 = vmatpush1.msra.mxu0 %v2041
    %2087 = vmatprep.subr.mxu0 0.0
    %2088 = vmatpush1.msra.mxu0 %v2040
    %2089 = vmatprep.subr.mxu0 0.0
    %2090 = vmatpush2.msra.mxu0 0.0
    %2091 = vmatprep.subr.mxu0 0.0
    %2092 = vmatpush2.msra.mxu0 0.0
    %2093 = vmatprep.subr.mxu0 0.0
    %2094 = vmatpush2.msra.mxu0 0.0
    %2095 = vmatprep.subr.mxu0 0.0
    %2096 = vmatpush2.msra.mxu0 0.0
    %2097 = vmatprep.subr.mxu0 0.0
    %2098 = vmatpush2.msra.mxu0 0.0
    %2099 = vmatprep.subr.mxu0 0.0
    %2100 = vmatpush2.msra.mxu0 0.0
    %2101 = vmatprep.subr.mxu0 0.0
    %2102 = vmatpush2.msra.mxu0 0.0
    %2103 = vmatprep.subr.mxu0 0.0
    %2104 = vmatpush2.msra.mxu0 0.0
    %2105 = vmatprep.subr.mxu0 0.0
    %2106 = vmatpush2.msra.mxu0 0.0
    %2107 = vmatprep.subr.mxu0 0.0
    %2108 = vmatpush2.msra.mxu0 0.0
    %2109 = vmatprep.subr.mxu0 0.0
    %2110 = vmatpush2.msra.mxu0 0.0
    %2111 = vmatprep.subr.mxu0 0.0
    %2112 = vmatpush2.msra.mxu0 0.0
    %2113 = vmatprep.subr.mxu0 0.0
    %2114 = vmatpush2.msra.mxu0 0.0
    %2115 = vmatprep.subr.mxu0 0.0
    %2116 = vmatpush2.msra.mxu0 0.0
    %2117 = vmatprep.subr.mxu0 0.0
    %2118 = vmatpush2.msra.mxu0 0.0
    %2119 = vmatprep.subr.mxu0 0.0
    %2120 = vmatpush2.msra.mxu0 0.0
    %2121 = vmatprep.mubr.f32.mxu0 0.0
    %2122 = vmatmul.mubr.f32.gmra.mxu0 %v2039
    %v2123 = vpop.f32.mrf.mxu0
    %v2124 = vadd.f32 %v2056, %v2123
    %v2125 = vpop.f32.mrf.mxu0
    %2126 = vdwg.mxu0
    %v2127 = vsel %vm584, %v2124, -inf
    %2128 = vmax.xlane.f32.xlu0 %v2127
    %v2129 = vpop.xlane.xlu0 %2128
    %v2130 = vsub.f32 %v2124, %v2129
    %v2131 = vmul.f32 %v2130, 1.442695
    %v2132 = vpow.pop %v2131
    %v2133 = vsel %vm584, %v2132, 0.0
    %2134 = vadd.xlane.f32.xlu0 %v2133
    %v2135 = vpop.xlane.xlu0 %2134
    %v2136 = vrcp.pop %v2135
    %v2137 = vmul.f32 %v2132, %v2136
    %v2138 = vld [vmem:[%s1] sm:$0xff]
    %v2139 = vld [vmem:[%s1 + $0x8] sm:$0xff]
    %v2140 = vld [vmem:[%s1 + $0x10] sm:$0xff]
    %v2141 = vld [vmem:[%s1 + $0x18] sm:$0xff]
    %v2142 = vld [vmem:[%s1 + $0x20] sm:$0xff]
    %v2143 = vld [vmem:[%s1 + $0x28] sm:$0xff]
    %v2144 = vld [vmem:[%s1 + $0x30] sm:$0xff]
    %v2145 = vld [vmem:[%s1 + $0x38] sm:$0xff]
    %v2146 = vld [vmem:[%s1 + $0x40] sm:$0xff]
    %v2147 = vld [vmem:[%s1 + $0x48] sm:$0xff]
    %v2148 = vld [vmem:[%s1 + $0x50] sm:$0xff]
    %v2149 = vld [vmem:[%s1 + $0x58] sm:$0xff]
    %v2150 = vld [vmem:[%s1 + $0x60] sm:$0xff]
    %v2151 = vld [vmem:[%s1 + $0x68] sm:$0xff]
    %v2152 = vld [vmem:[%s1 + $0x70] sm:$0xff]
    %v2153 = vld [vmem:[%s1 + $0x78] sm:$0xff]
    %2154 = vmatprep.subr.mxu0 0.0
    %2155 = vmatpush1.msra.mxu0 %v2153
    %2156 = vmatprep.subr.mxu0 0.0
    %2157 = vmatpush1.msra.mxu0 %v2152
    %2158 = vmatprep.subr.mxu0 0.0
    %2159 = vmatpush1.msra.mxu0 %v2151
    %2160 = vmatprep.subr.mxu0 0.0
    %2161 = vmatpush1.msra.mxu0 %v2150
    %2162 = vmatprep.subr.mxu0 0.0
    %2163 = vmatpush1.msra.mxu0 %v2149
    %2164 = vmatprep.subr.mxu0 0.0
    %2165 = vmatpush1.msra.mxu0 %v2148
    %2166 = vmatprep.subr.mxu0 0.0
    %2167 = vmatpush1.msra.mxu0 %v2147
    %2168 = vmatprep.subr.mxu0 0.0
    %2169 = vmatpush1.msra.mxu0 %v2146
    %2170 = vmatprep.subr.mxu0 0.0
    %2171 = vmatpush1.msra.mxu0 %v2145
    %2172 = vmatprep.subr.mxu0 0.0
    %2173 = vmatpush1.msra.mxu0 %v2144
    %2174 = vmatprep.subr.mxu0 0.0
    %2175 = vmatpush1.msra.mxu0 %v2143
    %2176 = vmatprep.subr.mxu0 0.0
    %2177 = vmatpush1.msra.mxu0 %v2142
    %2178 = vmatprep.subr.mxu0 0.0
    %2179 = vmatpush1.msra.mxu0 %v2141
    %2180 = vmatprep.subr.mxu0 0.0
    %2181 = vmatpush1.msra.mxu0 %v2140
    %2182 = vmatprep.subr.mxu0 0.0
    %2183 = vmatpush1.msra.mxu0 %v2139
    %2184 = vmatprep.subr.mxu0 0.0
    %2185 = vmatpush1.msra.mxu0 %v2138
    %2186 = vmatprep.subr.mxu0 0.0
    %2187 = vmatpush2.msra.mxu0 0.0
    %2188 = vmatprep.subr.mxu0 0.0
    %2189 = vmatpush2.msra.mxu0 0.0
    %2190 = vmatprep.subr.mxu0 0.0
    %2191 = vmatpush2.msra.mxu0 0.0
    %2192 = vmatprep.subr.mxu0 0.0
    %2193 = vmatpush2.msra.mxu0 0.0
    %2194 = vmatprep.subr.mxu0 0.0
    %2195 = vmatpush2.msra.mxu0 0.0
    %2196 = vmatprep.subr.mxu0 0.0
    %2197 = vmatpush2.msra.mxu0 0.0
    %2198 = vmatprep.subr.mxu0 0.0
    %2199 = vmatpush2.msra.mxu0 0.0
    %2200 = vmatprep.subr.mxu0 0.0
    %2201 = vmatpush2.msra.mxu0 0.0
    %2202 = vmatprep.subr.mxu0 0.0
    %2203 = vmatpush2.msra.mxu0 0.0
    %2204 = vmatprep.subr.mxu0 0.0
    %2205 = vmatpush2.msra.mxu0 0.0
    %2206 = vmatprep.subr.mxu0 0.0
    %2207 = vmatpush2.msra.mxu0 0.0
    %2208 = vmatprep.subr.mxu0 0.0
    %2209 = vmatpush2.msra.mxu0 0.0
    %2210 = vmatprep.subr.mxu0 0.0
    %2211 = vmatpush2.msra.mxu0 0.0
    %2212 = vmatprep.subr.mxu0 0.0
    %2213 = vmatpush2.msra.mxu0 0.0
    %2214 = vmatprep.subr.mxu0 0.0
    %2215 = vmatpush2.msra.mxu0 0.0
    %2216 = vmatprep.subr.mxu0 0.0
    %2217 = vmatpush2.msra.mxu0 0.0
    %2218 = vmatprep.mubr.f32.mxu0 0.0
    %2219 = vmatmul.mubr.f32.gmra.mxu0 %v2137
    %v2220 = vpop.f32.mrf.mxu0
    %v2221 = vadd.f32 0.0, %v2220
    %v2222 = vpop.f32.mrf.mxu0
    %2223 = vdwg.mxu0
    %2224 = vst.msk [vmem:[#allocation2] sm:$0x1] %vm685, %v2039
    %2225 = vst.msk [vmem:[#allocation2 + $0x1] sm:$0x1] %vm685, %v2221
    %v2226 = vld [vmem:[#allocation2] sm:$0x3]
    %v2227 = vld [vmem:[%s7] sm:$0xff]
    %v2228 = vld [vmem:[%s7 + $0x8] sm:$0xff]
    %v2229 = vld [vmem:[%s7 + $0x10] sm:$0xff]
    %v2230 = vld [vmem:[%s7 + $0x18] sm:$0xff]
    %v2231 = vld [vmem:[%s7 + $0x20] sm:$0xff]
    %v2232 = vld [vmem:[%s7 + $0x28] sm:$0xff]
    %v2233 = vld [vmem:[%s7 + $0x30] sm:$0xff]
    %v2234 = vld [vmem:[%s7 + $0x38] sm:$0xff]
    %v2235 = vld [vmem:[%s7 + $0x40] sm:$0xff]
    %v2236 = vld [vmem:[%s7 + $0x48] sm:$0xff]
    %v2237 = vld [vmem:[%s7 + $0x50] sm:$0xff]
    %v2238 = vld [vmem:[%s7 + $0x58] sm:$0xff]
    %v2239 = vld [vmem:[%s7 + $0x60] sm:$0xff]
    %v2240 = vld [vmem:[%s7 + $0x68] sm:$0xff]
    %v2241 = vld [vmem:[%s7 + $0x70] sm:$0xff]
    %v2242 = vld [vmem:[%s7 + $0x78] sm:$0xff]
    %v2243 = vld [vmem:[%s7 + $0x80] sm:$0xff]
    %v2244 = vld [vmem:[%s7 + $0x88] sm:$0xff]
    %v2245 = vld [vmem:[%s7 + $0x90] sm:$0xff]
    %v2246 = vld [vmem:[%s7 + $0x98] sm:$0xff]
    %v2247 = vld [vmem:[%s7 + $0xa0] sm:$0xff]
    %v2248 = vld [vmem:[%s7 + $0xa8] sm:$0xff]
    %v2249 = vld [vmem:[%s7 + $0xb0] sm:$0xff]
    %v2250 = vld [vmem:[%s7 + $0xb8] sm:$0xff]
    %v2251 = vld [vmem:[%s7 + $0xc0] sm:$0xff]
    %v2252 = vld [vmem:[%s7 + $0xc8] sm:$0xff]
    %v2253 = vld [vmem:[%s7 + $0xd0] sm:$0xff]
    %v2254 = vld [vmem:[%s7 + $0xd8] sm:$0xff]
    %v2255 = vld [vmem:[%s7 + $0xe0] sm:$0xff]
    %v2256 = vld [vmem:[%s7 + $0xe8] sm:$0xff]
    %v2257 = vld [vmem:[%s7 + $0xf0] sm:$0xff]
    %v2258 = vld [vmem:[%s7 + $0xf8] sm:$0xff]
    %v2259 = vld [vmem:[%s8] sm:$0x1]
    %v2261 = vlaneseq
    %v2262 = vshrl.u32 %v2261, 7
    %v2263 = vsub.s32 0, %v2262
    %v2264 = vrot.slane %v2226, %v2263
    %v2265 = vlaneseq
    %v2266 = vshrl.u32 %v2265, 7
    %v2267 = vsub.s32 1, %v2266
    %v2268 = vrot.slane %v2226, %v2267
    %2271 = vmatprep.subr.mxu0 0.0
    %2272 = vmatpush1.msra.mxu0 %v2242
    %2273 = vmatprep.subr.mxu0 0.0
    %2274 = vmatpush1.msra.mxu0 %v2241
    %2275 = vmatprep.subr.mxu0 0.0
    %2276 = vmatpush1.msra.mxu0 %v2240
    %2277 = vmatprep.subr.mxu0 0.0
    %2278 = vmatpush1.msra.mxu0 %v2239
    %2279 = vmatprep.subr.mxu0 0.0
    %2280 = vmatpush1.msra.mxu0 %v2238
    %2281 = vmatprep.subr.mxu0 0.0
    %2282 = vmatpush1.msra.mxu0 %v2237
    %2283 = vmatprep.subr.mxu0 0.0
    %2284 = vmatpush1.msra.mxu0 %v2236
    %2285 = vmatprep.subr.mxu0 0.0
    %2286 = vmatpush1.msra.mxu0 %v2235
    %2287 = vmatprep.subr.mxu0 0.0
    %2288 = vmatpush1.msra.mxu0 %v2234
    %2289 = vmatprep.subr.mxu0 0.0
    %2290 = vmatpush1.msra.mxu0 %v2233
    %2291 = vmatprep.subr.mxu0 0.0
    %2292 = vmatpush1.msra.mxu0 %v2232
    %2293 = vmatprep.subr.mxu0 0.0
    %2294 = vmatpush1.msra.mxu0 %v2231
    %2295 = vmatprep.subr.mxu0 0.0
    %2296 = vmatpush1.msra.mxu0 %v2230
    %2297 = vmatprep.subr.mxu0 0.0
    %2298 = vmatpush1.msra.mxu0 %v2229
    %2299 = vmatprep.subr.mxu0 0.0
    %2300 = vmatpush1.msra.mxu0 %v2228
    %2301 = vmatprep.subr.mxu0 0.0
    %2302 = vmatpush1.msra.mxu0 %v2227
    %2303 = vmatprep.subr.mxu0 0.0
    %2304 = vmatpush2.msra.mxu0 %v2258
    %2305 = vmatprep.subr.mxu0 0.0
    %2306 = vmatpush2.msra.mxu0 %v2257
    %2307 = vmatprep.subr.mxu0 0.0
    %2308 = vmatpush2.msra.mxu0 %v2256
    %2309 = vmatprep.subr.mxu0 0.0
    %2310 = vmatpush2.msra.mxu0 %v2255
    %2311 = vmatprep.subr.mxu0 0.0
    %2312 = vmatpush2.msra.mxu0 %v2254
    %2313 = vmatprep.subr.mxu0 0.0
    %2314 = vmatpush2.msra.mxu0 %v2253
    %2315 = vmatprep.subr.mxu0 0.0
    %2316 = vmatpush2.msra.mxu0 %v2252
    %2317 = vmatprep.subr.mxu0 0.0
    %2318 = vmatpush2.msra.mxu0 %v2251
    %2319 = vmatprep.subr.mxu0 0.0
    %2320 = vmatpush2.msra.mxu0 %v2250
    %2321 = vmatprep.subr.mxu0 0.0
    %2322 = vmatpush2.msra.mxu0 %v2249
    %2323 = vmatprep.subr.mxu0 0.0
    %2324 = vmatpush2.msra.mxu0 %v2248
    %2325 = vmatprep.subr.mxu0 0.0
    %2326 = vmatpush2.msra.mxu0 %v2247
    %2327 = vmatprep.subr.mxu0 0.0
    %2328 = vmatpush2.msra.mxu0 %v2246
    %2329 = vmatprep.subr.mxu0 0.0
    %2330 = vmatpush2.msra.mxu0 %v2245
    %2331 = vmatprep.subr.mxu0 0.0
    %2332 = vmatpush2.msra.mxu0 %v2244
    %2333 = vmatprep.subr.mxu0 0.0
    %2334 = vmatpush2.msra.mxu0 %v2243
    %2335 = vmatprep.mubr.f32.mxu0 %v2268
    %2336 = vmatmul.mubr.f32.gmra.mxu0 %v2264
    %v2337 = vpop.f32.mrf.mxu0
    %v2338 = vadd.f32 %v2259, %v2337
    %v2339 = vpop.f32.mrf.mxu0
    %2340 = vdwg.mxu0
    %v2341 = vsel %vm584, %v2338, -inf
    %2342 = vmax.xlane.f32.xlu0 %v2341
    %v2343 = vpop.xlane.xlu0 %2342
    %v2344 = vsub.f32 %v2338, %v2343
    %v2345 = vmul.f32 %v2344, 1.442695
    %v2346 = vpow.pop %v2345
    %v2347 = vsel %vm584, %v2346, 0.0
    %2348 = vadd.xlane.f32.xlu0 %v2347
    %v2349 = vpop.xlane.xlu0 %2348
    %v2350 = vlog2.pop %v2349
    %v2351 = vmul.f32 %v2350, 0.6931472
    %v2352 = vadd.f32 %v2343, %v2351
    %v2353 = vsub.f32 %v2338, %v2352
    %2354 = vst [vmem:[#allocation3 + $0x2] sm:$0x1] %v2353
    %2355 = vst [vmem:[#allocation5 + $0x2] sm:$0x1] %v2221
    %2356 = vst [vmem:[#allocation7 + $0x2] sm:$0x1] %v2039
    %2357 = vst [vmem:[#allocation8 + $0x2] sm:$0x1] %v2137
    %s2358 = scalar_lea.vmem %s0, 3
    %v2359 = vld [vmem:[%s2358] ss:$8 sm:$0x7]
    %v2360 = vld [vmem:[%s4] sm:$0xff]
    %v2361 = vld [vmem:[%s4 + $0x8] sm:$0xff]
    %v2362 = vld [vmem:[%s4 + $0x10] sm:$0xff]
    %v2363 = vld [vmem:[%s4 + $0x18] sm:$0xff]
    %v2364 = vld [vmem:[%s4 + $0x20] sm:$0xff]
    %v2365 = vld [vmem:[%s4 + $0x28] sm:$0xff]
    %v2366 = vld [vmem:[%s4 + $0x30] sm:$0xff]
    %v2367 = vld [vmem:[%s4 + $0x38] sm:$0xff]
    %v2368 = vld [vmem:[%s4 + $0x40] sm:$0xff]
    %v2369 = vld [vmem:[%s4 + $0x48] sm:$0xff]
    %v2370 = vld [vmem:[%s4 + $0x50] sm:$0xff]
    %v2371 = vld [vmem:[%s4 + $0x58] sm:$0xff]
    %v2372 = vld [vmem:[%s4 + $0x60] sm:$0xff]
    %v2373 = vld [vmem:[%s4 + $0x68] sm:$0xff]
    %v2374 = vld [vmem:[%s4 + $0x70] sm:$0xff]
    %v2375 = vld [vmem:[%s4 + $0x78] sm:$0xff]
    %v2376 = vld [vmem:[%s4 + $0x80] sm:$0xff]
    %v2377 = vld [vmem:[%s4 + $0x88] sm:$0xff]
    %v2378 = vld [vmem:[%s4 + $0x90] sm:$0xff]
    %v2379 = vld [vmem:[%s4 + $0x98] sm:$0xff]
    %v2380 = vld [vmem:[%s4 + $0xa0] sm:$0xff]
    %v2381 = vld [vmem:[%s4 + $0xa8] sm:$0xff]
    %v2382 = vld [vmem:[%s4 + $0xb0] sm:$0xff]
    %v2383 = vld [vmem:[%s4 + $0xb8] sm:$0xff]
    %v2384 = vld [vmem:[%s4 + $0xc0] sm:$0xff]
    %v2385 = vld [vmem:[%s4 + $0xc8] sm:$0xff]
    %v2386 = vld [vmem:[%s4 + $0xd0] sm:$0xff]
    %v2387 = vld [vmem:[%s4 + $0xd8] sm:$0xff]
    %v2388 = vld [vmem:[%s4 + $0xe0] sm:$0xff]
    %v2389 = vld [vmem:[%s4 + $0xe8] sm:$0xff]
    %v2390 = vld [vmem:[%s4 + $0xf0] sm:$0xff]
    %v2391 = vld [vmem:[%s4 + $0xf8] sm:$0xff]
    %v2392 = vld [vmem:[%s4 + $0x100] sm:$0xff]
    %v2393 = vld [vmem:[%s4 + $0x108] sm:$0xff]
    %v2394 = vld [vmem:[%s4 + $0x110] sm:$0xff]
    %v2395 = vld [vmem:[%s4 + $0x118] sm:$0xff]
    %v2396 = vld [vmem:[%s4 + $0x120] sm:$0xff]
    %v2397 = vld [vmem:[%s4 + $0x128] sm:$0xff]
    %v2398 = vld [vmem:[%s4 + $0x130] sm:$0xff]
    %v2399 = vld [vmem:[%s4 + $0x138] sm:$0xff]
    %v2400 = vld [vmem:[%s4 + $0x140] sm:$0xff]
    %v2401 = vld [vmem:[%s4 + $0x148] sm:$0xff]
    %v2402 = vld [vmem:[%s4 + $0x150] sm:$0xff]
    %v2403 = vld [vmem:[%s4 + $0x158] sm:$0xff]
    %v2404 = vld [vmem:[%s4 + $0x160] sm:$0xff]
    %v2405 = vld [vmem:[%s4 + $0x168] sm:$0xff]
    %v2406 = vld [vmem:[%s4 + $0x170] sm:$0xff]
    %v2407 = vld [vmem:[%s4 + $0x178] sm:$0xff]
    %2408 = vmatprep.subr.mxu0 %v2406
    %2409 = vmatpush1.msra.mxu0 %v2405
    %2410 = vmatprep.subr.mxu0 %v2403
    %2411 = vmatpush1.msra.mxu0 %v2402
    %2412 = vmatprep.subr.mxu0 %v2400
    %2413 = vmatpush1.msra.mxu0 %v2399
    %2414 = vmatprep.subr.mxu0 %v2397
    %2415 = vmatpush1.msra.mxu0 %v2396
    %2416 = vmatprep.subr.mxu0 %v2394
    %2417 = vmatpush1.msra.mxu0 %v2393
    %2418 = vmatprep.subr.mxu0 %v2391
    %2419 = vmatpush1.msra.mxu0 %v2390
    %2420 = vmatprep.subr.mxu0 %v2388
    %2421 = vmatpush1.msra.mxu0 %v2387
    %2422 = vmatprep.subr.mxu0 %v2385
    %2423 = vmatpush1.msra.mxu0 %v2384
    %2424 = vmatprep.subr.mxu0 %v2382
    %2425 = vmatpush1.msra.mxu0 %v2381
    %2426 = vmatprep.subr.mxu0 %v2379
    %2427 = vmatpush1.msra.mxu0 %v2378
    %2428 = vmatprep.subr.mxu0 %v2376
    %2429 = vmatpush1.msra.mxu0 %v2375
    %2430 = vmatprep.subr.mxu0 %v2373
    %2431 = vmatpush1.msra.mxu0 %v2372
    %2432 = vmatprep.subr.mxu0 %v2370
    %2433 = vmatpush1.msra.mxu0 %v2369
    %2434 = vmatprep.subr.mxu0 %v2367
    %2435 = vmatpush1.msra.mxu0 %v2366
    %2436 = vmatprep.subr.mxu0 %v2364
    %2437 = vmatpush1.msra.mxu0 %v2363
    %2438 = vmatprep.subr.mxu0 %v2361
    %2439 = vmatpush1.msra.mxu0 %v2360
    %2440 = vmatprep.subr.mxu0 0.0
    %2441 = vmatpush2.msra.mxu0 0.0
    %2442 = vmatprep.subr.mxu0 0.0
    %2443 = vmatpush2.msra.mxu0 0.0
    %2444 = vmatprep.subr.mxu0 0.0
    %2445 = vmatpush2.msra.mxu0 0.0
    %2446 = vmatprep.subr.mxu0 0.0
    %2447 = vmatpush2.msra.mxu0 0.0
    %2448 = vmatprep.subr.mxu0 0.0
    %2449 = vmatpush2.msra.mxu0 0.0
    %2450 = vmatprep.subr.mxu0 0.0
    %2451 = vmatpush2.msra.mxu0 0.0
    %2452 = vmatprep.subr.mxu0 0.0
    %2453 = vmatpush2.msra.mxu0 0.0
    %2454 = vmatprep.subr.mxu0 0.0
    %2455 = vmatpush2.msra.mxu0 0.0
    %2456 = vmatprep.subr.mxu0 0.0
    %2457 = vmatpush2.msra.mxu0 0.0
    %2458 = vmatprep.subr.mxu0 0.0
    %2459 = vmatpush2.msra.mxu0 0.0
    %2460 = vmatprep.subr.mxu0 0.0
    %2461 = vmatpush2.msra.mxu0 0.0
    %2462 = vmatprep.subr.mxu0 0.0
    %2463 = vmatpush2.msra.mxu0 0.0
    %2464 = vmatprep.subr.mxu0 0.0
    %2465 = vmatpush2.msra.mxu0 0.0
    %2466 = vmatprep.subr.mxu0 0.0
    %2467 = vmatpush2.msra.mxu0 0.0
    %2468 = vmatprep.subr.mxu0 0.0
    %2469 = vmatpush2.msra.mxu0 0.0
    %2470 = vmatprep.subr.mxu0 0.0
    %2471 = vmatpush2.msra.mxu0 0.0
    %2472 = vmatprep.mubr.f32.mxu0 0.0
    %2473 = vmatmul.mubr.f32.gmra.mxu0 %v2221
    %v2474 = vpop.f32.mrf.mxu0
    %v2475 = vadd.f32 0.0, %v2474
    %v2476 = vpop.f32.mrf.mxu0
    %v2477 = vadd.f32 0.0, %v2476
    %2478 = vdwg.mxu0
    %2479 = vmatprep.subr.mxu0 0.0
    %2480 = vmatpush1.msra.mxu0 %v2407
    %2481 = vmatprep.subr.mxu0 0.0
    %2482 = vmatpush1.msra.mxu0 %v2404
    %2483 = vmatprep.subr.mxu0 0.0
    %2484 = vmatpush1.msra.mxu0 %v2401
    %2485 = vmatprep.subr.mxu0 0.0
    %2486 = vmatpush1.msra.mxu0 %v2398
    %2487 = vmatprep.subr.mxu0 0.0
    %2488 = vmatpush1.msra.mxu0 %v2395
    %2489 = vmatprep.subr.mxu0 0.0
    %2490 = vmatpush1.msra.mxu0 %v2392
    %2491 = vmatprep.subr.mxu0 0.0
    %2492 = vmatpush1.msra.mxu0 %v2389
    %2493 = vmatprep.subr.mxu0 0.0
    %2494 = vmatpush1.msra.mxu0 %v2386
    %2495 = vmatprep.subr.mxu0 0.0
    %2496 = vmatpush1.msra.mxu0 %v2383
    %2497 = vmatprep.subr.mxu0 0.0
    %2498 = vmatpush1.msra.mxu0 %v2380
    %2499 = vmatprep.subr.mxu0 0.0
    %2500 = vmatpush1.msra.mxu0 %v2377
    %2501 = vmatprep.subr.mxu0 0.0
    %2502 = vmatpush1.msra.mxu0 %v2374
    %2503 = vmatprep.subr.mxu0 0.0
    %2504 = vmatpush1.msra.mxu0 %v2371
    %2505 = vmatprep.subr.mxu0 0.0
    %2506 = vmatpush1.msra.mxu0 %v2368
    %2507 = vmatprep.subr.mxu0 0.0
    %2508 = vmatpush1.msra.mxu0 %v2365
    %2509 = vmatprep.subr.mxu0 0.0
    %2510 = vmatpush1.msra.mxu0 %v2362
    %2511 = vmatprep.subr.mxu0 0.0
    %2512 = vmatpush2.msra.mxu0 0.0
    %2513 = vmatprep.subr.mxu0 0.0
    %2514 = vmatpush2.msra.mxu0 0.0
    %2515 = vmatprep.subr.mxu0 0.0
    %2516 = vmatpush2.msra.mxu0 0.0
    %2517 = vmatprep.subr.mxu0 0.0
    %2518 = vmatpush2.msra.mxu0 0.0
    %2519 = vmatprep.subr.mxu0 0.0
    %2520 = vmatpush2.msra.mxu0 0.0
    %2521 = vmatprep.subr.mxu0 0.0
    %2522 = vmatpush2.msra.mxu0 0.0
    %2523 = vmatprep.subr.mxu0 0.0
    %2524 = vmatpush2.msra.mxu0 0.0
    %2525 = vmatprep.subr.mxu0 0.0
    %2526 = vmatpush2.msra.mxu0 0.0
    %2527 = vmatprep.subr.mxu0 0.0
    %2528 = vmatpush2.msra.mxu0 0.0
    %2529 = vmatprep.subr.mxu0 0.0
    %2530 = vmatpush2.msra.mxu0 0.0
    %2531 = vmatprep.subr.mxu0 0.0
    %2532 = vmatpush2.msra.mxu0 0.0
    %2533 = vmatprep.subr.mxu0 0.0
    %2534 = vmatpush2.msra.mxu0 0.0
    %2535 = vmatprep.subr.mxu0 0.0
    %2536 = vmatpush2.msra.mxu0 0.0
    %2537 = vmatprep.subr.mxu0 0.0
    %2538 = vmatpush2.msra.mxu0 0.0
    %2539 = vmatprep.subr.mxu0 0.0
    %2540 = vmatpush2.msra.mxu0 0.0
    %2541 = vmatprep.subr.mxu0 0.0
    %2542 = vmatpush2.msra.mxu0 0.0
    %2543 = vmatprep.mubr.f32.mxu0 0.0
    %2544 = vmatmul.mubr.f32.gmra.mxu0 %v2221
    %v2545 = vpop.f32.mrf.mxu0
    %v2546 = vadd.f32 0.0, %v2545
    %v2547 = vpop.f32.mrf.mxu0
    %2548 = vdwg.mxu0
    %v2552 = vcombine.low %v2475, %v2477
    %v2554 = vunpack.c.l.s4 1966171168
    %v2555 = vunpack.c.0.s8 %v2554
    %v2556 = vlaneseq
    %v2557 = vshrl.u32 %v2556, 7
    %v2558 = vsub.s32 %v2555, %v2557
    %v2559 = vrot.slane %v2552, %v2558
    %v2561 = vunpack.c.l.s4 1966171168
    %v2562 = vunpack.c.0.s8 %v2561
    %v2563 = vlaneseq
    %v2564 = vshrl.u32 %v2563, 7
    %v2565 = vsub.s32 %v2562, %v2564
    %v2566 = vrot.slane %v2546, %v2565
    %v2567 = vcombine.low %v2559, %v2566
    %v2569 = vunpack.c.l.s4 1966171168
    %v2570 = vunpack.c.0.s8 %v2569
    %v2571 = vlaneseq
    %v2572 = vshrl.u32 %v2571, 7
    %v2573 = vsub.s32 %v2570, %v2572
    %v2574 = vrot.slane %v2567, %v2573
    %v2576 = vadd.f32 %v2359, %v2574
    %v2577 = vld [vmem:[%s5] sm:$0xff]
    %v2578 = vld [vmem:[%s5 + $0x8] sm:$0xff]
    %v2579 = vld [vmem:[%s5 + $0x10] sm:$0xff]
    %v2580 = vld [vmem:[%s5 + $0x18] sm:$0xff]
    %v2581 = vld [vmem:[%s5 + $0x20] sm:$0xff]
    %v2582 = vld [vmem:[%s5 + $0x28] sm:$0xff]
    %v2583 = vld [vmem:[%s5 + $0x30] sm:$0xff]
    %v2584 = vld [vmem:[%s5 + $0x38] sm:$0xff]
    %v2585 = vld [vmem:[%s5 + $0x40] sm:$0xff]
    %v2586 = vld [vmem:[%s5 + $0x48] sm:$0xff]
    %v2587 = vld [vmem:[%s5 + $0x50] sm:$0xff]
    %v2588 = vld [vmem:[%s5 + $0x58] sm:$0xff]
    %v2589 = vld [vmem:[%s5 + $0x60] sm:$0xff]
    %v2590 = vld [vmem:[%s5 + $0x68] sm:$0xff]
    %v2591 = vld [vmem:[%s5 + $0x70] sm:$0xff]
    %v2592 = vld [vmem:[%s5 + $0x78] sm:$0xff]
    %v2593 = vld [vmem:[%s5 + $0x80] sm:$0xff]
    %v2594 = vld [vmem:[%s5 + $0x88] sm:$0xff]
    %v2595 = vld [vmem:[%s5 + $0x90] sm:$0xff]
    %v2596 = vld [vmem:[%s5 + $0x98] sm:$0xff]
    %v2597 = vld [vmem:[%s5 + $0xa0] sm:$0xff]
    %v2598 = vld [vmem:[%s5 + $0xa8] sm:$0xff]
    %v2599 = vld [vmem:[%s5 + $0xb0] sm:$0xff]
    %v2600 = vld [vmem:[%s5 + $0xb8] sm:$0xff]
    %v2601 = vld [vmem:[%s5 + $0xc0] sm:$0xff]
    %v2602 = vld [vmem:[%s5 + $0xc8] sm:$0xff]
    %v2603 = vld [vmem:[%s5 + $0xd0] sm:$0xff]
    %v2604 = vld [vmem:[%s5 + $0xd8] sm:$0xff]
    %v2605 = vld [vmem:[%s5 + $0xe0] sm:$0xff]
    %v2606 = vld [vmem:[%s5 + $0xe8] sm:$0xff]
    %v2607 = vld [vmem:[%s5 + $0xf0] sm:$0xff]
    %v2608 = vld [vmem:[%s5 + $0xf8] sm:$0xff]
    %v2609 = vld [vmem:[%s5 + $0x100] sm:$0xff]
    %v2610 = vld [vmem:[%s5 + $0x108] sm:$0xff]
    %v2611 = vld [vmem:[%s5 + $0x110] sm:$0xff]
    %v2612 = vld [vmem:[%s5 + $0x118] sm:$0xff]
    %v2613 = vld [vmem:[%s5 + $0x120] sm:$0xff]
    %v2614 = vld [vmem:[%s5 + $0x128] sm:$0xff]
    %v2615 = vld [vmem:[%s5 + $0x130] sm:$0xff]
    %v2616 = vld [vmem:[%s5 + $0x138] sm:$0xff]
    %v2617 = vld [vmem:[%s5 + $0x140] sm:$0xff]
    %v2618 = vld [vmem:[%s5 + $0x148] sm:$0xff]
    %v2619 = vld [vmem:[%s5 + $0x150] sm:$0xff]
    %v2620 = vld [vmem:[%s5 + $0x158] sm:$0xff]
    %v2621 = vld [vmem:[%s5 + $0x160] sm:$0xff]
    %v2622 = vld [vmem:[%s5 + $0x168] sm:$0xff]
    %v2623 = vld [vmem:[%s5 + $0x170] sm:$0xff]
    %v2624 = vld [vmem:[%s5 + $0x178] sm:$0xff]
    %v2625 = vld [vmem:[%s6] sm:$0x7]
    %v2627 = vlaneseq
    %v2628 = vshrl.u32 %v2627, 7
    %v2629 = vsub.s32 0, %v2628
    %v2630 = vrot.slane %v2625, %v2629
    %v2631 = vlaneseq
    %v2632 = vshrl.u32 %v2631, 7
    %v2633 = vsub.s32 1, %v2632
    %v2634 = vrot.slane %v2625, %v2633
    %v2635 = vlaneseq
    %v2636 = vshrl.u32 %v2635, 7
    %v2637 = vsub.s32 2, %v2636
    %v2638 = vrot.slane %v2625, %v2637
    %2642 = vmatprep.subr.mxu0 %v2623
    %2643 = vmatpush1.msra.mxu0 %v2622
    %2644 = vmatprep.subr.mxu0 %v2620
    %2645 = vmatpush1.msra.mxu0 %v2619
    %2646 = vmatprep.subr.mxu0 %v2617
    %2647 = vmatpush1.msra.mxu0 %v2616
    %2648 = vmatprep.subr.mxu0 %v2614
    %2649 = vmatpush1.msra.mxu0 %v2613
    %2650 = vmatprep.subr.mxu0 %v2611
    %2651 = vmatpush1.msra.mxu0 %v2610
    %2652 = vmatprep.subr.mxu0 %v2608
    %2653 = vmatpush1.msra.mxu0 %v2607
    %2654 = vmatprep.subr.mxu0 %v2605
    %2655 = vmatpush1.msra.mxu0 %v2604
    %2656 = vmatprep.subr.mxu0 %v2602
    %2657 = vmatpush1.msra.mxu0 %v2601
    %2658 = vmatprep.subr.mxu0 %v2599
    %2659 = vmatpush1.msra.mxu0 %v2598
    %2660 = vmatprep.subr.mxu0 %v2596
    %2661 = vmatpush1.msra.mxu0 %v2595
    %2662 = vmatprep.subr.mxu0 %v2593
    %2663 = vmatpush1.msra.mxu0 %v2592
    %2664 = vmatprep.subr.mxu0 %v2590
    %2665 = vmatpush1.msra.mxu0 %v2589
    %2666 = vmatprep.subr.mxu0 %v2587
    %2667 = vmatpush1.msra.mxu0 %v2586
    %2668 = vmatprep.subr.mxu0 %v2584
    %2669 = vmatpush1.msra.mxu0 %v2583
    %2670 = vmatprep.subr.mxu0 %v2581
    %2671 = vmatpush1.msra.mxu0 %v2580
    %2672 = vmatprep.subr.mxu0 %v2578
    %2673 = vmatpush1.msra.mxu0 %v2577
    %2674 = vmatprep.subr.mxu0 0.0
    %2675 = vmatpush2.msra.mxu0 0.0
    %2676 = vmatprep.subr.mxu0 0.0
    %2677 = vmatpush2.msra.mxu0 0.0
    %2678 = vmatprep.subr.mxu0 0.0
    %2679 = vmatpush2.msra.mxu0 0.0
    %2680 = vmatprep.subr.mxu0 0.0
    %2681 = vmatpush2.msra.mxu0 0.0
    %2682 = vmatprep.subr.mxu0 0.0
    %2683 = vmatpush2.msra.mxu0 0.0
    %2684 = vmatprep.subr.mxu0 0.0
    %2685 = vmatpush2.msra.mxu0 0.0
    %2686 = vmatprep.subr.mxu0 0.0
    %2687 = vmatpush2.msra.mxu0 0.0
    %2688 = vmatprep.subr.mxu0 0.0
    %2689 = vmatpush2.msra.mxu0 0.0
    %2690 = vmatprep.subr.mxu0 0.0
    %2691 = vmatpush2.msra.mxu0 0.0
    %2692 = vmatprep.subr.mxu0 0.0
    %2693 = vmatpush2.msra.mxu0 0.0
    %2694 = vmatprep.subr.mxu0 0.0
    %2695 = vmatpush2.msra.mxu0 0.0
    %2696 = vmatprep.subr.mxu0 0.0
    %2697 = vmatpush2.msra.mxu0 0.0
    %2698 = vmatprep.subr.mxu0 0.0
    %2699 = vmatpush2.msra.mxu0 0.0
    %2700 = vmatprep.subr.mxu0 0.0
    %2701 = vmatpush2.msra.mxu0 0.0
    %2702 = vmatprep.subr.mxu0 0.0
    %2703 = vmatpush2.msra.mxu0 0.0
    %2704 = vmatprep.subr.mxu0 0.0
    %2705 = vmatpush2.msra.mxu0 0.0
    %2706 = vmatprep.mubr.f32.mxu0 0.0
    %2707 = vmatmul.mubr.f32.gmra.mxu0 %v2039
    %v2708 = vpop.f32.mrf.mxu0
    %v2709 = vadd.f32 %v2630, %v2708
    %v2710 = vpop.f32.mrf.mxu0
    %v2711 = vadd.f32 %v2634, %v2710
    %2712 = vdwg.mxu0
    %2713 = vmatprep.subr.mxu0 0.0
    %2714 = vmatpush1.msra.mxu0 %v2624
    %2715 = vmatprep.subr.mxu0 0.0
    %2716 = vmatpush1.msra.mxu0 %v2621
    %2717 = vmatprep.subr.mxu0 0.0
    %2718 = vmatpush1.msra.mxu0 %v2618
    %2719 = vmatprep.subr.mxu0 0.0
    %2720 = vmatpush1.msra.mxu0 %v2615
    %2721 = vmatprep.subr.mxu0 0.0
    %2722 = vmatpush1.msra.mxu0 %v2612
    %2723 = vmatprep.subr.mxu0 0.0
    %2724 = vmatpush1.msra.mxu0 %v2609
    %2725 = vmatprep.subr.mxu0 0.0
    %2726 = vmatpush1.msra.mxu0 %v2606
    %2727 = vmatprep.subr.mxu0 0.0
    %2728 = vmatpush1.msra.mxu0 %v2603
    %2729 = vmatprep.subr.mxu0 0.0
    %2730 = vmatpush1.msra.mxu0 %v2600
    %2731 = vmatprep.subr.mxu0 0.0
    %2732 = vmatpush1.msra.mxu0 %v2597
    %2733 = vmatprep.subr.mxu0 0.0
    %2734 = vmatpush1.msra.mxu0 %v2594
    %2735 = vmatprep.subr.mxu0 0.0
    %2736 = vmatpush1.msra.mxu0 %v2591
    %2737 = vmatprep.subr.mxu0 0.0
    %2738 = vmatpush1.msra.mxu0 %v2588
    %2739 = vmatprep.subr.mxu0 0.0
    %2740 = vmatpush1.msra.mxu0 %v2585
    %2741 = vmatprep.subr.mxu0 0.0
    %2742 = vmatpush1.msra.mxu0 %v2582
    %2743 = vmatprep.subr.mxu0 0.0
    %2744 = vmatpush1.msra.mxu0 %v2579
    %2745 = vmatprep.subr.mxu0 0.0
    %2746 = vmatpush2.msra.mxu0 0.0
    %2747 = vmatprep.subr.mxu0 0.0
    %2748 = vmatpush2.msra.mxu0 0.0
    %2749 = vmatprep.subr.mxu0 0.0
    %2750 = vmatpush2.msra.mxu0 0.0
    %2751 = vmatprep.subr.mxu0 0.0
    %2752 = vmatpush2.msra.mxu0 0.0
    %2753 = vmatprep.subr.mxu0 0.0
    %2754 = vmatpush2.msra.mxu0 0.0
    %2755 = vmatprep.subr.mxu0 0.0
    %2756 = vmatpush2.msra.mxu0 0.0
    %2757 = vmatprep.subr.mxu0 0.0
    %2758 = vmatpush2.msra.mxu0 0.0
    %2759 = vmatprep.subr.mxu0 0.0
    %2760 = vmatpush2.msra.mxu0 0.0
    %2761 = vmatprep.subr.mxu0 0.0
    %2762 = vmatpush2.msra.mxu0 0.0
    %2763 = vmatprep.subr.mxu0 0.0
    %2764 = vmatpush2.msra.mxu0 0.0
    %2765 = vmatprep.subr.mxu0 0.0
    %2766 = vmatpush2.msra.mxu0 0.0
    %2767 = vmatprep.subr.mxu0 0.0
    %2768 = vmatpush2.msra.mxu0 0.0
    %2769 = vmatprep.subr.mxu0 0.0
    %2770 = vmatpush2.msra.mxu0 0.0
    %2771 = vmatprep.subr.mxu0 0.0
    %2772 = vmatpush2.msra.mxu0 0.0
    %2773 = vmatprep.subr.mxu0 0.0
    %2774 = vmatpush2.msra.mxu0 0.0
    %2775 = vmatprep.subr.mxu0 0.0
    %2776 = vmatpush2.msra.mxu0 0.0
    %2777 = vmatprep.mubr.f32.mxu0 0.0
    %2778 = vmatmul.mubr.f32.gmra.mxu0 %v2039
    %v2779 = vpop.f32.mrf.mxu0
    %v2780 = vadd.f32 %v2638, %v2779
    %v2781 = vpop.f32.mrf.mxu0
    %2782 = vdwg.mxu0
    %v2783 = vadd.f32 %v2576, %v2709
    %v2784 = vxor.u32 %v2783, 2147483648
    %v2785 = vmul.f32 %v2784, 1.442695
    %v2786 = vpow.pop %v2785
    %v2787 = vadd.f32 %v2786, 1.0
    %v2788 = vrcp.pop %v2787
    %v2789 = vmul.f32 1.0, %v2788
    %v2791 = vrot.slane %v2576, 1
    %v2793 = vadd.f32 %v2791, %v2711
    %v2794 = vxor.u32 %v2793, 2147483648
    %v2795 = vmul.f32 %v2794, 1.442695
    %v2796 = vpow.pop %v2795
    %v2797 = vadd.f32 %v2796, 1.0
    %v2798 = vrcp.pop %v2797
    %v2799 = vmul.f32 1.0, %v2798
    %v2800 = vmul.f32 %v2789, %v2780
    %v2801 = vrot.slane %v2576, 2
    %v2803 = vadd.f32 %v2801, %v2800
    %v2804 = vtanh.pop %v2803
    %v2805 = vsub.f32 1.0, %v2799
    %v2806 = vmul.f32 %v2805, %v2804
    %v2807 = vmul.f32 %v2799, %v2039
    %v2808 = vadd.f32 %v2806, %v2807
    %v2809 = vld [vmem:[%s2] sm:$0xff]
    %v2810 = vld [vmem:[%s2 + $0x8] sm:$0xff]
    %v2811 = vld [vmem:[%s2 + $0x10] sm:$0xff]
    %v2812 = vld [vmem:[%s2 + $0x18] sm:$0xff]
    %v2813 = vld [vmem:[%s2 + $0x20] sm:$0xff]
    %v2814 = vld [vmem:[%s2 + $0x28] sm:$0xff]
    %v2815 = vld [vmem:[%s2 + $0x30] sm:$0xff]
    %v2816 = vld [vmem:[%s2 + $0x38] sm:$0xff]
    %v2817 = vld [vmem:[%s2 + $0x40] sm:$0xff]
    %v2818 = vld [vmem:[%s2 + $0x48] sm:$0xff]
    %v2819 = vld [vmem:[%s2 + $0x50] sm:$0xff]
    %v2820 = vld [vmem:[%s2 + $0x58] sm:$0xff]
    %v2821 = vld [vmem:[%s2 + $0x60] sm:$0xff]
    %v2822 = vld [vmem:[%s2 + $0x68] sm:$0xff]
    %v2823 = vld [vmem:[%s2 + $0x70] sm:$0xff]
    %v2824 = vld [vmem:[%s2 + $0x78] sm:$0xff]
    %v2825 = vld [vmem:[%s3] sm:$0x1]
    %2826 = vmatprep.subr.mxu0 0.0
    %2827 = vmatpush1.msra.mxu0 %v2824
    %2828 = vmatprep.subr.mxu0 0.0
    %2829 = vmatpush1.msra.mxu0 %v2823
    %2830 = vmatprep.subr.mxu0 0.0
    %2831 = vmatpush1.msra.mxu0 %v2822
    %2832 = vmatprep.subr.mxu0 0.0
    %2833 = vmatpush1.msra.mxu0 %v2821
    %2834 = vmatprep.subr.mxu0 0.0
    %2835 = vmatpush1.msra.mxu0 %v2820
    %2836 = vmatprep.subr.mxu0 0.0
    %2837 = vmatpush1.msra.mxu0 %v2819
    %2838 = vmatprep.subr.mxu0 0.0
    %2839 = vmatpush1.msra.mxu0 %v2818
    %2840 = vmatprep.subr.mxu0 0.0
    %2841 = vmatpush1.msra.mxu0 %v2817
    %2842 = vmatprep.subr.mxu0 0.0
    %2843 = vmatpush1.msra.mxu0 %v2816
    %2844 = vmatprep.subr.mxu0 0.0
    %2845 = vmatpush1.msra.mxu0 %v2815
    %2846 = vmatprep.subr.mxu0 0.0
    %2847 = vmatpush1.msra.mxu0 %v2814
    %2848 = vmatprep.subr.mxu0 0.0
    %2849 = vmatpush1.msra.mxu0 %v2813
    %2850 = vmatprep.subr.mxu0 0.0
    %2851 = vmatpush1.msra.mxu0 %v2812
    %2852 = vmatprep.subr.mxu0 0.0
    %2853 = vmatpush1.msra.mxu0 %v2811
    %2854 = vmatprep.subr.mxu0 0.0
    %2855 = vmatpush1.msra.mxu0 %v2810
    %2856 = vmatprep.subr.mxu0 0.0
    %2857 = vmatpush1.msra.mxu0 %v2809
    %2858 = vmatprep.subr.mxu0 0.0
    %2859 = vmatpush2.msra.mxu0 0.0
    %2860 = vmatprep.subr.mxu0 0.0
    %2861 = vmatpush2.msra.mxu0 0.0
    %2862 = vmatprep.subr.mxu0 0.0
    %2863 = vmatpush2.msra.mxu0 0.0
    %2864 = vmatprep.subr.mxu0 0.0
    %2865 = vmatpush2.msra.mxu0 0.0
    %2866 = vmatprep.subr.mxu0 0.0
    %2867 = vmatpush2.msra.mxu0 0.0
    %2868 = vmatprep.subr.mxu0 0.0
    %2869 = vmatpush2.msra.mxu0 0.0
    %2870 = vmatprep.subr.mxu0 0.0
    %2871 = vmatpush2.msra.mxu0 0.0
    %2872 = vmatprep.subr.mxu0 0.0
    %2873 = vmatpush2.msra.mxu0 0.0
    %2874 = vmatprep.subr.mxu0 0.0
    %2875 = vmatpush2.msra.mxu0 0.0
    %2876 = vmatprep.subr.mxu0 0.0
    %2877 = vmatpush2.msra.mxu0 0.0
    %2878 = vmatprep.subr.mxu0 0.0
    %2879 = vmatpush2.msra.mxu0 0.0
    %2880 = vmatprep.subr.mxu0 0.0
    %2881 = vmatpush2.msra.mxu0 0.0
    %2882 = vmatprep.subr.mxu0 0.0
    %2883 = vmatpush2.msra.mxu0 0.0
    %2884 = vmatprep.subr.mxu0 0.0
    %2885 = vmatpush2.msra.mxu0 0.0
    %2886 = vmatprep.subr.mxu0 0.0
    %2887 = vmatpush2.msra.mxu0 0.0
    %2888 = vmatprep.subr.mxu0 0.0
    %2889 = vmatpush2.msra.mxu0 0.0
    %2890 = vmatprep.mubr.f32.mxu0 0.0
    %2891 = vmatmul.mubr.f32.gmra.mxu0 %v2808
    %v2892 = vpop.f32.mrf.mxu0
    %v2893 = vadd.f32 %v2825, %v2892
    %v2894 = vpop.f32.mrf.mxu0
    %2895 = vdwg.mxu0
    %v2896 = vsel %vm584, %v2893, -inf
    %2897 = vmax.xlane.f32.xlu0 %v2896
    %v2898 = vpop.xlane.xlu0 %2897
    %v2899 = vsub.f32 %v2893, %v2898
    %v2900 = vmul.f32 %v2899, 1.442695
    %v2901 = vpow.pop %v2900
    %v2902 = vsel %vm584, %v2901, 0.0
    %2903 = vadd.xlane.f32.xlu0 %v2902
    %v2904 = vpop.xlane.xlu0 %2903
    %v2905 = vrcp.pop %v2904
    %v2906 = vmul.f32 %v2901, %v2905
    %v2907 = vld [vmem:[%s1] sm:$0xff]
    %v2908 = vld [vmem:[%s1 + $0x8] sm:$0xff]
    %v2909 = vld [vmem:[%s1 + $0x10] sm:$0xff]
    %v2910 = vld [vmem:[%s1 + $0x18] sm:$0xff]
    %v2911 = vld [vmem:[%s1 + $0x20] sm:$0xff]
    %v2912 = vld [vmem:[%s1 + $0x28] sm:$0xff]
    %v2913 = vld [vmem:[%s1 + $0x30] sm:$0xff]
    %v2914 = vld [vmem:[%s1 + $0x38] sm:$0xff]
    %v2915 = vld [vmem:[%s1 + $0x40] sm:$0xff]
    %v2916 = vld [vmem:[%s1 + $0x48] sm:$0xff]
    %v2917 = vld [vmem:[%s1 + $0x50] sm:$0xff]
    %v2918 = vld [vmem:[%s1 + $0x58] sm:$0xff]
    %v2919 = vld [vmem:[%s1 + $0x60] sm:$0xff]
    %v2920 = vld [vmem:[%s1 + $0x68] sm:$0xff]
    %v2921 = vld [vmem:[%s1 + $0x70] sm:$0xff]
    %v2922 = vld [vmem:[%s1 + $0x78] sm:$0xff]
    %2923 = vmatprep.subr.mxu0 0.0
    %2924 = vmatpush1.msra.mxu0 %v2922
    %2925 = vmatprep.subr.mxu0 0.0
    %2926 = vmatpush1.msra.mxu0 %v2921
    %2927 = vmatprep.subr.mxu0 0.0
    %2928 = vmatpush1.msra.mxu0 %v2920
    %2929 = vmatprep.subr.mxu0 0.0
    %2930 = vmatpush1.msra.mxu0 %v2919
    %2931 = vmatprep.subr.mxu0 0.0
    %2932 = vmatpush1.msra.mxu0 %v2918
    %2933 = vmatprep.subr.mxu0 0.0
    %2934 = vmatpush1.msra.mxu0 %v2917
    %2935 = vmatprep.subr.mxu0 0.0
    %2936 = vmatpush1.msra.mxu0 %v2916
    %2937 = vmatprep.subr.mxu0 0.0
    %2938 = vmatpush1.msra.mxu0 %v2915
    %2939 = vmatprep.subr.mxu0 0.0
    %2940 = vmatpush1.msra.mxu0 %v2914
    %2941 = vmatprep.subr.mxu0 0.0
    %2942 = vmatpush1.msra.mxu0 %v2913
    %2943 = vmatprep.subr.mxu0 0.0
    %2944 = vmatpush1.msra.mxu0 %v2912
    %2945 = vmatprep.subr.mxu0 0.0
    %2946 = vmatpush1.msra.mxu0 %v2911
    %2947 = vmatprep.subr.mxu0 0.0
    %2948 = vmatpush1.msra.mxu0 %v2910
    %2949 = vmatprep.subr.mxu0 0.0
    %2950 = vmatpush1.msra.mxu0 %v2909
    %2951 = vmatprep.subr.mxu0 0.0
    %2952 = vmatpush1.msra.mxu0 %v2908
    %2953 = vmatprep.subr.mxu0 0.0
    %2954 = vmatpush1.msra.mxu0 %v2907
    %2955 = vmatprep.subr.mxu0 0.0
    %2956 = vmatpush2.msra.mxu0 0.0
    %2957 = vmatprep.subr.mxu0 0.0
    %2958 = vmatpush2.msra.mxu0 0.0
    %2959 = vmatprep.subr.mxu0 0.0
    %2960 = vmatpush2.msra.mxu0 0.0
    %2961 = vmatprep.subr.mxu0 0.0
    %2962 = vmatpush2.msra.mxu0 0.0
    %2963 = vmatprep.subr.mxu0 0.0
    %2964 = vmatpush2.msra.mxu0 0.0
    %2965 = vmatprep.subr.mxu0 0.0
    %2966 = vmatpush2.msra.mxu0 0.0
    %2967 = vmatprep.subr.mxu0 0.0
    %2968 = vmatpush2.msra.mxu0 0.0
    %2969 = vmatprep.subr.mxu0 0.0
    %2970 = vmatpush2.msra.mxu0 0.0
    %2971 = vmatprep.subr.mxu0 0.0
    %2972 = vmatpush2.msra.mxu0 0.0
    %2973 = vmatprep.subr.mxu0 0.0
    %2974 = vmatpush2.msra.mxu0 0.0
    %2975 = vmatprep.subr.mxu0 0.0
    %2976 = vmatpush2.msra.mxu0 0.0
    %2977 = vmatprep.subr.mxu0 0.0
    %2978 = vmatpush2.msra.mxu0 0.0
    %2979 = vmatprep.subr.mxu0 0.0
    %2980 = vmatpush2.msra.mxu0 0.0
    %2981 = vmatprep.subr.mxu0 0.0
    %2982 = vmatpush2.msra.mxu0 0.0
    %2983 = vmatprep.subr.mxu0 0.0
    %2984 = vmatpush2.msra.mxu0 0.0
    %2985 = vmatprep.subr.mxu0 0.0
    %2986 = vmatpush2.msra.mxu0 0.0
    %2987 = vmatprep.mubr.f32.mxu0 0.0
    %2988 = vmatmul.mubr.f32.gmra.mxu0 %v2906
    %v2989 = vpop.f32.mrf.mxu0
    %v2990 = vadd.f32 0.0, %v2989
    %v2991 = vpop.f32.mrf.mxu0
    %2992 = vdwg.mxu0
    %2993 = vst.msk [vmem:[#allocation2] sm:$0x1] %vm685, %v2808
    %2994 = vst.msk [vmem:[#allocation2 + $0x1] sm:$0x1] %vm685, %v2990
    %v2995 = vld [vmem:[#allocation2] sm:$0x3]
    %v2996 = vld [vmem:[%s7] sm:$0xff]
    %v2997 = vld [vmem:[%s7 + $0x8] sm:$0xff]
    %v2998 = vld [vmem:[%s7 + $0x10] sm:$0xff]
    %v2999 = vld [vmem:[%s7 + $0x18] sm:$0xff]
    %v3000 = vld [vmem:[%s7 + $0x20] sm:$0xff]
    %v3001 = vld [vmem:[%s7 + $0x28] sm:$0xff]
    %v3002 = vld [vmem:[%s7 + $0x30] sm:$0xff]
    %v3003 = vld [vmem:[%s7 + $0x38] sm:$0xff]
    %v3004 = vld [vmem:[%s7 + $0x40] sm:$0xff]
    %v3005 = vld [vmem:[%s7 + $0x48] sm:$0xff]
    %v3006 = vld [vmem:[%s7 + $0x50] sm:$0xff]
    %v3007 = vld [vmem:[%s7 + $0x58] sm:$0xff]
    %v3008 = vld [vmem:[%s7 + $0x60] sm:$0xff]
    %v3009 = vld [vmem:[%s7 + $0x68] sm:$0xff]
    %v3010 = vld [vmem:[%s7 + $0x70] sm:$0xff]
    %v3011 = vld [vmem:[%s7 + $0x78] sm:$0xff]
    %v3012 = vld [vmem:[%s7 + $0x80] sm:$0xff]
    %v3013 = vld [vmem:[%s7 + $0x88] sm:$0xff]
    %v3014 = vld [vmem:[%s7 + $0x90] sm:$0xff]
    %v3015 = vld [vmem:[%s7 + $0x98] sm:$0xff]
    %v3016 = vld [vmem:[%s7 + $0xa0] sm:$0xff]
    %v3017 = vld [vmem:[%s7 + $0xa8] sm:$0xff]
    %v3018 = vld [vmem:[%s7 + $0xb0] sm:$0xff]
    %v3019 = vld [vmem:[%s7 + $0xb8] sm:$0xff]
    %v3020 = vld [vmem:[%s7 + $0xc0] sm:$0xff]
    %v3021 = vld [vmem:[%s7 + $0xc8] sm:$0xff]
    %v3022 = vld [vmem:[%s7 + $0xd0] sm:$0xff]
    %v3023 = vld [vmem:[%s7 + $0xd8] sm:$0xff]
    %v3024 = vld [vmem:[%s7 + $0xe0] sm:$0xff]
    %v3025 = vld [vmem:[%s7 + $0xe8] sm:$0xff]
    %v3026 = vld [vmem:[%s7 + $0xf0] sm:$0xff]
    %v3027 = vld [vmem:[%s7 + $0xf8] sm:$0xff]
    %v3028 = vld [vmem:[%s8] sm:$0x1]
    %v3030 = vlaneseq
    %v3031 = vshrl.u32 %v3030, 7
    %v3032 = vsub.s32 0, %v3031
    %v3033 = vrot.slane %v2995, %v3032
    %v3034 = vlaneseq
    %v3035 = vshrl.u32 %v3034, 7
    %v3036 = vsub.s32 1, %v3035
    %v3037 = vrot.slane %v2995, %v3036
    %3040 = vmatprep.subr.mxu0 0.0
    %3041 = vmatpush1.msra.mxu0 %v3011
    %3042 = vmatprep.subr.mxu0 0.0
    %3043 = vmatpush1.msra.mxu0 %v3010
    %3044 = vmatprep.subr.mxu0 0.0
    %3045 = vmatpush1.msra.mxu0 %v3009
    %3046 = vmatprep.subr.mxu0 0.0
    %3047 = vmatpush1.msra.mxu0 %v3008
    %3048 = vmatprep.subr.mxu0 0.0
    %3049 = vmatpush1.msra.mxu0 %v3007
    %3050 = vmatprep.subr.mxu0 0.0
    %3051 = vmatpush1.msra.mxu0 %v3006
    %3052 = vmatprep.subr.mxu0 0.0
    %3053 = vmatpush1.msra.mxu0 %v3005
    %3054 = vmatprep.subr.mxu0 0.0
    %3055 = vmatpush1.msra.mxu0 %v3004
    %3056 = vmatprep.subr.mxu0 0.0
    %3057 = vmatpush1.msra.mxu0 %v3003
    %3058 = vmatprep.subr.mxu0 0.0
    %3059 = vmatpush1.msra.mxu0 %v3002
    %3060 = vmatprep.subr.mxu0 0.0
    %3061 = vmatpush1.msra.mxu0 %v3001
    %3062 = vmatprep.subr.mxu0 0.0
    %3063 = vmatpush1.msra.mxu0 %v3000
    %3064 = vmatprep.subr.mxu0 0.0
    %3065 = vmatpush1.msra.mxu0 %v2999
    %3066 = vmatprep.subr.mxu0 0.0
    %3067 = vmatpush1.msra.mxu0 %v2998
    %3068 = vmatprep.subr.mxu0 0.0
    %3069 = vmatpush1.msra.mxu0 %v2997
    %3070 = vmatprep.subr.mxu0 0.0
    %3071 = vmatpush1.msra.mxu0 %v2996
    %3072 = vmatprep.subr.mxu0 0.0
    %3073 = vmatpush2.msra.mxu0 %v3027
    %3074 = vmatprep.subr.mxu0 0.0
    %3075 = vmatpush2.msra.mxu0 %v3026
    %3076 = vmatprep.subr.mxu0 0.0
    %3077 = vmatpush2.msra.mxu0 %v3025
    %3078 = vmatprep.subr.mxu0 0.0
    %3079 = vmatpush2.msra.mxu0 %v3024
    %3080 = vmatprep.subr.mxu0 0.0
    %3081 = vmatpush2.msra.mxu0 %v3023
    %3082 = vmatprep.subr.mxu0 0.0
    %3083 = vmatpush2.msra.mxu0 %v3022
    %3084 = vmatprep.subr.mxu0 0.0
    %3085 = vmatpush2.msra.mxu0 %v3021
    %3086 = vmatprep.subr.mxu0 0.0
    %3087 = vmatpush2.msra.mxu0 %v3020
    %3088 = vmatprep.subr.mxu0 0.0
    %3089 = vmatpush2.msra.mxu0 %v3019
    %3090 = vmatprep.subr.mxu0 0.0
    %3091 = vmatpush2.msra.mxu0 %v3018
    %3092 = vmatprep.subr.mxu0 0.0
    %3093 = vmatpush2.msra.mxu0 %v3017
    %3094 = vmatprep.subr.mxu0 0.0
    %3095 = vmatpush2.msra.mxu0 %v3016
    %3096 = vmatprep.subr.mxu0 0.0
    %3097 = vmatpush2.msra.mxu0 %v3015
    %3098 = vmatprep.subr.mxu0 0.0
    %3099 = vmatpush2.msra.mxu0 %v3014
    %3100 = vmatprep.subr.mxu0 0.0
    %3101 = vmatpush2.msra.mxu0 %v3013
    %3102 = vmatprep.subr.mxu0 0.0
    %3103 = vmatpush2.msra.mxu0 %v3012
    %3104 = vmatprep.mubr.f32.mxu0 %v3037
    %3105 = vmatmul.mubr.f32.gmra.mxu0 %v3033
    %v3106 = vpop.f32.mrf.mxu0
    %v3107 = vadd.f32 %v3028, %v3106
    %v3108 = vpop.f32.mrf.mxu0
    %3109 = vdwg.mxu0
    %v3110 = vsel %vm584, %v3107, -inf
    %3111 = vmax.xlane.f32.xlu0 %v3110
    %v3112 = vpop.xlane.xlu0 %3111
    %v3113 = vsub.f32 %v3107, %v3112
    %v3114 = vmul.f32 %v3113, 1.442695
    %v3115 = vpow.pop %v3114
    %v3116 = vsel %vm584, %v3115, 0.0
    %3117 = vadd.xlane.f32.xlu0 %v3116
    %v3118 = vpop.xlane.xlu0 %3117
    %v3119 = vlog2.pop %v3118
    %v3120 = vmul.f32 %v3119, 0.6931472
    %v3121 = vadd.f32 %v3112, %v3120
    %v3122 = vsub.f32 %v3107, %v3121
    %3123 = vst [vmem:[#allocation3 + $0x3] sm:$0x1] %v3122
    %3124 = vst [vmem:[#allocation5 + $0x3] sm:$0x1] %v2990
    %3125 = vst [vmem:[#allocation7 + $0x3] sm:$0x1] %v2808
    %3126 = vst [vmem:[#allocation8 + $0x3] sm:$0x1] %v2906
    %s3127 = scalar_lea.vmem %s0, 4
    %v3128 = vld [vmem:[%s3127] ss:$8 sm:$0x7]
    %v3129 = vld [vmem:[%s4] sm:$0xff]
    %v3130 = vld [vmem:[%s4 + $0x8] sm:$0xff]
    %v3131 = vld [vmem:[%s4 + $0x10] sm:$0xff]
    %v3132 = vld [vmem:[%s4 + $0x18] sm:$0xff]
    %v3133 = vld [vmem:[%s4 + $0x20] sm:$0xff]
    %v3134 = vld [vmem:[%s4 + $0x28] sm:$0xff]
    %v3135 = vld [vmem:[%s4 + $0x30] sm:$0xff]
    %v3136 = vld [vmem:[%s4 + $0x38] sm:$0xff]
    %v3137 = vld [vmem:[%s4 + $0x40] sm:$0xff]
    %v3138 = vld [vmem:[%s4 + $0x48] sm:$0xff]
    %v3139 = vld [vmem:[%s4 + $0x50] sm:$0xff]
    %v3140 = vld [vmem:[%s4 + $0x58] sm:$0xff]
    %v3141 = vld [vmem:[%s4 + $0x60] sm:$0xff]
    %v3142 = vld [vmem:[%s4 + $0x68] sm:$0xff]
    %v3143 = vld [vmem:[%s4 + $0x70] sm:$0xff]
    %v3144 = vld [vmem:[%s4 + $0x78] sm:$0xff]
    %v3145 = vld [vmem:[%s4 + $0x80] sm:$0xff]
    %v3146 = vld [vmem:[%s4 + $0x88] sm:$0xff]
    %v3147 = vld [vmem:[%s4 + $0x90] sm:$0xff]
    %v3148 = vld [vmem:[%s4 + $0x98] sm:$0xff]
    %v3149 = vld [vmem:[%s4 + $0xa0] sm:$0xff]
    %v3150 = vld [vmem:[%s4 + $0xa8] sm:$0xff]
    %v3151 = vld [vmem:[%s4 + $0xb0] sm:$0xff]
    %v3152 = vld [vmem:[%s4 + $0xb8] sm:$0xff]
    %v3153 = vld [vmem:[%s4 + $0xc0] sm:$0xff]
    %v3154 = vld [vmem:[%s4 + $0xc8] sm:$0xff]
    %v3155 = vld [vmem:[%s4 + $0xd0] sm:$0xff]
    %v3156 = vld [vmem:[%s4 + $0xd8] sm:$0xff]
    %v3157 = vld [vmem:[%s4 + $0xe0] sm:$0xff]
    %v3158 = vld [vmem:[%s4 + $0xe8] sm:$0xff]
    %v3159 = vld [vmem:[%s4 + $0xf0] sm:$0xff]
    %v3160 = vld [vmem:[%s4 + $0xf8] sm:$0xff]
    %v3161 = vld [vmem:[%s4 + $0x100] sm:$0xff]
    %v3162 = vld [vmem:[%s4 + $0x108] sm:$0xff]
    %v3163 = vld [vmem:[%s4 + $0x110] sm:$0xff]
    %v3164 = vld [vmem:[%s4 + $0x118] sm:$0xff]
    %v3165 = vld [vmem:[%s4 + $0x120] sm:$0xff]
    %v3166 = vld [vmem:[%s4 + $0x128] sm:$0xff]
    %v3167 = vld [vmem:[%s4 + $0x130] sm:$0xff]
    %v3168 = vld [vmem:[%s4 + $0x138] sm:$0xff]
    %v3169 = vld [vmem:[%s4 + $0x140] sm:$0xff]
    %v3170 = vld [vmem:[%s4 + $0x148] sm:$0xff]
    %v3171 = vld [vmem:[%s4 + $0x150] sm:$0xff]
    %v3172 = vld [vmem:[%s4 + $0x158] sm:$0xff]
    %v3173 = vld [vmem:[%s4 + $0x160] sm:$0xff]
    %v3174 = vld [vmem:[%s4 + $0x168] sm:$0xff]
    %v3175 = vld [vmem:[%s4 + $0x170] sm:$0xff]
    %v3176 = vld [vmem:[%s4 + $0x178] sm:$0xff]
    %3177 = vmatprep.subr.mxu0 %v3175
    %3178 = vmatpush1.msra.mxu0 %v3174
    %3179 = vmatprep.subr.mxu0 %v3172
    %3180 = vmatpush1.msra.mxu0 %v3171
    %3181 = vmatprep.subr.mxu0 %v3169
    %3182 = vmatpush1.msra.mxu0 %v3168
    %3183 = vmatprep.subr.mxu0 %v3166
    %3184 = vmatpush1.msra.mxu0 %v3165
    %3185 = vmatprep.subr.mxu0 %v3163
    %3186 = vmatpush1.msra.mxu0 %v3162
    %3187 = vmatprep.subr.mxu0 %v3160
    %3188 = vmatpush1.msra.mxu0 %v3159
    %3189 = vmatprep.subr.mxu0 %v3157
    %3190 = vmatpush1.msra.mxu0 %v3156
    %3191 = vmatprep.subr.mxu0 %v3154
    %3192 = vmatpush1.msra.mxu0 %v3153
    %3193 = vmatprep.subr.mxu0 %v3151
    %3194 = vmatpush1.msra.mxu0 %v3150
    %3195 = vmatprep.subr.mxu0 %v3148
    %3196 = vmatpush1.msra.mxu0 %v3147
    %3197 = vmatprep.subr.mxu0 %v3145
    %3198 = vmatpush1.msra.mxu0 %v3144
    %3199 = vmatprep.subr.mxu0 %v3142
    %3200 = vmatpush1.msra.mxu0 %v3141
    %3201 = vmatprep.subr.mxu0 %v3139
    %3202 = vmatpush1.msra.mxu0 %v3138
    %3203 = vmatprep.subr.mxu0 %v3136
    %3204 = vmatpush1.msra.mxu0 %v3135
    %3205 = vmatprep.subr.mxu0 %v3133
    %3206 = vmatpush1.msra.mxu0 %v3132
    %3207 = vmatprep.subr.mxu0 %v3130
    %3208 = vmatpush1.msra.mxu0 %v3129
    %3209 = vmatprep.subr.mxu0 0.0
    %3210 = vmatpush2.msra.mxu0 0.0
    %3211 = vmatprep.subr.mxu0 0.0
    %3212 = vmatpush2.msra.mxu0 0.0
    %3213 = vmatprep.subr.mxu0 0.0
    %3214 = vmatpush2.msra.mxu0 0.0
    %3215 = vmatprep.subr.mxu0 0.0
    %3216 = vmatpush2.msra.mxu0 0.0
    %3217 = vmatprep.subr.mxu0 0.0
    %3218 = vmatpush2.msra.mxu0 0.0
    %3219 = vmatprep.subr.mxu0 0.0
    %3220 = vmatpush2.msra.mxu0 0.0
    %3221 = vmatprep.subr.mxu0 0.0
    %3222 = vmatpush2.msra.mxu0 0.0
    %3223 = vmatprep.subr.mxu0 0.0
    %3224 = vmatpush2.msra.mxu0 0.0
    %3225 = vmatprep.subr.mxu0 0.0
    %3226 = vmatpush2.msra.mxu0 0.0
    %3227 = vmatprep.subr.mxu0 0.0
    %3228 = vmatpush2.msra.mxu0 0.0
    %3229 = vmatprep.subr.mxu0 0.0
    %3230 = vmatpush2.msra.mxu0 0.0
    %3231 = vmatprep.subr.mxu0 0.0
    %3232 = vmatpush2.msra.mxu0 0.0
    %3233 = vmatprep.subr.mxu0 0.0
    %3234 = vmatpush2.msra.mxu0 0.0
    %3235 = vmatprep.subr.mxu0 0.0
    %3236 = vmatpush2.msra.mxu0 0.0
    %3237 = vmatprep.subr.mxu0 0.0
    %3238 = vmatpush2.msra.mxu0 0.0
    %3239 = vmatprep.subr.mxu0 0.0
    %3240 = vmatpush2.msra.mxu0 0.0
    %3241 = vmatprep.mubr.f32.mxu0 0.0
    %3242 = vmatmul.mubr.f32.gmra.mxu0 %v2990
    %v3243 = vpop.f32.mrf.mxu0
    %v3244 = vadd.f32 0.0, %v3243
    %v3245 = vpop.f32.mrf.mxu0
    %v3246 = vadd.f32 0.0, %v3245
    %3247 = vdwg.mxu0
    %3248 = vmatprep.subr.mxu0 0.0
    %3249 = vmatpush1.msra.mxu0 %v3176
    %3250 = vmatprep.subr.mxu0 0.0
    %3251 = vmatpush1.msra.mxu0 %v3173
    %3252 = vmatprep.subr.mxu0 0.0
    %3253 = vmatpush1.msra.mxu0 %v3170
    %3254 = vmatprep.subr.mxu0 0.0
    %3255 = vmatpush1.msra.mxu0 %v3167
    %3256 = vmatprep.subr.mxu0 0.0
    %3257 = vmatpush1.msra.mxu0 %v3164
    %3258 = vmatprep.subr.mxu0 0.0
    %3259 = vmatpush1.msra.mxu0 %v3161
    %3260 = vmatprep.subr.mxu0 0.0
    %3261 = vmatpush1.msra.mxu0 %v3158
    %3262 = vmatprep.subr.mxu0 0.0
    %3263 = vmatpush1.msra.mxu0 %v3155
    %3264 = vmatprep.subr.mxu0 0.0
    %3265 = vmatpush1.msra.mxu0 %v3152
    %3266 = vmatprep.subr.mxu0 0.0
    %3267 = vmatpush1.msra.mxu0 %v3149
    %3268 = vmatprep.subr.mxu0 0.0
    %3269 = vmatpush1.msra.mxu0 %v3146
    %3270 = vmatprep.subr.mxu0 0.0
    %3271 = vmatpush1.msra.mxu0 %v3143
    %3272 = vmatprep.subr.mxu0 0.0
    %3273 = vmatpush1.msra.mxu0 %v3140
    %3274 = vmatprep.subr.mxu0 0.0
    %3275 = vmatpush1.msra.mxu0 %v3137
    %3276 = vmatprep.subr.mxu0 0.0
    %3277 = vmatpush1.msra.mxu0 %v3134
    %3278 = vmatprep.subr.mxu0 0.0
    %3279 = vmatpush1.msra.mxu0 %v3131
    %3280 = vmatprep.subr.mxu0 0.0
    %3281 = vmatpush2.msra.mxu0 0.0
    %3282 = vmatprep.subr.mxu0 0.0
    %3283 = vmatpush2.msra.mxu0 0.0
    %3284 = vmatprep.subr.mxu0 0.0
    %3285 = vmatpush2.msra.mxu0 0.0
    %3286 = vmatprep.subr.mxu0 0.0
    %3287 = vmatpush2.msra.mxu0 0.0
    %3288 = vmatprep.subr.mxu0 0.0
    %3289 = vmatpush2.msra.mxu0 0.0
    %3290 = vmatprep.subr.mxu0 0.0
    %3291 = vmatpush2.msra.mxu0 0.0
    %3292 = vmatprep.subr.mxu0 0.0
    %3293 = vmatpush2.msra.mxu0 0.0
    %3294 = vmatprep.subr.mxu0 0.0
    %3295 = vmatpush2.msra.mxu0 0.0
    %3296 = vmatprep.subr.mxu0 0.0
    %3297 = vmatpush2.msra.mxu0 0.0
    %3298 = vmatprep.subr.mxu0 0.0
    %3299 = vmatpush2.msra.mxu0 0.0
    %3300 = vmatprep.subr.mxu0 0.0
    %3301 = vmatpush2.msra.mxu0 0.0
    %3302 = vmatprep.subr.mxu0 0.0
    %3303 = vmatpush2.msra.mxu0 0.0
    %3304 = vmatprep.subr.mxu0 0.0
    %3305 = vmatpush2.msra.mxu0 0.0
    %3306 = vmatprep.subr.mxu0 0.0
    %3307 = vmatpush2.msra.mxu0 0.0
    %3308 = vmatprep.subr.mxu0 0.0
    %3309 = vmatpush2.msra.mxu0 0.0
    %3310 = vmatprep.subr.mxu0 0.0
    %3311 = vmatpush2.msra.mxu0 0.0
    %3312 = vmatprep.mubr.f32.mxu0 0.0
    %3313 = vmatmul.mubr.f32.gmra.mxu0 %v2990
    %v3314 = vpop.f32.mrf.mxu0
    %v3315 = vadd.f32 0.0, %v3314
    %v3316 = vpop.f32.mrf.mxu0
    %3317 = vdwg.mxu0
    %v3321 = vcombine.low %v3244, %v3246
    %v3323 = vunpack.c.l.s4 1966171168
    %v3324 = vunpack.c.0.s8 %v3323
    %v3325 = vlaneseq
    %v3326 = vshrl.u32 %v3325, 7
    %v3327 = vsub.s32 %v3324, %v3326
    %v3328 = vrot.slane %v3321, %v3327
    %v3330 = vunpack.c.l.s4 1966171168
    %v3331 = vunpack.c.0.s8 %v3330
    %v3332 = vlaneseq
    %v3333 = vshrl.u32 %v3332, 7
    %v3334 = vsub.s32 %v3331, %v3333
    %v3335 = vrot.slane %v3315, %v3334
    %v3336 = vcombine.low %v3328, %v3335
    %v3338 = vunpack.c.l.s4 1966171168
    %v3339 = vunpack.c.0.s8 %v3338
    %v3340 = vlaneseq
    %v3341 = vshrl.u32 %v3340, 7
    %v3342 = vsub.s32 %v3339, %v3341
    %v3343 = vrot.slane %v3336, %v3342
    %v3345 = vadd.f32 %v3128, %v3343
    %v3346 = vld [vmem:[%s5] sm:$0xff]
    %v3347 = vld [vmem:[%s5 + $0x8] sm:$0xff]
    %v3348 = vld [vmem:[%s5 + $0x10] sm:$0xff]
    %v3349 = vld [vmem:[%s5 + $0x18] sm:$0xff]
    %v3350 = vld [vmem:[%s5 + $0x20] sm:$0xff]
    %v3351 = vld [vmem:[%s5 + $0x28] sm:$0xff]
    %v3352 = vld [vmem:[%s5 + $0x30] sm:$0xff]
    %v3353 = vld [vmem:[%s5 + $0x38] sm:$0xff]
    %v3354 = vld [vmem:[%s5 + $0x40] sm:$0xff]
    %v3355 = vld [vmem:[%s5 + $0x48] sm:$0xff]
    %v3356 = vld [vmem:[%s5 + $0x50] sm:$0xff]
    %v3357 = vld [vmem:[%s5 + $0x58] sm:$0xff]
    %v3358 = vld [vmem:[%s5 + $0x60] sm:$0xff]
    %v3359 = vld [vmem:[%s5 + $0x68] sm:$0xff]
    %v3360 = vld [vmem:[%s5 + $0x70] sm:$0xff]
    %v3361 = vld [vmem:[%s5 + $0x78] sm:$0xff]
    %v3362 = vld [vmem:[%s5 + $0x80] sm:$0xff]
    %v3363 = vld [vmem:[%s5 + $0x88] sm:$0xff]
    %v3364 = vld [vmem:[%s5 + $0x90] sm:$0xff]
    %v3365 = vld [vmem:[%s5 + $0x98] sm:$0xff]
    %v3366 = vld [vmem:[%s5 + $0xa0] sm:$0xff]
    %v3367 = vld [vmem:[%s5 + $0xa8] sm:$0xff]
    %v3368 = vld [vmem:[%s5 + $0xb0] sm:$0xff]
    %v3369 = vld [vmem:[%s5 + $0xb8] sm:$0xff]
    %v3370 = vld [vmem:[%s5 + $0xc0] sm:$0xff]
    %v3371 = vld [vmem:[%s5 + $0xc8] sm:$0xff]
    %v3372 = vld [vmem:[%s5 + $0xd0] sm:$0xff]
    %v3373 = vld [vmem:[%s5 + $0xd8] sm:$0xff]
    %v3374 = vld [vmem:[%s5 + $0xe0] sm:$0xff]
    %v3375 = vld [vmem:[%s5 + $0xe8] sm:$0xff]
    %v3376 = vld [vmem:[%s5 + $0xf0] sm:$0xff]
    %v3377 = vld [vmem:[%s5 + $0xf8] sm:$0xff]
    %v3378 = vld [vmem:[%s5 + $0x100] sm:$0xff]
    %v3379 = vld [vmem:[%s5 + $0x108] sm:$0xff]
    %v3380 = vld [vmem:[%s5 + $0x110] sm:$0xff]
    %v3381 = vld [vmem:[%s5 + $0x118] sm:$0xff]
    %v3382 = vld [vmem:[%s5 + $0x120] sm:$0xff]
    %v3383 = vld [vmem:[%s5 + $0x128] sm:$0xff]
    %v3384 = vld [vmem:[%s5 + $0x130] sm:$0xff]
    %v3385 = vld [vmem:[%s5 + $0x138] sm:$0xff]
    %v3386 = vld [vmem:[%s5 + $0x140] sm:$0xff]
    %v3387 = vld [vmem:[%s5 + $0x148] sm:$0xff]
    %v3388 = vld [vmem:[%s5 + $0x150] sm:$0xff]
    %v3389 = vld [vmem:[%s5 + $0x158] sm:$0xff]
    %v3390 = vld [vmem:[%s5 + $0x160] sm:$0xff]
    %v3391 = vld [vmem:[%s5 + $0x168] sm:$0xff]
    %v3392 = vld [vmem:[%s5 + $0x170] sm:$0xff]
    %v3393 = vld [vmem:[%s5 + $0x178] sm:$0xff]
    %v3394 = vld [vmem:[%s6] sm:$0x7]
    %v3396 = vlaneseq
    %v3397 = vshrl.u32 %v3396, 7
    %v3398 = vsub.s32 0, %v3397
    %v3399 = vrot.slane %v3394, %v3398
    %v3400 = vlaneseq
    %v3401 = vshrl.u32 %v3400, 7
    %v3402 = vsub.s32 1, %v3401
    %v3403 = vrot.slane %v3394, %v3402
    %v3404 = vlaneseq
    %v3405 = vshrl.u32 %v3404, 7
    %v3406 = vsub.s32 2, %v3405
    %v3407 = vrot.slane %v3394, %v3406
    %3411 = vmatprep.subr.mxu0 %v3392
    %3412 = vmatpush1.msra.mxu0 %v3391
    %3413 = vmatprep.subr.mxu0 %v3389
    %3414 = vmatpush1.msra.mxu0 %v3388
    %3415 = vmatprep.subr.mxu0 %v3386
    %3416 = vmatpush1.msra.mxu0 %v3385
    %3417 = vmatprep.subr.mxu0 %v3383
    %3418 = vmatpush1.msra.mxu0 %v3382
    %3419 = vmatprep.subr.mxu0 %v3380
    %3420 = vmatpush1.msra.mxu0 %v3379
    %3421 = vmatprep.subr.mxu0 %v3377
    %3422 = vmatpush1.msra.mxu0 %v3376
    %3423 = vmatprep.subr.mxu0 %v3374
    %3424 = vmatpush1.msra.mxu0 %v3373
    %3425 = vmatprep.subr.mxu0 %v3371
    %3426 = vmatpush1.msra.mxu0 %v3370
    %3427 = vmatprep.subr.mxu0 %v3368
    %3428 = vmatpush1.msra.mxu0 %v3367
    %3429 = vmatprep.subr.mxu0 %v3365
    %3430 = vmatpush1.msra.mxu0 %v3364
    %3431 = vmatprep.subr.mxu0 %v3362
    %3432 = vmatpush1.msra.mxu0 %v3361
    %3433 = vmatprep.subr.mxu0 %v3359
    %3434 = vmatpush1.msra.mxu0 %v3358
    %3435 = vmatprep.subr.mxu0 %v3356
    %3436 = vmatpush1.msra.mxu0 %v3355
    %3437 = vmatprep.subr.mxu0 %v3353
    %3438 = vmatpush1.msra.mxu0 %v3352
    %3439 = vmatprep.subr.mxu0 %v3350
    %3440 = vmatpush1.msra.mxu0 %v3349
    %3441 = vmatprep.subr.mxu0 %v3347
    %3442 = vmatpush1.msra.mxu0 %v3346
    %3443 = vmatprep.subr.mxu0 0.0
    %3444 = vmatpush2.msra.mxu0 0.0
    %3445 = vmatprep.subr.mxu0 0.0
    %3446 = vmatpush2.msra.mxu0 0.0
    %3447 = vmatprep.subr.mxu0 0.0
    %3448 = vmatpush2.msra.mxu0 0.0
    %3449 = vmatprep.subr.mxu0 0.0
    %3450 = vmatpush2.msra.mxu0 0.0
    %3451 = vmatprep.subr.mxu0 0.0
    %3452 = vmatpush2.msra.mxu0 0.0
    %3453 = vmatprep.subr.mxu0 0.0
    %3454 = vmatpush2.msra.mxu0 0.0
    %3455 = vmatprep.subr.mxu0 0.0
    %3456 = vmatpush2.msra.mxu0 0.0
    %3457 = vmatprep.subr.mxu0 0.0
    %3458 = vmatpush2.msra.mxu0 0.0
    %3459 = vmatprep.subr.mxu0 0.0
    %3460 = vmatpush2.msra.mxu0 0.0
    %3461 = vmatprep.subr.mxu0 0.0
    %3462 = vmatpush2.msra.mxu0 0.0
    %3463 = vmatprep.subr.mxu0 0.0
    %3464 = vmatpush2.msra.mxu0 0.0
    %3465 = vmatprep.subr.mxu0 0.0
    %3466 = vmatpush2.msra.mxu0 0.0
    %3467 = vmatprep.subr.mxu0 0.0
    %3468 = vmatpush2.msra.mxu0 0.0
    %3469 = vmatprep.subr.mxu0 0.0
    %3470 = vmatpush2.msra.mxu0 0.0
    %3471 = vmatprep.subr.mxu0 0.0
    %3472 = vmatpush2.msra.mxu0 0.0
    %3473 = vmatprep.subr.mxu0 0.0
    %3474 = vmatpush2.msra.mxu0 0.0
    %3475 = vmatprep.mubr.f32.mxu0 0.0
    %3476 = vmatmul.mubr.f32.gmra.mxu0 %v2808
    %v3477 = vpop.f32.mrf.mxu0
    %v3478 = vadd.f32 %v3399, %v3477
    %v3479 = vpop.f32.mrf.mxu0
    %v3480 = vadd.f32 %v3403, %v3479
    %3481 = vdwg.mxu0
    %3482 = vmatprep.subr.mxu0 0.0
    %3483 = vmatpush1.msra.mxu0 %v3393
    %3484 = vmatprep.subr.mxu0 0.0
    %3485 = vmatpush1.msra.mxu0 %v3390
    %3486 = vmatprep.subr.mxu0 0.0
    %3487 = vmatpush1.msra.mxu0 %v3387
    %3488 = vmatprep.subr.mxu0 0.0
    %3489 = vmatpush1.msra.mxu0 %v3384
    %3490 = vmatprep.subr.mxu0 0.0
    %3491 = vmatpush1.msra.mxu0 %v3381
    %3492 = vmatprep.subr.mxu0 0.0
    %3493 = vmatpush1.msra.mxu0 %v3378
    %3494 = vmatprep.subr.mxu0 0.0
    %3495 = vmatpush1.msra.mxu0 %v3375
    %3496 = vmatprep.subr.mxu0 0.0
    %3497 = vmatpush1.msra.mxu0 %v3372
    %3498 = vmatprep.subr.mxu0 0.0
    %3499 = vmatpush1.msra.mxu0 %v3369
    %3500 = vmatprep.subr.mxu0 0.0
    %3501 = vmatpush1.msra.mxu0 %v3366
    %3502 = vmatprep.subr.mxu0 0.0
    %3503 = vmatpush1.msra.mxu0 %v3363
    %3504 = vmatprep.subr.mxu0 0.0
    %3505 = vmatpush1.msra.mxu0 %v3360
    %3506 = vmatprep.subr.mxu0 0.0
    %3507 = vmatpush1.msra.mxu0 %v3357
    %3508 = vmatprep.subr.mxu0 0.0
    %3509 = vmatpush1.msra.mxu0 %v3354
    %3510 = vmatprep.subr.mxu0 0.0
    %3511 = vmatpush1.msra.mxu0 %v3351
    %3512 = vmatprep.subr.mxu0 0.0
    %3513 = vmatpush1.msra.mxu0 %v3348
    %3514 = vmatprep.subr.mxu0 0.0
    %3515 = vmatpush2.msra.mxu0 0.0
    %3516 = vmatprep.subr.mxu0 0.0
    %3517 = vmatpush2.msra.mxu0 0.0
    %3518 = vmatprep.subr.mxu0 0.0
    %3519 = vmatpush2.msra.mxu0 0.0
    %3520 = vmatprep.subr.mxu0 0.0
    %3521 = vmatpush2.msra.mxu0 0.0
    %3522 = vmatprep.subr.mxu0 0.0
    %3523 = vmatpush2.msra.mxu0 0.0
    %3524 = vmatprep.subr.mxu0 0.0
    %3525 = vmatpush2.msra.mxu0 0.0
    %3526 = vmatprep.subr.mxu0 0.0
    %3527 = vmatpush2.msra.mxu0 0.0
    %3528 = vmatprep.subr.mxu0 0.0
    %3529 = vmatpush2.msra.mxu0 0.0
    %3530 = vmatprep.subr.mxu0 0.0
    %3531 = vmatpush2.msra.mxu0 0.0
    %3532 = vmatprep.subr.mxu0 0.0
    %3533 = vmatpush2.msra.mxu0 0.0
    %3534 = vmatprep.subr.mxu0 0.0
    %3535 = vmatpush2.msra.mxu0 0.0
    %3536 = vmatprep.subr.mxu0 0.0
    %3537 = vmatpush2.msra.mxu0 0.0
    %3538 = vmatprep.subr.mxu0 0.0
    %3539 = vmatpush2.msra.mxu0 0.0
    %3540 = vmatprep.subr.mxu0 0.0
    %3541 = vmatpush2.msra.mxu0 0.0
    %3542 = vmatprep.subr.mxu0 0.0
    %3543 = vmatpush2.msra.mxu0 0.0
    %3544 = vmatprep.subr.mxu0 0.0
    %3545 = vmatpush2.msra.mxu0 0.0
    %3546 = vmatprep.mubr.f32.mxu0 0.0
    %3547 = vmatmul.mubr.f32.gmra.mxu0 %v2808
    %v3548 = vpop.f32.mrf.mxu0
    %v3549 = vadd.f32 %v3407, %v3548
    %v3550 = vpop.f32.mrf.mxu0
    %3551 = vdwg.mxu0
    %v3552 = vadd.f32 %v3345, %v3478
    %v3553 = vxor.u32 %v3552, 2147483648
    %v3554 = vmul.f32 %v3553, 1.442695
    %v3555 = vpow.pop %v3554
    %v3556 = vadd.f32 %v3555, 1.0
    %v3557 = vrcp.pop %v3556
    %v3558 = vmul.f32 1.0, %v3557
    %v3560 = vrot.slane %v3345, 1
    %v3562 = vadd.f32 %v3560, %v3480
    %v3563 = vxor.u32 %v3562, 2147483648
    %v3564 = vmul.f32 %v3563, 1.442695
    %v3565 = vpow.pop %v3564
    %v3566 = vadd.f32 %v3565, 1.0
    %v3567 = vrcp.pop %v3566
    %v3568 = vmul.f32 1.0, %v3567
    %v3569 = vmul.f32 %v3558, %v3549
    %v3570 = vrot.slane %v3345, 2
    %v3572 = vadd.f32 %v3570, %v3569
    %v3573 = vtanh.pop %v3572
    %v3574 = vsub.f32 1.0, %v3568
    %v3575 = vmul.f32 %v3574, %v3573
    %v3576 = vmul.f32 %v3568, %v2808
    %v3577 = vadd.f32 %v3575, %v3576
    %v3578 = vld [vmem:[%s2] sm:$0xff]
    %v3579 = vld [vmem:[%s2 + $0x8] sm:$0xff]
    %v3580 = vld [vmem:[%s2 + $0x10] sm:$0xff]
    %v3581 = vld [vmem:[%s2 + $0x18] sm:$0xff]
    %v3582 = vld [vmem:[%s2 + $0x20] sm:$0xff]
    %v3583 = vld [vmem:[%s2 + $0x28] sm:$0xff]
    %v3584 = vld [vmem:[%s2 + $0x30] sm:$0xff]
    %v3585 = vld [vmem:[%s2 + $0x38] sm:$0xff]
    %v3586 = vld [vmem:[%s2 + $0x40] sm:$0xff]
    %v3587 = vld [vmem:[%s2 + $0x48] sm:$0xff]
    %v3588 = vld [vmem:[%s2 + $0x50] sm:$0xff]
    %v3589 = vld [vmem:[%s2 + $0x58] sm:$0xff]
    %v3590 = vld [vmem:[%s2 + $0x60] sm:$0xff]
    %v3591 = vld [vmem:[%s2 + $0x68] sm:$0xff]
    %v3592 = vld [vmem:[%s2 + $0x70] sm:$0xff]
    %v3593 = vld [vmem:[%s2 + $0x78] sm:$0xff]
    %v3594 = vld [vmem:[%s3] sm:$0x1]
    %3595 = vmatprep.subr.mxu0 0.0
    %3596 = vmatpush1.msra.mxu0 %v3593
    %3597 = vmatprep.subr.mxu0 0.0
    %3598 = vmatpush1.msra.mxu0 %v3592
    %3599 = vmatprep.subr.mxu0 0.0
    %3600 = vmatpush1.msra.mxu0 %v3591
    %3601 = vmatprep.subr.mxu0 0.0
    %3602 = vmatpush1.msra.mxu0 %v3590
    %3603 = vmatprep.subr.mxu0 0.0
    %3604 = vmatpush1.msra.mxu0 %v3589
    %3605 = vmatprep.subr.mxu0 0.0
    %3606 = vmatpush1.msra.mxu0 %v3588
    %3607 = vmatprep.subr.mxu0 0.0
    %3608 = vmatpush1.msra.mxu0 %v3587
    %3609 = vmatprep.subr.mxu0 0.0
    %3610 = vmatpush1.msra.mxu0 %v3586
    %3611 = vmatprep.subr.mxu0 0.0
    %3612 = vmatpush1.msra.mxu0 %v3585
    %3613 = vmatprep.subr.mxu0 0.0
    %3614 = vmatpush1.msra.mxu0 %v3584
    %3615 = vmatprep.subr.mxu0 0.0
    %3616 = vmatpush1.msra.mxu0 %v3583
    %3617 = vmatprep.subr.mxu0 0.0
    %3618 = vmatpush1.msra.mxu0 %v3582
    %3619 = vmatprep.subr.mxu0 0.0
    %3620 = vmatpush1.msra.mxu0 %v3581
    %3621 = vmatprep.subr.mxu0 0.0
    %3622 = vmatpush1.msra.mxu0 %v3580
    %3623 = vmatprep.subr.mxu0 0.0
    %3624 = vmatpush1.msra.mxu0 %v3579
    %3625 = vmatprep.subr.mxu0 0.0
    %3626 = vmatpush1.msra.mxu0 %v3578
    %3627 = vmatprep.subr.mxu0 0.0
    %3628 = vmatpush2.msra.mxu0 0.0
    %3629 = vmatprep.subr.mxu0 0.0
    %3630 = vmatpush2.msra.mxu0 0.0
    %3631 = vmatprep.subr.mxu0 0.0
    %3632 = vmatpush2.msra.mxu0 0.0
    %3633 = vmatprep.subr.mxu0 0.0
    %3634 = vmatpush2.msra.mxu0 0.0
    %3635 = vmatprep.subr.mxu0 0.0
    %3636 = vmatpush2.msra.mxu0 0.0
    %3637 = vmatprep.subr.mxu0 0.0
    %3638 = vmatpush2.msra.mxu0 0.0
    %3639 = vmatprep.subr.mxu0 0.0
    %3640 = vmatpush2.msra.mxu0 0.0
    %3641 = vmatprep.subr.mxu0 0.0
    %3642 = vmatpush2.msra.mxu0 0.0
    %3643 = vmatprep.subr.mxu0 0.0
    %3644 = vmatpush2.msra.mxu0 0.0
    %3645 = vmatprep.subr.mxu0 0.0
    %3646 = vmatpush2.msra.mxu0 0.0
    %3647 = vmatprep.subr.mxu0 0.0
    %3648 = vmatpush2.msra.mxu0 0.0
    %3649 = vmatprep.subr.mxu0 0.0
    %3650 = vmatpush2.msra.mxu0 0.0
    %3651 = vmatprep.subr.mxu0 0.0
    %3652 = vmatpush2.msra.mxu0 0.0
    %3653 = vmatprep.subr.mxu0 0.0
    %3654 = vmatpush2.msra.mxu0 0.0
    %3655 = vmatprep.subr.mxu0 0.0
    %3656 = vmatpush2.msra.mxu0 0.0
    %3657 = vmatprep.subr.mxu0 0.0
    %3658 = vmatpush2.msra.mxu0 0.0
    %3659 = vmatprep.mubr.f32.mxu0 0.0
    %3660 = vmatmul.mubr.f32.gmra.mxu0 %v3577
    %v3661 = vpop.f32.mrf.mxu0
    %v3662 = vadd.f32 %v3594, %v3661
    %v3663 = vpop.f32.mrf.mxu0
    %3664 = vdwg.mxu0
    %v3665 = vsel %vm584, %v3662, -inf
    %3666 = vmax.xlane.f32.xlu0 %v3665
    %v3667 = vpop.xlane.xlu0 %3666
    %v3668 = vsub.f32 %v3662, %v3667
    %v3669 = vmul.f32 %v3668, 1.442695
    %v3670 = vpow.pop %v3669
    %v3671 = vsel %vm584, %v3670, 0.0
    %3672 = vadd.xlane.f32.xlu0 %v3671
    %v3673 = vpop.xlane.xlu0 %3672
    %v3674 = vrcp.pop %v3673
    %v3675 = vmul.f32 %v3670, %v3674
    %v3676 = vld [vmem:[%s1] sm:$0xff]
    %v3677 = vld [vmem:[%s1 + $0x8] sm:$0xff]
    %v3678 = vld [vmem:[%s1 + $0x10] sm:$0xff]
    %v3679 = vld [vmem:[%s1 + $0x18] sm:$0xff]
    %v3680 = vld [vmem:[%s1 + $0x20] sm:$0xff]
    %v3681 = vld [vmem:[%s1 + $0x28] sm:$0xff]
    %v3682 = vld [vmem:[%s1 + $0x30] sm:$0xff]
    %v3683 = vld [vmem:[%s1 + $0x38] sm:$0xff]
    %v3684 = vld [vmem:[%s1 + $0x40] sm:$0xff]
    %v3685 = vld [vmem:[%s1 + $0x48] sm:$0xff]
    %v3686 = vld [vmem:[%s1 + $0x50] sm:$0xff]
    %v3687 = vld [vmem:[%s1 + $0x58] sm:$0xff]
    %v3688 = vld [vmem:[%s1 + $0x60] sm:$0xff]
    %v3689 = vld [vmem:[%s1 + $0x68] sm:$0xff]
    %v3690 = vld [vmem:[%s1 + $0x70] sm:$0xff]
    %v3691 = vld [vmem:[%s1 + $0x78] sm:$0xff]
    %3692 = vmatprep.subr.mxu0 0.0
    %3693 = vmatpush1.msra.mxu0 %v3691
    %3694 = vmatprep.subr.mxu0 0.0
    %3695 = vmatpush1.msra.mxu0 %v3690
    %3696 = vmatprep.subr.mxu0 0.0
    %3697 = vmatpush1.msra.mxu0 %v3689
    %3698 = vmatprep.subr.mxu0 0.0
    %3699 = vmatpush1.msra.mxu0 %v3688
    %3700 = vmatprep.subr.mxu0 0.0
    %3701 = vmatpush1.msra.mxu0 %v3687
    %3702 = vmatprep.subr.mxu0 0.0
    %3703 = vmatpush1.msra.mxu0 %v3686
    %3704 = vmatprep.subr.mxu0 0.0
    %3705 = vmatpush1.msra.mxu0 %v3685
    %3706 = vmatprep.subr.mxu0 0.0
    %3707 = vmatpush1.msra.mxu0 %v3684
    %3708 = vmatprep.subr.mxu0 0.0
    %3709 = vmatpush1.msra.mxu0 %v3683
    %3710 = vmatprep.subr.mxu0 0.0
    %3711 = vmatpush1.msra.mxu0 %v3682
    %3712 = vmatprep.subr.mxu0 0.0
    %3713 = vmatpush1.msra.mxu0 %v3681
    %3714 = vmatprep.subr.mxu0 0.0
    %3715 = vmatpush1.msra.mxu0 %v3680
    %3716 = vmatprep.subr.mxu0 0.0
    %3717 = vmatpush1.msra.mxu0 %v3679
    %3718 = vmatprep.subr.mxu0 0.0
    %3719 = vmatpush1.msra.mxu0 %v3678
    %3720 = vmatprep.subr.mxu0 0.0
    %3721 = vmatpush1.msra.mxu0 %v3677
    %3722 = vmatprep.subr.mxu0 0.0
    %3723 = vmatpush1.msra.mxu0 %v3676
    %3724 = vmatprep.subr.mxu0 0.0
    %3725 = vmatpush2.msra.mxu0 0.0
    %3726 = vmatprep.subr.mxu0 0.0
    %3727 = vmatpush2.msra.mxu0 0.0
    %3728 = vmatprep.subr.mxu0 0.0
    %3729 = vmatpush2.msra.mxu0 0.0
    %3730 = vmatprep.subr.mxu0 0.0
    %3731 = vmatpush2.msra.mxu0 0.0
    %3732 = vmatprep.subr.mxu0 0.0
    %3733 = vmatpush2.msra.mxu0 0.0
    %3734 = vmatprep.subr.mxu0 0.0
    %3735 = vmatpush2.msra.mxu0 0.0
    %3736 = vmatprep.subr.mxu0 0.0
    %3737 = vmatpush2.msra.mxu0 0.0
    %3738 = vmatprep.subr.mxu0 0.0
    %3739 = vmatpush2.msra.mxu0 0.0
    %3740 = vmatprep.subr.mxu0 0.0
    %3741 = vmatpush2.msra.mxu0 0.0
    %3742 = vmatprep.subr.mxu0 0.0
    %3743 = vmatpush2.msra.mxu0 0.0
    %3744 = vmatprep.subr.mxu0 0.0
    %3745 = vmatpush2.msra.mxu0 0.0
    %3746 = vmatprep.subr.mxu0 0.0
    %3747 = vmatpush2.msra.mxu0 0.0
    %3748 = vmatprep.subr.mxu0 0.0
    %3749 = vmatpush2.msra.mxu0 0.0
    %3750 = vmatprep.subr.mxu0 0.0
    %3751 = vmatpush2.msra.mxu0 0.0
    %3752 = vmatprep.subr.mxu0 0.0
    %3753 = vmatpush2.msra.mxu0 0.0
    %3754 = vmatprep.subr.mxu0 0.0
    %3755 = vmatpush2.msra.mxu0 0.0
    %3756 = vmatprep.mubr.f32.mxu0 0.0
    %3757 = vmatmul.mubr.f32.gmra.mxu0 %v3675
    %v3758 = vpop.f32.mrf.mxu0
    %v3759 = vadd.f32 0.0, %v3758
    %v3760 = vpop.f32.mrf.mxu0
    %3761 = vdwg.mxu0
    %3762 = vst.msk [vmem:[#allocation2] sm:$0x1] %vm685, %v3577
    %3763 = vst.msk [vmem:[#allocation2 + $0x1] sm:$0x1] %vm685, %v3759
    %v3764 = vld [vmem:[#allocation2] sm:$0x3]
    %v3765 = vld [vmem:[%s7] sm:$0xff]
    %v3766 = vld [vmem:[%s7 + $0x8] sm:$0xff]
    %v3767 = vld [vmem:[%s7 + $0x10] sm:$0xff]
    %v3768 = vld [vmem:[%s7 + $0x18] sm:$0xff]
    %v3769 = vld [vmem:[%s7 + $0x20] sm:$0xff]
    %v3770 = vld [vmem:[%s7 + $0x28] sm:$0xff]
    %v3771 = vld [vmem:[%s7 + $0x30] sm:$0xff]
    %v3772 = vld [vmem:[%s7 + $0x38] sm:$0xff]
    %v3773 = vld [vmem:[%s7 + $0x40] sm:$0xff]
    %v3774 = vld [vmem:[%s7 + $0x48] sm:$0xff]
    %v3775 = vld [vmem:[%s7 + $0x50] sm:$0xff]
    %v3776 = vld [vmem:[%s7 + $0x58] sm:$0xff]
    %v3777 = vld [vmem:[%s7 + $0x60] sm:$0xff]
    %v3778 = vld [vmem:[%s7 + $0x68] sm:$0xff]
    %v3779 = vld [vmem:[%s7 + $0x70] sm:$0xff]
    %v3780 = vld [vmem:[%s7 + $0x78] sm:$0xff]
    %v3781 = vld [vmem:[%s7 + $0x80] sm:$0xff]
    %v3782 = vld [vmem:[%s7 + $0x88] sm:$0xff]
    %v3783 = vld [vmem:[%s7 + $0x90] sm:$0xff]
    %v3784 = vld [vmem:[%s7 + $0x98] sm:$0xff]
    %v3785 = vld [vmem:[%s7 + $0xa0] sm:$0xff]
    %v3786 = vld [vmem:[%s7 + $0xa8] sm:$0xff]
    %v3787 = vld [vmem:[%s7 + $0xb0] sm:$0xff]
    %v3788 = vld [vmem:[%s7 + $0xb8] sm:$0xff]
    %v3789 = vld [vmem:[%s7 + $0xc0] sm:$0xff]
    %v3790 = vld [vmem:[%s7 + $0xc8] sm:$0xff]
    %v3791 = vld [vmem:[%s7 + $0xd0] sm:$0xff]
    %v3792 = vld [vmem:[%s7 + $0xd8] sm:$0xff]
    %v3793 = vld [vmem:[%s7 + $0xe0] sm:$0xff]
    %v3794 = vld [vmem:[%s7 + $0xe8] sm:$0xff]
    %v3795 = vld [vmem:[%s7 + $0xf0] sm:$0xff]
    %v3796 = vld [vmem:[%s7 + $0xf8] sm:$0xff]
    %v3797 = vld [vmem:[%s8] sm:$0x1]
    %v3799 = vlaneseq
    %v3800 = vshrl.u32 %v3799, 7
    %v3801 = vsub.s32 0, %v3800
    %v3802 = vrot.slane %v3764, %v3801
    %v3803 = vlaneseq
    %v3804 = vshrl.u32 %v3803, 7
    %v3805 = vsub.s32 1, %v3804
    %v3806 = vrot.slane %v3764, %v3805
    %3809 = vmatprep.subr.mxu0 0.0
    %3810 = vmatpush1.msra.mxu0 %v3780
    %3811 = vmatprep.subr.mxu0 0.0
    %3812 = vmatpush1.msra.mxu0 %v3779
    %3813 = vmatprep.subr.mxu0 0.0
    %3814 = vmatpush1.msra.mxu0 %v3778
    %3815 = vmatprep.subr.mxu0 0.0
    %3816 = vmatpush1.msra.mxu0 %v3777
    %3817 = vmatprep.subr.mxu0 0.0
    %3818 = vmatpush1.msra.mxu0 %v3776
    %3819 = vmatprep.subr.mxu0 0.0
    %3820 = vmatpush1.msra.mxu0 %v3775
    %3821 = vmatprep.subr.mxu0 0.0
    %3822 = vmatpush1.msra.mxu0 %v3774
    %3823 = vmatprep.subr.mxu0 0.0
    %3824 = vmatpush1.msra.mxu0 %v3773
    %3825 = vmatprep.subr.mxu0 0.0
    %3826 = vmatpush1.msra.mxu0 %v3772
    %3827 = vmatprep.subr.mxu0 0.0
    %3828 = vmatpush1.msra.mxu0 %v3771
    %3829 = vmatprep.subr.mxu0 0.0
    %3830 = vmatpush1.msra.mxu0 %v3770
    %3831 = vmatprep.subr.mxu0 0.0
    %3832 = vmatpush1.msra.mxu0 %v3769
    %3833 = vmatprep.subr.mxu0 0.0
    %3834 = vmatpush1.msra.mxu0 %v3768
    %3835 = vmatprep.subr.mxu0 0.0
    %3836 = vmatpush1.msra.mxu0 %v3767
    %3837 = vmatprep.subr.mxu0 0.0
    %3838 = vmatpush1.msra.mxu0 %v3766
    %3839 = vmatprep.subr.mxu0 0.0
    %3840 = vmatpush1.msra.mxu0 %v3765
    %3841 = vmatprep.subr.mxu0 0.0
    %3842 = vmatpush2.msra.mxu0 %v3796
    %3843 = vmatprep.subr.mxu0 0.0
    %3844 = vmatpush2.msra.mxu0 %v3795
    %3845 = vmatprep.subr.mxu0 0.0
    %3846 = vmatpush2.msra.mxu0 %v3794
    %3847 = vmatprep.subr.mxu0 0.0
    %3848 = vmatpush2.msra.mxu0 %v3793
    %3849 = vmatprep.subr.mxu0 0.0
    %3850 = vmatpush2.msra.mxu0 %v3792
    %3851 = vmatprep.subr.mxu0 0.0
    %3852 = vmatpush2.msra.mxu0 %v3791
    %3853 = vmatprep.subr.mxu0 0.0
    %3854 = vmatpush2.msra.mxu0 %v3790
    %3855 = vmatprep.subr.mxu0 0.0
    %3856 = vmatpush2.msra.mxu0 %v3789
    %3857 = vmatprep.subr.mxu0 0.0
    %3858 = vmatpush2.msra.mxu0 %v3788
    %3859 = vmatprep.subr.mxu0 0.0
    %3860 = vmatpush2.msra.mxu0 %v3787
    %3861 = vmatprep.subr.mxu0 0.0
    %3862 = vmatpush2.msra.mxu0 %v3786
    %3863 = vmatprep.subr.mxu0 0.0
    %3864 = vmatpush2.msra.mxu0 %v3785
    %3865 = vmatprep.subr.mxu0 0.0
    %3866 = vmatpush2.msra.mxu0 %v3784
    %3867 = vmatprep.subr.mxu0 0.0
    %3868 = vmatpush2.msra.mxu0 %v3783
    %3869 = vmatprep.subr.mxu0 0.0
    %3870 = vmatpush2.msra.mxu0 %v3782
    %3871 = vmatprep.subr.mxu0 0.0
    %3872 = vmatpush2.msra.mxu0 %v3781
    %3873 = vmatprep.mubr.f32.mxu0 %v3806
    %3874 = vmatmul.mubr.f32.gmra.mxu0 %v3802
    %v3875 = vpop.f32.mrf.mxu0
    %v3876 = vadd.f32 %v3797, %v3875
    %v3877 = vpop.f32.mrf.mxu0
    %3878 = vdwg.mxu0
    %v3879 = vsel %vm584, %v3876, -inf
    %3880 = vmax.xlane.f32.xlu0 %v3879
    %v3881 = vpop.xlane.xlu0 %3880
    %v3882 = vsub.f32 %v3876, %v3881
    %v3883 = vmul.f32 %v3882, 1.442695
    %v3884 = vpow.pop %v3883
    %v3885 = vsel %vm584, %v3884, 0.0
    %3886 = vadd.xlane.f32.xlu0 %v3885
    %v3887 = vpop.xlane.xlu0 %3886
    %v3888 = vlog2.pop %v3887
    %v3889 = vmul.f32 %v3888, 0.6931472
    %v3890 = vadd.f32 %v3881, %v3889
    %v3891 = vsub.f32 %v3876, %v3890
    %3892 = vst [vmem:[#allocation3 + $0x4] sm:$0x1] %v3891
    %3893 = vst [vmem:[#allocation5 + $0x4] sm:$0x1] %v3759
    %3894 = vst [vmem:[#allocation7 + $0x4] sm:$0x1] %v3577
    %3895 = vst [vmem:[#allocation8 + $0x4] sm:$0x1] %v3675
    %s3896 = scalar_lea.vmem %s0, 5
    %v3897 = vld [vmem:[%s3896] ss:$8 sm:$0x7]
    %v3898 = vld [vmem:[%s4] sm:$0xff]
    %v3899 = vld [vmem:[%s4 + $0x8] sm:$0xff]
    %v3900 = vld [vmem:[%s4 + $0x10] sm:$0xff]
    %v3901 = vld [vmem:[%s4 + $0x18] sm:$0xff]
    %v3902 = vld [vmem:[%s4 + $0x20] sm:$0xff]
    %v3903 = vld [vmem:[%s4 + $0x28] sm:$0xff]
    %v3904 = vld [vmem:[%s4 + $0x30] sm:$0xff]
    %v3905 = vld [vmem:[%s4 + $0x38] sm:$0xff]
    %v3906 = vld [vmem:[%s4 + $0x40] sm:$0xff]
    %v3907 = vld [vmem:[%s4 + $0x48] sm:$0xff]
    %v3908 = vld [vmem:[%s4 + $0x50] sm:$0xff]
    %v3909 = vld [vmem:[%s4 + $0x58] sm:$0xff]
    %v3910 = vld [vmem:[%s4 + $0x60] sm:$0xff]
    %v3911 = vld [vmem:[%s4 + $0x68] sm:$0xff]
    %v3912 = vld [vmem:[%s4 + $0x70] sm:$0xff]
    %v3913 = vld [vmem:[%s4 + $0x78] sm:$0xff]
    %v3914 = vld [vmem:[%s4 + $0x80] sm:$0xff]
    %v3915 = vld [vmem:[%s4 + $0x88] sm:$0xff]
    %v3916 = vld [vmem:[%s4 + $0x90] sm:$0xff]
    %v3917 = vld [vmem:[%s4 + $0x98] sm:$0xff]
    %v3918 = vld [vmem:[%s4 + $0xa0] sm:$0xff]
    %v3919 = vld [vmem:[%s4 + $0xa8] sm:$0xff]
    %v3920 = vld [vmem:[%s4 + $0xb0] sm:$0xff]
    %v3921 = vld [vmem:[%s4 + $0xb8] sm:$0xff]
    %v3922 = vld [vmem:[%s4 + $0xc0] sm:$0xff]
    %v3923 = vld [vmem:[%s4 + $0xc8] sm:$0xff]
    %v3924 = vld [vmem:[%s4 + $0xd0] sm:$0xff]
    %v3925 = vld [vmem:[%s4 + $0xd8] sm:$0xff]
    %v3926 = vld [vmem:[%s4 + $0xe0] sm:$0xff]
    %v3927 = vld [vmem:[%s4 + $0xe8] sm:$0xff]
    %v3928 = vld [vmem:[%s4 + $0xf0] sm:$0xff]
    %v3929 = vld [vmem:[%s4 + $0xf8] sm:$0xff]
    %v3930 = vld [vmem:[%s4 + $0x100] sm:$0xff]
    %v3931 = vld [vmem:[%s4 + $0x108] sm:$0xff]
    %v3932 = vld [vmem:[%s4 + $0x110] sm:$0xff]
    %v3933 = vld [vmem:[%s4 + $0x118] sm:$0xff]
    %v3934 = vld [vmem:[%s4 + $0x120] sm:$0xff]
    %v3935 = vld [vmem:[%s4 + $0x128] sm:$0xff]
    %v3936 = vld [vmem:[%s4 + $0x130] sm:$0xff]
    %v3937 = vld [vmem:[%s4 + $0x138] sm:$0xff]
    %v3938 = vld [vmem:[%s4 + $0x140] sm:$0xff]
    %v3939 = vld [vmem:[%s4 + $0x148] sm:$0xff]
    %v3940 = vld [vmem:[%s4 + $0x150] sm:$0xff]
    %v3941 = vld [vmem:[%s4 + $0x158] sm:$0xff]
    %v3942 = vld [vmem:[%s4 + $0x160] sm:$0xff]
    %v3943 = vld [vmem:[%s4 + $0x168] sm:$0xff]
    %v3944 = vld [vmem:[%s4 + $0x170] sm:$0xff]
    %v3945 = vld [vmem:[%s4 + $0x178] sm:$0xff]
    %3946 = vmatprep.subr.mxu0 %v3944
    %3947 = vmatpush1.msra.mxu0 %v3943
    %3948 = vmatprep.subr.mxu0 %v3941
    %3949 = vmatpush1.msra.mxu0 %v3940
    %3950 = vmatprep.subr.mxu0 %v3938
    %3951 = vmatpush1.msra.mxu0 %v3937
    %3952 = vmatprep.subr.mxu0 %v3935
    %3953 = vmatpush1.msra.mxu0 %v3934
    %3954 = vmatprep.subr.mxu0 %v3932
    %3955 = vmatpush1.msra.mxu0 %v3931
    %3956 = vmatprep.subr.mxu0 %v3929
    %3957 = vmatpush1.msra.mxu0 %v3928
    %3958 = vmatprep.subr.mxu0 %v3926
    %3959 = vmatpush1.msra.mxu0 %v3925
    %3960 = vmatprep.subr.mxu0 %v3923
    %3961 = vmatpush1.msra.mxu0 %v3922
    %3962 = vmatprep.subr.mxu0 %v3920
    %3963 = vmatpush1.msra.mxu0 %v3919
    %3964 = vmatprep.subr.mxu0 %v3917
    %3965 = vmatpush1.msra.mxu0 %v3916
    %3966 = vmatprep.subr.mxu0 %v3914
    %3967 = vmatpush1.msra.mxu0 %v3913
    %3968 = vmatprep.subr.mxu0 %v3911
    %3969 = vmatpush1.msra.mxu0 %v3910
    %3970 = vmatprep.subr.mxu0 %v3908
    %3971 = vmatpush1.msra.mxu0 %v3907
    %3972 = vmatprep.subr.mxu0 %v3905
    %3973 = vmatpush1.msra.mxu0 %v3904
    %3974 = vmatprep.subr.mxu0 %v3902
    %3975 = vmatpush1.msra.mxu0 %v3901
    %3976 = vmatprep.subr.mxu0 %v3899
    %3977 = vmatpush1.msra.mxu0 %v3898
    %3978 = vmatprep.subr.mxu0 0.0
    %3979 = vmatpush2.msra.mxu0 0.0
    %3980 = vmatprep.subr.mxu0 0.0
    %3981 = vmatpush2.msra.mxu0 0.0
    %3982 = vmatprep.subr.mxu0 0.0
    %3983 = vmatpush2.msra.mxu0 0.0
    %3984 = vmatprep.subr.mxu0 0.0
    %3985 = vmatpush2.msra.mxu0 0.0
    %3986 = vmatprep.subr.mxu0 0.0
    %3987 = vmatpush2.msra.mxu0 0.0
    %3988 = vmatprep.subr.mxu0 0.0
    %3989 = vmatpush2.msra.mxu0 0.0
    %3990 = vmatprep.subr.mxu0 0.0
    %3991 = vmatpush2.msra.mxu0 0.0
    %3992 = vmatprep.subr.mxu0 0.0
    %3993 = vmatpush2.msra.mxu0 0.0
    %3994 = vmatprep.subr.mxu0 0.0
    %3995 = vmatpush2.msra.mxu0 0.0
    %3996 = vmatprep.subr.mxu0 0.0
    %3997 = vmatpush2.msra.mxu0 0.0
    %3998 = vmatprep.subr.mxu0 0.0
    %3999 = vmatpush2.msra.mxu0 0.0
    %4000 = vmatprep.subr.mxu0 0.0
    %4001 = vmatpush2.msra.mxu0 0.0
    %4002 = vmatprep.subr.mxu0 0.0
    %4003 = vmatpush2.msra.mxu0 0.0
    %4004 = vmatprep.subr.mxu0 0.0
    %4005 = vmatpush2.msra.mxu0 0.0
    %4006 = vmatprep.subr.mxu0 0.0
    %4007 = vmatpush2.msra.mxu0 0.0
    %4008 = vmatprep.subr.mxu0 0.0
    %4009 = vmatpush2.msra.mxu0 0.0
    %4010 = vmatprep.mubr.f32.mxu0 0.0
    %4011 = vmatmul.mubr.f32.gmra.mxu0 %v3759
    %v4012 = vpop.f32.mrf.mxu0
    %v4013 = vadd.f32 0.0, %v4012
    %v4014 = vpop.f32.mrf.mxu0
    %v4015 = vadd.f32 0.0, %v4014
    %4016 = vdwg.mxu0
    %4017 = vmatprep.subr.mxu0 0.0
    %4018 = vmatpush1.msra.mxu0 %v3945
    %4019 = vmatprep.subr.mxu0 0.0
    %4020 = vmatpush1.msra.mxu0 %v3942
    %4021 = vmatprep.subr.mxu0 0.0
    %4022 = vmatpush1.msra.mxu0 %v3939
    %4023 = vmatprep.subr.mxu0 0.0
    %4024 = vmatpush1.msra.mxu0 %v3936
    %4025 = vmatprep.subr.mxu0 0.0
    %4026 = vmatpush1.msra.mxu0 %v3933
    %4027 = vmatprep.subr.mxu0 0.0
    %4028 = vmatpush1.msra.mxu0 %v3930
    %4029 = vmatprep.subr.mxu0 0.0
    %4030 = vmatpush1.msra.mxu0 %v3927
    %4031 = vmatprep.subr.mxu0 0.0
    %4032 = vmatpush1.msra.mxu0 %v3924
    %4033 = vmatprep.subr.mxu0 0.0
    %4034 = vmatpush1.msra.mxu0 %v3921
    %4035 = vmatprep.subr.mxu0 0.0
    %4036 = vmatpush1.msra.mxu0 %v3918
    %4037 = vmatprep.subr.mxu0 0.0
    %4038 = vmatpush1.msra.mxu0 %v3915
    %4039 = vmatprep.subr.mxu0 0.0
    %4040 = vmatpush1.msra.mxu0 %v3912
    %4041 = vmatprep.subr.mxu0 0.0
    %4042 = vmatpush1.msra.mxu0 %v3909
    %4043 = vmatprep.subr.mxu0 0.0
    %4044 = vmatpush1.msra.mxu0 %v3906
    %4045 = vmatprep.subr.mxu0 0.0
    %4046 = vmatpush1.msra.mxu0 %v3903
    %4047 = vmatprep.subr.mxu0 0.0
    %4048 = vmatpush1.msra.mxu0 %v3900
    %4049 = vmatprep.subr.mxu0 0.0
    %4050 = vmatpush2.msra.mxu0 0.0
    %4051 = vmatprep.subr.mxu0 0.0
    %4052 = vmatpush2.msra.mxu0 0.0
    %4053 = vmatprep.subr.mxu0 0.0
    %4054 = vmatpush2.msra.mxu0 0.0
    %4055 = vmatprep.subr.mxu0 0.0
    %4056 = vmatpush2.msra.mxu0 0.0
    %4057 = vmatprep.subr.mxu0 0.0
    %4058 = vmatpush2.msra.mxu0 0.0
    %4059 = vmatprep.subr.mxu0 0.0
    %4060 = vmatpush2.msra.mxu0 0.0
    %4061 = vmatprep.subr.mxu0 0.0
    %4062 = vmatpush2.msra.mxu0 0.0
    %4063 = vmatprep.subr.mxu0 0.0
    %4064 = vmatpush2.msra.mxu0 0.0
    %4065 = vmatprep.subr.mxu0 0.0
    %4066 = vmatpush2.msra.mxu0 0.0
    %4067 = vmatprep.subr.mxu0 0.0
    %4068 = vmatpush2.msra.mxu0 0.0
    %4069 = vmatprep.subr.mxu0 0.0
    %4070 = vmatpush2.msra.mxu0 0.0
    %4071 = vmatprep.subr.mxu0 0.0
    %4072 = vmatpush2.msra.mxu0 0.0
    %4073 = vmatprep.subr.mxu0 0.0
    %4074 = vmatpush2.msra.mxu0 0.0
    %4075 = vmatprep.subr.mxu0 0.0
    %4076 = vmatpush2.msra.mxu0 0.0
    %4077 = vmatprep.subr.mxu0 0.0
    %4078 = vmatpush2.msra.mxu0 0.0
    %4079 = vmatprep.subr.mxu0 0.0
    %4080 = vmatpush2.msra.mxu0 0.0
    %4081 = vmatprep.mubr.f32.mxu0 0.0
    %4082 = vmatmul.mubr.f32.gmra.mxu0 %v3759
    %v4083 = vpop.f32.mrf.mxu0
    %v4084 = vadd.f32 0.0, %v4083
    %v4085 = vpop.f32.mrf.mxu0
    %4086 = vdwg.mxu0
    %v4090 = vcombine.low %v4013, %v4015
    %v4092 = vunpack.c.l.s4 1966171168
    %v4093 = vunpack.c.0.s8 %v4092
    %v4094 = vlaneseq
    %v4095 = vshrl.u32 %v4094, 7
    %v4096 = vsub.s32 %v4093, %v4095
    %v4097 = vrot.slane %v4090, %v4096
    %v4099 = vunpack.c.l.s4 1966171168
    %v4100 = vunpack.c.0.s8 %v4099
    %v4101 = vlaneseq
    %v4102 = vshrl.u32 %v4101, 7
    %v4103 = vsub.s32 %v4100, %v4102
    %v4104 = vrot.slane %v4084, %v4103
    %v4105 = vcombine.low %v4097, %v4104
    %v4107 = vunpack.c.l.s4 1966171168
    %v4108 = vunpack.c.0.s8 %v4107
    %v4109 = vlaneseq
    %v4110 = vshrl.u32 %v4109, 7
    %v4111 = vsub.s32 %v4108, %v4110
    %v4112 = vrot.slane %v4105, %v4111
    %v4114 = vadd.f32 %v3897, %v4112
    %v4115 = vld [vmem:[%s5] sm:$0xff]
    %v4116 = vld [vmem:[%s5 + $0x8] sm:$0xff]
    %v4117 = vld [vmem:[%s5 + $0x10] sm:$0xff]
    %v4118 = vld [vmem:[%s5 + $0x18] sm:$0xff]
    %v4119 = vld [vmem:[%s5 + $0x20] sm:$0xff]
    %v4120 = vld [vmem:[%s5 + $0x28] sm:$0xff]
    %v4121 = vld [vmem:[%s5 + $0x30] sm:$0xff]
    %v4122 = vld [vmem:[%s5 + $0x38] sm:$0xff]
    %v4123 = vld [vmem:[%s5 + $0x40] sm:$0xff]
    %v4124 = vld [vmem:[%s5 + $0x48] sm:$0xff]
    %v4125 = vld [vmem:[%s5 + $0x50] sm:$0xff]
    %v4126 = vld [vmem:[%s5 + $0x58] sm:$0xff]
    %v4127 = vld [vmem:[%s5 + $0x60] sm:$0xff]
    %v4128 = vld [vmem:[%s5 + $0x68] sm:$0xff]
    %v4129 = vld [vmem:[%s5 + $0x70] sm:$0xff]
    %v4130 = vld [vmem:[%s5 + $0x78] sm:$0xff]
    %v4131 = vld [vmem:[%s5 + $0x80] sm:$0xff]
    %v4132 = vld [vmem:[%s5 + $0x88] sm:$0xff]
    %v4133 = vld [vmem:[%s5 + $0x90] sm:$0xff]
    %v4134 = vld [vmem:[%s5 + $0x98] sm:$0xff]
    %v4135 = vld [vmem:[%s5 + $0xa0] sm:$0xff]
    %v4136 = vld [vmem:[%s5 + $0xa8] sm:$0xff]
    %v4137 = vld [vmem:[%s5 + $0xb0] sm:$0xff]
    %v4138 = vld [vmem:[%s5 + $0xb8] sm:$0xff]
    %v4139 = vld [vmem:[%s5 + $0xc0] sm:$0xff]
    %v4140 = vld [vmem:[%s5 + $0xc8] sm:$0xff]
    %v4141 = vld [vmem:[%s5 + $0xd0] sm:$0xff]
    %v4142 = vld [vmem:[%s5 + $0xd8] sm:$0xff]
    %v4143 = vld [vmem:[%s5 + $0xe0] sm:$0xff]
    %v4144 = vld [vmem:[%s5 + $0xe8] sm:$0xff]
    %v4145 = vld [vmem:[%s5 + $0xf0] sm:$0xff]
    %v4146 = vld [vmem:[%s5 + $0xf8] sm:$0xff]
    %v4147 = vld [vmem:[%s5 + $0x100] sm:$0xff]
    %v4148 = vld [vmem:[%s5 + $0x108] sm:$0xff]
    %v4149 = vld [vmem:[%s5 + $0x110] sm:$0xff]
    %v4150 = vld [vmem:[%s5 + $0x118] sm:$0xff]
    %v4151 = vld [vmem:[%s5 + $0x120] sm:$0xff]
    %v4152 = vld [vmem:[%s5 + $0x128] sm:$0xff]
    %v4153 = vld [vmem:[%s5 + $0x130] sm:$0xff]
    %v4154 = vld [vmem:[%s5 + $0x138] sm:$0xff]
    %v4155 = vld [vmem:[%s5 + $0x140] sm:$0xff]
    %v4156 = vld [vmem:[%s5 + $0x148] sm:$0xff]
    %v4157 = vld [vmem:[%s5 + $0x150] sm:$0xff]
    %v4158 = vld [vmem:[%s5 + $0x158] sm:$0xff]
    %v4159 = vld [vmem:[%s5 + $0x160] sm:$0xff]
    %v4160 = vld [vmem:[%s5 + $0x168] sm:$0xff]
    %v4161 = vld [vmem:[%s5 + $0x170] sm:$0xff]
    %v4162 = vld [vmem:[%s5 + $0x178] sm:$0xff]
    %v4163 = vld [vmem:[%s6] sm:$0x7]
    %v4165 = vlaneseq
    %v4166 = vshrl.u32 %v4165, 7
    %v4167 = vsub.s32 0, %v4166
    %v4168 = vrot.slane %v4163, %v4167
    %v4169 = vlaneseq
    %v4170 = vshrl.u32 %v4169, 7
    %v4171 = vsub.s32 1, %v4170
    %v4172 = vrot.slane %v4163, %v4171
    %v4173 = vlaneseq
    %v4174 = vshrl.u32 %v4173, 7
    %v4175 = vsub.s32 2, %v4174
    %v4176 = vrot.slane %v4163, %v4175
    %4180 = vmatprep.subr.mxu0 %v4161
    %4181 = vmatpush1.msra.mxu0 %v4160
    %4182 = vmatprep.subr.mxu0 %v4158
    %4183 = vmatpush1.msra.mxu0 %v4157
    %4184 = vmatprep.subr.mxu0 %v4155
    %4185 = vmatpush1.msra.mxu0 %v4154
    %4186 = vmatprep.subr.mxu0 %v4152
    %4187 = vmatpush1.msra.mxu0 %v4151
    %4188 = vmatprep.subr.mxu0 %v4149
    %4189 = vmatpush1.msra.mxu0 %v4148
    %4190 = vmatprep.subr.mxu0 %v4146
    %4191 = vmatpush1.msra.mxu0 %v4145
    %4192 = vmatprep.subr.mxu0 %v4143
    %4193 = vmatpush1.msra.mxu0 %v4142
    %4194 = vmatprep.subr.mxu0 %v4140
    %4195 = vmatpush1.msra.mxu0 %v4139
    %4196 = vmatprep.subr.mxu0 %v4137
    %4197 = vmatpush1.msra.mxu0 %v4136
    %4198 = vmatprep.subr.mxu0 %v4134
    %4199 = vmatpush1.msra.mxu0 %v4133
    %4200 = vmatprep.subr.mxu0 %v4131
    %4201 = vmatpush1.msra.mxu0 %v4130
    %4202 = vmatprep.subr.mxu0 %v4128
    %4203 = vmatpush1.msra.mxu0 %v4127
    %4204 = vmatprep.subr.mxu0 %v4125
    %4205 = vmatpush1.msra.mxu0 %v4124
    %4206 = vmatprep.subr.mxu0 %v4122
    %4207 = vmatpush1.msra.mxu0 %v4121
    %4208 = vmatprep.subr.mxu0 %v4119
    %4209 = vmatpush1.msra.mxu0 %v4118
    %4210 = vmatprep.subr.mxu0 %v4116
    %4211 = vmatpush1.msra.mxu0 %v4115
    %4212 = vmatprep.subr.mxu0 0.0
    %4213 = vmatpush2.msra.mxu0 0.0
    %4214 = vmatprep.subr.mxu0 0.0
    %4215 = vmatpush2.msra.mxu0 0.0
    %4216 = vmatprep.subr.mxu0 0.0
    %4217 = vmatpush2.msra.mxu0 0.0
    %4218 = vmatprep.subr.mxu0 0.0
    %4219 = vmatpush2.msra.mxu0 0.0
    %4220 = vmatprep.subr.mxu0 0.0
    %4221 = vmatpush2.msra.mxu0 0.0
    %4222 = vmatprep.subr.mxu0 0.0
    %4223 = vmatpush2.msra.mxu0 0.0
    %4224 = vmatprep.subr.mxu0 0.0
    %4225 = vmatpush2.msra.mxu0 0.0
    %4226 = vmatprep.subr.mxu0 0.0
    %4227 = vmatpush2.msra.mxu0 0.0
    %4228 = vmatprep.subr.mxu0 0.0
    %4229 = vmatpush2.msra.mxu0 0.0
    %4230 = vmatprep.subr.mxu0 0.0
    %4231 = vmatpush2.msra.mxu0 0.0
    %4232 = vmatprep.subr.mxu0 0.0
    %4233 = vmatpush2.msra.mxu0 0.0
    %4234 = vmatprep.subr.mxu0 0.0
    %4235 = vmatpush2.msra.mxu0 0.0
    %4236 = vmatprep.subr.mxu0 0.0
    %4237 = vmatpush2.msra.mxu0 0.0
    %4238 = vmatprep.subr.mxu0 0.0
    %4239 = vmatpush2.msra.mxu0 0.0
    %4240 = vmatprep.subr.mxu0 0.0
    %4241 = vmatpush2.msra.mxu0 0.0
    %4242 = vmatprep.subr.mxu0 0.0
    %4243 = vmatpush2.msra.mxu0 0.0
    %4244 = vmatprep.mubr.f32.mxu0 0.0
    %4245 = vmatmul.mubr.f32.gmra.mxu0 %v3577
    %v4246 = vpop.f32.mrf.mxu0
    %v4247 = vadd.f32 %v4168, %v4246
    %v4248 = vpop.f32.mrf.mxu0
    %v4249 = vadd.f32 %v4172, %v4248
    %4250 = vdwg.mxu0
    %4251 = vmatprep.subr.mxu0 0.0
    %4252 = vmatpush1.msra.mxu0 %v4162
    %4253 = vmatprep.subr.mxu0 0.0
    %4254 = vmatpush1.msra.mxu0 %v4159
    %4255 = vmatprep.subr.mxu0 0.0
    %4256 = vmatpush1.msra.mxu0 %v4156
    %4257 = vmatprep.subr.mxu0 0.0
    %4258 = vmatpush1.msra.mxu0 %v4153
    %4259 = vmatprep.subr.mxu0 0.0
    %4260 = vmatpush1.msra.mxu0 %v4150
    %4261 = vmatprep.subr.mxu0 0.0
    %4262 = vmatpush1.msra.mxu0 %v4147
    %4263 = vmatprep.subr.mxu0 0.0
    %4264 = vmatpush1.msra.mxu0 %v4144
    %4265 = vmatprep.subr.mxu0 0.0
    %4266 = vmatpush1.msra.mxu0 %v4141
    %4267 = vmatprep.subr.mxu0 0.0
    %4268 = vmatpush1.msra.mxu0 %v4138
    %4269 = vmatprep.subr.mxu0 0.0
    %4270 = vmatpush1.msra.mxu0 %v4135
    %4271 = vmatprep.subr.mxu0 0.0
    %4272 = vmatpush1.msra.mxu0 %v4132
    %4273 = vmatprep.subr.mxu0 0.0
    %4274 = vmatpush1.msra.mxu0 %v4129
    %4275 = vmatprep.subr.mxu0 0.0
    %4276 = vmatpush1.msra.mxu0 %v4126
    %4277 = vmatprep.subr.mxu0 0.0
    %4278 = vmatpush1.msra.mxu0 %v4123
    %4279 = vmatprep.subr.mxu0 0.0
    %4280 = vmatpush1.msra.mxu0 %v4120
    %4281 = vmatprep.subr.mxu0 0.0
    %4282 = vmatpush1.msra.mxu0 %v4117
    %4283 = vmatprep.subr.mxu0 0.0
    %4284 = vmatpush2.msra.mxu0 0.0
    %4285 = vmatprep.subr.mxu0 0.0
    %4286 = vmatpush2.msra.mxu0 0.0
    %4287 = vmatprep.subr.mxu0 0.0
    %4288 = vmatpush2.msra.mxu0 0.0
    %4289 = vmatprep.subr.mxu0 0.0
    %4290 = vmatpush2.msra.mxu0 0.0
    %4291 = vmatprep.subr.mxu0 0.0
    %4292 = vmatpush2.msra.mxu0 0.0
    %4293 = vmatprep.subr.mxu0 0.0
    %4294 = vmatpush2.msra.mxu0 0.0
    %4295 = vmatprep.subr.mxu0 0.0
    %4296 = vmatpush2.msra.mxu0 0.0
    %4297 = vmatprep.subr.mxu0 0.0
    %4298 = vmatpush2.msra.mxu0 0.0
    %4299 = vmatprep.subr.mxu0 0.0
    %4300 = vmatpush2.msra.mxu0 0.0
    %4301 = vmatprep.subr.mxu0 0.0
    %4302 = vmatpush2.msra.mxu0 0.0
    %4303 = vmatprep.subr.mxu0 0.0
    %4304 = vmatpush2.msra.mxu0 0.0
    %4305 = vmatprep.subr.mxu0 0.0
    %4306 = vmatpush2.msra.mxu0 0.0
    %4307 = vmatprep.subr.mxu0 0.0
    %4308 = vmatpush2.msra.mxu0 0.0
    %4309 = vmatprep.subr.mxu0 0.0
    %4310 = vmatpush2.msra.mxu0 0.0
    %4311 = vmatprep.subr.mxu0 0.0
    %4312 = vmatpush2.msra.mxu0 0.0
    %4313 = vmatprep.subr.mxu0 0.0
    %4314 = vmatpush2.msra.mxu0 0.0
    %4315 = vmatprep.mubr.f32.mxu0 0.0
    %4316 = vmatmul.mubr.f32.gmra.mxu0 %v3577
    %v4317 = vpop.f32.mrf.mxu0
    %v4318 = vadd.f32 %v4176, %v4317
    %v4319 = vpop.f32.mrf.mxu0
    %4320 = vdwg.mxu0
    %v4321 = vadd.f32 %v4114, %v4247
    %v4322 = vxor.u32 %v4321, 2147483648
    %v4323 = vmul.f32 %v4322, 1.442695
    %v4324 = vpow.pop %v4323
    %v4325 = vadd.f32 %v4324, 1.0
    %v4326 = vrcp.pop %v4325
    %v4327 = vmul.f32 1.0, %v4326
    %v4329 = vrot.slane %v4114, 1
    %v4331 = vadd.f32 %v4329, %v4249
    %v4332 = vxor.u32 %v4331, 2147483648
    %v4333 = vmul.f32 %v4332, 1.442695
    %v4334 = vpow.pop %v4333
    %v4335 = vadd.f32 %v4334, 1.0
    %v4336 = vrcp.pop %v4335
    %v4337 = vmul.f32 1.0, %v4336
    %v4338 = vmul.f32 %v4327, %v4318
    %v4339 = vrot.slane %v4114, 2
    %v4341 = vadd.f32 %v4339, %v4338
    %v4342 = vtanh.pop %v4341
    %v4343 = vsub.f32 1.0, %v4337
    %v4344 = vmul.f32 %v4343, %v4342
    %v4345 = vmul.f32 %v4337, %v3577
    %v4346 = vadd.f32 %v4344, %v4345
    %v4347 = vld [vmem:[%s2] sm:$0xff]
    %v4348 = vld [vmem:[%s2 + $0x8] sm:$0xff]
    %v4349 = vld [vmem:[%s2 + $0x10] sm:$0xff]
    %v4350 = vld [vmem:[%s2 + $0x18] sm:$0xff]
    %v4351 = vld [vmem:[%s2 + $0x20] sm:$0xff]
    %v4352 = vld [vmem:[%s2 + $0x28] sm:$0xff]
    %v4353 = vld [vmem:[%s2 + $0x30] sm:$0xff]
    %v4354 = vld [vmem:[%s2 + $0x38] sm:$0xff]
    %v4355 = vld [vmem:[%s2 + $0x40] sm:$0xff]
    %v4356 = vld [vmem:[%s2 + $0x48] sm:$0xff]
    %v4357 = vld [vmem:[%s2 + $0x50] sm:$0xff]
    %v4358 = vld [vmem:[%s2 + $0x58] sm:$0xff]
    %v4359 = vld [vmem:[%s2 + $0x60] sm:$0xff]
    %v4360 = vld [vmem:[%s2 + $0x68] sm:$0xff]
    %v4361 = vld [vmem:[%s2 + $0x70] sm:$0xff]
    %v4362 = vld [vmem:[%s2 + $0x78] sm:$0xff]
    %v4363 = vld [vmem:[%s3] sm:$0x1]
    %4364 = vmatprep.subr.mxu0 0.0
    %4365 = vmatpush1.msra.mxu0 %v4362
    %4366 = vmatprep.subr.mxu0 0.0
    %4367 = vmatpush1.msra.mxu0 %v4361
    %4368 = vmatprep.subr.mxu0 0.0
    %4369 = vmatpush1.msra.mxu0 %v4360
    %4370 = vmatprep.subr.mxu0 0.0
    %4371 = vmatpush1.msra.mxu0 %v4359
    %4372 = vmatprep.subr.mxu0 0.0
    %4373 = vmatpush1.msra.mxu0 %v4358
    %4374 = vmatprep.subr.mxu0 0.0
    %4375 = vmatpush1.msra.mxu0 %v4357
    %4376 = vmatprep.subr.mxu0 0.0
    %4377 = vmatpush1.msra.mxu0 %v4356
    %4378 = vmatprep.subr.mxu0 0.0
    %4379 = vmatpush1.msra.mxu0 %v4355
    %4380 = vmatprep.subr.mxu0 0.0
    %4381 = vmatpush1.msra.mxu0 %v4354
    %4382 = vmatprep.subr.mxu0 0.0
    %4383 = vmatpush1.msra.mxu0 %v4353
    %4384 = vmatprep.subr.mxu0 0.0
    %4385 = vmatpush1.msra.mxu0 %v4352
    %4386 = vmatprep.subr.mxu0 0.0
    %4387 = vmatpush1.msra.mxu0 %v4351
    %4388 = vmatprep.subr.mxu0 0.0
    %4389 = vmatpush1.msra.mxu0 %v4350
    %4390 = vmatprep.subr.mxu0 0.0
    %4391 = vmatpush1.msra.mxu0 %v4349
    %4392 = vmatprep.subr.mxu0 0.0
    %4393 = vmatpush1.msra.mxu0 %v4348
    %4394 = vmatprep.subr.mxu0 0.0
    %4395 = vmatpush1.msra.mxu0 %v4347
    %4396 = vmatprep.subr.mxu0 0.0
    %4397 = vmatpush2.msra.mxu0 0.0
    %4398 = vmatprep.subr.mxu0 0.0
    %4399 = vmatpush2.msra.mxu0 0.0
    %4400 = vmatprep.subr.mxu0 0.0
    %4401 = vmatpush2.msra.mxu0 0.0
    %4402 = vmatprep.subr.mxu0 0.0
    %4403 = vmatpush2.msra.mxu0 0.0
    %4404 = vmatprep.subr.mxu0 0.0
    %4405 = vmatpush2.msra.mxu0 0.0
    %4406 = vmatprep.subr.mxu0 0.0
    %4407 = vmatpush2.msra.mxu0 0.0
    %4408 = vmatprep.subr.mxu0 0.0
    %4409 = vmatpush2.msra.mxu0 0.0
    %4410 = vmatprep.subr.mxu0 0.0
    %4411 = vmatpush2.msra.mxu0 0.0
    %4412 = vmatprep.subr.mxu0 0.0
    %4413 = vmatpush2.msra.mxu0 0.0
    %4414 = vmatprep.subr.mxu0 0.0
    %4415 = vmatpush2.msra.mxu0 0.0
    %4416 = vmatprep.subr.mxu0 0.0
    %4417 = vmatpush2.msra.mxu0 0.0
    %4418 = vmatprep.subr.mxu0 0.0
    %4419 = vmatpush2.msra.mxu0 0.0
    %4420 = vmatprep.subr.mxu0 0.0
    %4421 = vmatpush2.msra.mxu0 0.0
    %4422 = vmatprep.subr.mxu0 0.0
    %4423 = vmatpush2.msra.mxu0 0.0
    %4424 = vmatprep.subr.mxu0 0.0
    %4425 = vmatpush2.msra.mxu0 0.0
    %4426 = vmatprep.subr.mxu0 0.0
    %4427 = vmatpush2.msra.mxu0 0.0
    %4428 = vmatprep.mubr.f32.mxu0 0.0
    %4429 = vmatmul.mubr.f32.gmra.mxu0 %v4346
    %v4430 = vpop.f32.mrf.mxu0
    %v4431 = vadd.f32 %v4363, %v4430
    %v4432 = vpop.f32.mrf.mxu0
    %4433 = vdwg.mxu0
    %v4434 = vsel %vm584, %v4431, -inf
    %4435 = vmax.xlane.f32.xlu0 %v4434
    %v4436 = vpop.xlane.xlu0 %4435
    %v4437 = vsub.f32 %v4431, %v4436
    %v4438 = vmul.f32 %v4437, 1.442695
    %v4439 = vpow.pop %v4438
    %v4440 = vsel %vm584, %v4439, 0.0
    %4441 = vadd.xlane.f32.xlu0 %v4440
    %v4442 = vpop.xlane.xlu0 %4441
    %v4443 = vrcp.pop %v4442
    %v4444 = vmul.f32 %v4439, %v4443
    %v4445 = vld [vmem:[%s1] sm:$0xff]
    %v4446 = vld [vmem:[%s1 + $0x8] sm:$0xff]
    %v4447 = vld [vmem:[%s1 + $0x10] sm:$0xff]
    %v4448 = vld [vmem:[%s1 + $0x18] sm:$0xff]
    %v4449 = vld [vmem:[%s1 + $0x20] sm:$0xff]
    %v4450 = vld [vmem:[%s1 + $0x28] sm:$0xff]
    %v4451 = vld [vmem:[%s1 + $0x30] sm:$0xff]
    %v4452 = vld [vmem:[%s1 + $0x38] sm:$0xff]
    %v4453 = vld [vmem:[%s1 + $0x40] sm:$0xff]
    %v4454 = vld [vmem:[%s1 + $0x48] sm:$0xff]
    %v4455 = vld [vmem:[%s1 + $0x50] sm:$0xff]
    %v4456 = vld [vmem:[%s1 + $0x58] sm:$0xff]
    %v4457 = vld [vmem:[%s1 + $0x60] sm:$0xff]
    %v4458 = vld [vmem:[%s1 + $0x68] sm:$0xff]
    %v4459 = vld [vmem:[%s1 + $0x70] sm:$0xff]
    %v4460 = vld [vmem:[%s1 + $0x78] sm:$0xff]
    %4461 = vmatprep.subr.mxu0 0.0
    %4462 = vmatpush1.msra.mxu0 %v4460
    %4463 = vmatprep.subr.mxu0 0.0
    %4464 = vmatpush1.msra.mxu0 %v4459
    %4465 = vmatprep.subr.mxu0 0.0
    %4466 = vmatpush1.msra.mxu0 %v4458
    %4467 = vmatprep.subr.mxu0 0.0
    %4468 = vmatpush1.msra.mxu0 %v4457
    %4469 = vmatprep.subr.mxu0 0.0
    %4470 = vmatpush1.msra.mxu0 %v4456
    %4471 = vmatprep.subr.mxu0 0.0
    %4472 = vmatpush1.msra.mxu0 %v4455
    %4473 = vmatprep.subr.mxu0 0.0
    %4474 = vmatpush1.msra.mxu0 %v4454
    %4475 = vmatprep.subr.mxu0 0.0
    %4476 = vmatpush1.msra.mxu0 %v4453
    %4477 = vmatprep.subr.mxu0 0.0
    %4478 = vmatpush1.msra.mxu0 %v4452
    %4479 = vmatprep.subr.mxu0 0.0
    %4480 = vmatpush1.msra.mxu0 %v4451
    %4481 = vmatprep.subr.mxu0 0.0
    %4482 = vmatpush1.msra.mxu0 %v4450
    %4483 = vmatprep.subr.mxu0 0.0
    %4484 = vmatpush1.msra.mxu0 %v4449
    %4485 = vmatprep.subr.mxu0 0.0
    %4486 = vmatpush1.msra.mxu0 %v4448
    %4487 = vmatprep.subr.mxu0 0.0
    %4488 = vmatpush1.msra.mxu0 %v4447
    %4489 = vmatprep.subr.mxu0 0.0
    %4490 = vmatpush1.msra.mxu0 %v4446
    %4491 = vmatprep.subr.mxu0 0.0
    %4492 = vmatpush1.msra.mxu0 %v4445
    %4493 = vmatprep.subr.mxu0 0.0
    %4494 = vmatpush2.msra.mxu0 0.0
    %4495 = vmatprep.subr.mxu0 0.0
    %4496 = vmatpush2.msra.mxu0 0.0
    %4497 = vmatprep.subr.mxu0 0.0
    %4498 = vmatpush2.msra.mxu0 0.0
    %4499 = vmatprep.subr.mxu0 0.0
    %4500 = vmatpush2.msra.mxu0 0.0
    %4501 = vmatprep.subr.mxu0 0.0
    %4502 = vmatpush2.msra.mxu0 0.0
    %4503 = vmatprep.subr.mxu0 0.0
    %4504 = vmatpush2.msra.mxu0 0.0
    %4505 = vmatprep.subr.mxu0 0.0
    %4506 = vmatpush2.msra.mxu0 0.0
    %4507 = vmatprep.subr.mxu0 0.0
    %4508 = vmatpush2.msra.mxu0 0.0
    %4509 = vmatprep.subr.mxu0 0.0
    %4510 = vmatpush2.msra.mxu0 0.0
    %4511 = vmatprep.subr.mxu0 0.0
    %4512 = vmatpush2.msra.mxu0 0.0
    %4513 = vmatprep.subr.mxu0 0.0
    %4514 = vmatpush2.msra.mxu0 0.0
    %4515 = vmatprep.subr.mxu0 0.0
    %4516 = vmatpush2.msra.mxu0 0.0
    %4517 = vmatprep.subr.mxu0 0.0
    %4518 = vmatpush2.msra.mxu0 0.0
    %4519 = vmatprep.subr.mxu0 0.0
    %4520 = vmatpush2.msra.mxu0 0.0
    %4521 = vmatprep.subr.mxu0 0.0
    %4522 = vmatpush2.msra.mxu0 0.0
    %4523 = vmatprep.subr.mxu0 0.0
    %4524 = vmatpush2.msra.mxu0 0.0
    %4525 = vmatprep.mubr.f32.mxu0 0.0
    %4526 = vmatmul.mubr.f32.gmra.mxu0 %v4444
    %v4527 = vpop.f32.mrf.mxu0
    %v4528 = vadd.f32 0.0, %v4527
    %v4529 = vpop.f32.mrf.mxu0
    %4530 = vdwg.mxu0
    %4531 = vst.msk [vmem:[#allocation2] sm:$0x1] %vm685, %v4346
    %4532 = vst.msk [vmem:[#allocation2 + $0x1] sm:$0x1] %vm685, %v4528
    %v4533 = vld [vmem:[#allocation2] sm:$0x3]
    %v4534 = vld [vmem:[%s7] sm:$0xff]
    %v4535 = vld [vmem:[%s7 + $0x8] sm:$0xff]
    %v4536 = vld [vmem:[%s7 + $0x10] sm:$0xff]
    %v4537 = vld [vmem:[%s7 + $0x18] sm:$0xff]
    %v4538 = vld [vmem:[%s7 + $0x20] sm:$0xff]
    %v4539 = vld [vmem:[%s7 + $0x28] sm:$0xff]
    %v4540 = vld [vmem:[%s7 + $0x30] sm:$0xff]
    %v4541 = vld [vmem:[%s7 + $0x38] sm:$0xff]
    %v4542 = vld [vmem:[%s7 + $0x40] sm:$0xff]
    %v4543 = vld [vmem:[%s7 + $0x48] sm:$0xff]
    %v4544 = vld [vmem:[%s7 + $0x50] sm:$0xff]
    %v4545 = vld [vmem:[%s7 + $0x58] sm:$0xff]
    %v4546 = vld [vmem:[%s7 + $0x60] sm:$0xff]
    %v4547 = vld [vmem:[%s7 + $0x68] sm:$0xff]
    %v4548 = vld [vmem:[%s7 + $0x70] sm:$0xff]
    %v4549 = vld [vmem:[%s7 + $0x78] sm:$0xff]
    %v4550 = vld [vmem:[%s7 + $0x80] sm:$0xff]
    %v4551 = vld [vmem:[%s7 + $0x88] sm:$0xff]
    %v4552 = vld [vmem:[%s7 + $0x90] sm:$0xff]
    %v4553 = vld [vmem:[%s7 + $0x98] sm:$0xff]
    %v4554 = vld [vmem:[%s7 + $0xa0] sm:$0xff]
    %v4555 = vld [vmem:[%s7 + $0xa8] sm:$0xff]
    %v4556 = vld [vmem:[%s7 + $0xb0] sm:$0xff]
    %v4557 = vld [vmem:[%s7 + $0xb8] sm:$0xff]
    %v4558 = vld [vmem:[%s7 + $0xc0] sm:$0xff]
    %v4559 = vld [vmem:[%s7 + $0xc8] sm:$0xff]
    %v4560 = vld [vmem:[%s7 + $0xd0] sm:$0xff]
    %v4561 = vld [vmem:[%s7 + $0xd8] sm:$0xff]
    %v4562 = vld [vmem:[%s7 + $0xe0] sm:$0xff]
    %v4563 = vld [vmem:[%s7 + $0xe8] sm:$0xff]
    %v4564 = vld [vmem:[%s7 + $0xf0] sm:$0xff]
    %v4565 = vld [vmem:[%s7 + $0xf8] sm:$0xff]
    %v4566 = vld [vmem:[%s8] sm:$0x1]
    %v4568 = vlaneseq
    %v4569 = vshrl.u32 %v4568, 7
    %v4570 = vsub.s32 0, %v4569
    %v4571 = vrot.slane %v4533, %v4570
    %v4572 = vlaneseq
    %v4573 = vshrl.u32 %v4572, 7
    %v4574 = vsub.s32 1, %v4573
    %v4575 = vrot.slane %v4533, %v4574
    %4578 = vmatprep.subr.mxu0 0.0
    %4579 = vmatpush1.msra.mxu0 %v4549
    %4580 = vmatprep.subr.mxu0 0.0
    %4581 = vmatpush1.msra.mxu0 %v4548
    %4582 = vmatprep.subr.mxu0 0.0
    %4583 = vmatpush1.msra.mxu0 %v4547
    %4584 = vmatprep.subr.mxu0 0.0
    %4585 = vmatpush1.msra.mxu0 %v4546
    %4586 = vmatprep.subr.mxu0 0.0
    %4587 = vmatpush1.msra.mxu0 %v4545
    %4588 = vmatprep.subr.mxu0 0.0
    %4589 = vmatpush1.msra.mxu0 %v4544
    %4590 = vmatprep.subr.mxu0 0.0
    %4591 = vmatpush1.msra.mxu0 %v4543
    %4592 = vmatprep.subr.mxu0 0.0
    %4593 = vmatpush1.msra.mxu0 %v4542
    %4594 = vmatprep.subr.mxu0 0.0
    %4595 = vmatpush1.msra.mxu0 %v4541
    %4596 = vmatprep.subr.mxu0 0.0
    %4597 = vmatpush1.msra.mxu0 %v4540
    %4598 = vmatprep.subr.mxu0 0.0
    %4599 = vmatpush1.msra.mxu0 %v4539
    %4600 = vmatprep.subr.mxu0 0.0
    %4601 = vmatpush1.msra.mxu0 %v4538
    %4602 = vmatprep.subr.mxu0 0.0
    %4603 = vmatpush1.msra.mxu0 %v4537
    %4604 = vmatprep.subr.mxu0 0.0
    %4605 = vmatpush1.msra.mxu0 %v4536
    %4606 = vmatprep.subr.mxu0 0.0
    %4607 = vmatpush1.msra.mxu0 %v4535
    %4608 = vmatprep.subr.mxu0 0.0
    %4609 = vmatpush1.msra.mxu0 %v4534
    %4610 = vmatprep.subr.mxu0 0.0
    %4611 = vmatpush2.msra.mxu0 %v4565
    %4612 = vmatprep.subr.mxu0 0.0
    %4613 = vmatpush2.msra.mxu0 %v4564
    %4614 = vmatprep.subr.mxu0 0.0
    %4615 = vmatpush2.msra.mxu0 %v4563
    %4616 = vmatprep.subr.mxu0 0.0
    %4617 = vmatpush2.msra.mxu0 %v4562
    %4618 = vmatprep.subr.mxu0 0.0
    %4619 = vmatpush2.msra.mxu0 %v4561
    %4620 = vmatprep.subr.mxu0 0.0
    %4621 = vmatpush2.msra.mxu0 %v4560
    %4622 = vmatprep.subr.mxu0 0.0
    %4623 = vmatpush2.msra.mxu0 %v4559
    %4624 = vmatprep.subr.mxu0 0.0
    %4625 = vmatpush2.msra.mxu0 %v4558
    %4626 = vmatprep.subr.mxu0 0.0
    %4627 = vmatpush2.msra.mxu0 %v4557
    %4628 = vmatprep.subr.mxu0 0.0
    %4629 = vmatpush2.msra.mxu0 %v4556
    %4630 = vmatprep.subr.mxu0 0.0
    %4631 = vmatpush2.msra.mxu0 %v4555
    %4632 = vmatprep.subr.mxu0 0.0
    %4633 = vmatpush2.msra.mxu0 %v4554
    %4634 = vmatprep.subr.mxu0 0.0
    %4635 = vmatpush2.msra.mxu0 %v4553
    %4636 = vmatprep.subr.mxu0 0.0
    %4637 = vmatpush2.msra.mxu0 %v4552
    %4638 = vmatprep.subr.mxu0 0.0
    %4639 = vmatpush2.msra.mxu0 %v4551
    %4640 = vmatprep.subr.mxu0 0.0
    %4641 = vmatpush2.msra.mxu0 %v4550
    %4642 = vmatprep.mubr.f32.mxu0 %v4575
    %4643 = vmatmul.mubr.f32.gmra.mxu0 %v4571
    %v4644 = vpop.f32.mrf.mxu0
    %v4645 = vadd.f32 %v4566, %v4644
    %v4646 = vpop.f32.mrf.mxu0
    %4647 = vdwg.mxu0
    %v4648 = vsel %vm584, %v4645, -inf
    %4649 = vmax.xlane.f32.xlu0 %v4648
    %v4650 = vpop.xlane.xlu0 %4649
    %v4651 = vsub.f32 %v4645, %v4650
    %v4652 = vmul.f32 %v4651, 1.442695
    %v4653 = vpow.pop %v4652
    %v4654 = vsel %vm584, %v4653, 0.0
    %4655 = vadd.xlane.f32.xlu0 %v4654
    %v4656 = vpop.xlane.xlu0 %4655
    %v4657 = vlog2.pop %v4656
    %v4658 = vmul.f32 %v4657, 0.6931472
    %v4659 = vadd.f32 %v4650, %v4658
    %v4660 = vsub.f32 %v4645, %v4659
    %4661 = vst [vmem:[#allocation3 + $0x5] sm:$0x1] %v4660
    %4662 = vst [vmem:[#allocation5 + $0x5] sm:$0x1] %v4528
    %4663 = vst [vmem:[#allocation7 + $0x5] sm:$0x1] %v4346
    %4664 = vst [vmem:[#allocation8 + $0x5] sm:$0x1] %v4444
    // Predicated region
    $region46: #{attn_decoder_decode.1} parent=1 // pred_check
      _
    $region47: #{attn_decoder_decode.1} parent=1 // pred_check_branch
      %4666 = sbr.rel (0) target = $region49
    $region48: #{attn_decoder_decode.1} parent=1 // pred_region
      %s4668 = ssub.s32 128, 128
      %4669 = vsyncadd [#allocation4], %s4668
      %s4671 = sshll.u32 [#allocation3], 4
      %s4672 = int_to_ptr.vmem [resolvable:$true] %s4671
      %4674 = dma.vmem_to_hbm [thread:$0]  %s4672, 128, %s11, [#allocation4]
    $region49: #{attn_decoder_decode.1} parent=1 // pred_fallthru
      _
    // Predicated region
    $region50: #{attn_decoder_decode.1} parent=1 // pred_check
      _
    $region51: #{attn_decoder_decode.1} parent=1 // pred_check_branch
      %4676 = sbr.rel (0) target = $region53
    $region52: #{attn_decoder_decode.1} parent=1 // pred_region
      %s4678 = ssub.s32 128, 128
      %4679 = vsyncadd [#allocation6], %s4678
      %s4681 = sshll.u32 [#allocation5], 4
      %s4682 = int_to_ptr.vmem [resolvable:$true] %s4681
      %4684 = dma.vmem_to_hbm [thread:$0]  %s4682, 128, %s12, [#allocation6]
    $region53: #{attn_decoder_decode.1} parent=1 // pred_fallthru
      _
    // Predicated region
    $region54: #{attn_decoder_decode.1} parent=1 // pred_check
      _
    $region55: #{attn_decoder_decode.1} parent=1 // pred_check_branch
      %4686 = sbr.rel (0) target = $region57
    $region56: #{attn_decoder_decode.1} parent=1 // pred_region
      %s4688 = ssub.s32 128, 128
      %4689 = vsyncadd [#allocation6], %s4688
      %s4691 = sshll.u32 [#allocation7], 4
      %s4692 = int_to_ptr.vmem [resolvable:$true] %s4691
      %4694 = dma.vmem_to_hbm [thread:$0]  %s4692, 128, %s13, [#allocation6]
    $region57: #{attn_decoder_decode.1} parent=1 // pred_fallthru
      _
    // Predicated region
    $region58: #{attn_decoder_decode.1} parent=1 // pred_check
      _
    $region59: #{attn_decoder_decode.1} parent=1 // pred_check_branch
      %4696 = sbr.rel (0) target = $region61
    $region60: #{attn_decoder_decode.1} parent=1 // pred_region
      %s4698 = ssub.s32 128, 128
      %4699 = vsyncadd [#allocation9], %s4698
      %s4701 = sshll.u32 [#allocation8], 4
      %s4702 = int_to_ptr.vmem [resolvable:$true] %s4701
      %4704 = dma.vmem_to_hbm [thread:$0]  %s4702, 128, %s14, [#allocation9]
    $region61: #{attn_decoder_decode.1} parent=1 // pred_fallthru
      _
    // Predicated region
    $region62: #{attn_decoder_decode.1} parent=1 // pred_check
      _
    $region63: #{attn_decoder_decode.1} parent=1 // pred_check_branch
      %4706 = sbr.rel (0) target = $region65
    $region64: #{attn_decoder_decode.1} parent=1 // pred_region
      %4707 = dma.done [#allocation4], 128
    $region65: #{attn_decoder_decode.1} parent=1 // pred_fallthru
      _
    // Predicated region
    $region66: #{attn_decoder_decode.1} parent=1 // pred_check
      _
    $region67: #{attn_decoder_decode.1} parent=1 // pred_check_branch
      %4709 = sbr.rel (0) target = $region69
    $region68: #{attn_decoder_decode.1} parent=1 // pred_region
      %4710 = dma.done [#allocation6], 128
    $region69: #{attn_decoder_decode.1} parent=1 // pred_fallthru
      _
    // Predicated region
    $region70: #{attn_decoder_decode.1} parent=1 // pred_check
      _
    $region71: #{attn_decoder_decode.1} parent=1 // pred_check_branch
      %4712 = sbr.rel (0) target = $region73
    $region72: #{attn_decoder_decode.1} parent=1 // pred_region
      %4713 = dma.done [#allocation6], 128
    $region73: #{attn_decoder_decode.1} parent=1 // pred_fallthru
      _
    // Predicated region
    $region74: #{attn_decoder_decode.1} parent=1 // pred_check
      _
    $region75: #{attn_decoder_decode.1} parent=1 // pred_check_branch
      %4715 = sbr.rel (0) target = $region77
    $region76: #{attn_decoder_decode.1} parent=1 // pred_region
      %4716 = dma.done [#allocation9], 128
    $region77: #{attn_decoder_decode.1} parent=1 // pred_fallthru
      _
    %4717 = vsyncpa [#allocation4], 1
    %4718 = vsyncpa [#allocation6], 1
    %4719 = vsyncpa [#allocation9], 1

</llo_original>
